<compile_context>
chip_gen: v7x
topology: tpu7x:2x2x1
jax: 0.10.0
libtpu: 0.0.40
codegen_flags: <defaults>
</compile_context>

<pallas_src>
import jax
import jax.numpy as jnp
from jax import lax
from jax.experimental import pallas as pl
from jax.experimental.pallas import tpu as pltpu

_OUT_PAD = 128  # lane-dense padded width of the final (N, 10) output


# ----------------------------------------------------------------------------
# One-time parameter packing (plain JAX, outside the Pallas hot path)
# ----------------------------------------------------------------------------
def _toeplitz_conv_weight(w, w_in):
    """OIHW conv weight -> (K, W_in*Cin, Wo*Cout) per-kh Toeplitz matmul weights.

    With activations laid out as X[h, w*Cin + ci], a valid stride-1 conv is
        O[ho, wo*Cout + co] = sum_kh  X[ho + kh, :] @ Wt[kh]
    """
    cout, cin, k, _ = w.shape
    wo = w_in - k + 1
    wt = jnp.transpose(w, (2, 3, 1, 0))                        # (kh, kw, ci, co)
    kw = jnp.arange(w_in)[:, None] - jnp.arange(wo)[None, :]   # (w_in, wo)
    valid = (kw >= 0) & (kw < k)
    g = wt[:, jnp.clip(kw, 0, k - 1)]                          # (kh, w_in, wo, ci, co)
    g = g * valid[None, :, :, None, None].astype(w.dtype)
    g = jnp.transpose(g, (0, 1, 3, 2, 4))                      # (kh, w_in, ci, wo, co)
    return g.reshape(k, w_in * cin, wo * cout)


def _rowpool_matrix(h, dtype=jnp.float32):
    """(H//2, H) matrix averaging adjacent row pairs."""
    ho = h // 2
    i = jnp.arange(ho)[:, None]
    j = jnp.arange(h)[None, :]
    return ((j == 2 * i) | (j == 2 * i + 1)).astype(dtype) * 0.5


def _colpool_matrix(w, c, dtype=jnp.float32):
    """(W*C, (W//2)*C) matrix averaging adjacent column pairs per channel."""
    wo = w // 2
    wi = jnp.arange(w)[:, None]
    woi = jnp.arange(wo)[None, :]
    sel = ((wi == 2 * woi) | (wi == 2 * woi + 1)).astype(dtype) * 0.5  # (w, wo)
    eye = jnp.eye(c, dtype=dtype)
    return jnp.einsum("ab,cd->acbd", sel, eye).reshape(w * c, wo * c)


def _prepare_operands(params):
    f32 = jnp.float32
    w1t = _toeplitz_conv_weight(params["w1"].astype(f32), 32)   # (5, 32, 168)
    w2t = _toeplitz_conv_weight(params["w2"].astype(f32), 14)   # (5, 84, 160)
    w3t = _toeplitz_conv_weight(params["w3"].astype(f32), 5)    # (5, 80, 120)
    b1r = jnp.tile(params["b1"].astype(f32), 28)[None, :]       # (1, 168)
    b2r = jnp.tile(params["b2"].astype(f32), 10)[None, :]       # (1, 160)
    b3r = params["b3"].astype(f32)[None, :]                     # (1, 120)
    r1, c1 = _rowpool_matrix(28), _colpool_matrix(28, 6)        # (14,28) (168,84)
    r2, c2 = _rowpool_matrix(10), _colpool_matrix(10, 16)       # (5,10)  (160,80)
    wl1t = params["wl1"].astype(f32).T                          # (120, 84)
    bl1r = params["bl1"].astype(f32)[None, :]                   # (1, 84)
    wl2p = jnp.zeros((84, _OUT_PAD), f32).at[:, :10].set(params["wl2"].astype(f32).T)
    bl2p = jnp.zeros((1, _OUT_PAD), f32).at[:, :10].set(params["bl2"].astype(f32))
    return (w1t, b1r, r1, c1, w2t, b2r, r2, c2, w3t, b3r, wl1t, bl1r, wl2p, bl2p)


# ----------------------------------------------------------------------------
# Fused Pallas kernel: whole LeNet forward for one sample per grid step
# ----------------------------------------------------------------------------
def _lenet_kernel(x_ref, w1_ref, b1_ref, r1_ref, c1_ref,
                  w2_ref, b2_ref, r2_ref, c2_ref,
                  w3_ref, b3_ref, wl1_ref, bl1_ref, wl2_ref, bl2_ref,
                  o_ref, x_s, p1_s, p2_s):
    f32 = jnp.float32

    def conv_relu(xin_ref, w_ref, b_ref, ho):
        k, _, nout = w_ref.shape
        # Bias broadcast hoisted once into the accumulator (loop is unrolled).
        acc = jnp.broadcast_to(b_ref[...], (ho, nout)).astype(f32)
        for kh in range(k):                                   # static unroll, k == 5
            acc = acc + jnp.dot(xin_ref[kh:kh + ho, :], w_ref[kh],
                                preferred_element_type=f32)
        return jnp.maximum(acc, 0.0)

    def pool(act, r_ref, c_ref):
        t = jnp.dot(r_ref[...], act, preferred_element_type=f32)
        return jnp.dot(t, c_ref[...], preferred_element_type=f32)

    x_s[...] = x_ref[0]                                 # (32, 32) sample -> VMEM scratch
    a1 = conv_relu(x_s, w1_ref, b1_ref, 28)             # (28, 168)  conv1 + relu
    p1_s[...] = pool(a1, r1_ref, c1_ref)                # (14, 84)   avgpool 2x2
    a2 = conv_relu(p1_s, w2_ref, b2_ref, 10)            # (10, 160)  conv2 + relu
    p2_s[...] = pool(a2, r2_ref, c2_ref)                # (5, 80)    avgpool 2x2
    a3 = conv_relu(p2_s, w3_ref, b3_ref, 1)             # (1, 120)   conv3 + relu
    h = jnp.maximum(
        jnp.dot(a3, wl1_ref[...], preferred_element_type=f32) + bl1_ref[...],
        0.0)                                            # (1, 84)    linear1 + relu
    o_ref[0] = (jnp.dot(h, wl2_ref[...], preferred_element_type=f32)
                + bl2_ref[...])                         # (1, 128)   linear2 (padded)


def lenet_forward(x, params):
    """Forward pass of LeNEt; x is NCHW (N, 1, 32, 32) -> (N, 10)."""
    n = x.shape[0]
    # NCHW -> per-sample (H, W*Cin) channels-last layout (Cin == 1 here).
    xl = jnp.transpose(x, (0, 2, 3, 1)).reshape(n, 32, 32 * 1).astype(jnp.float32)
    ops = _prepare_operands(params)

    def _const_spec(a):
        nd = a.ndim
        return pl.BlockSpec(a.shape, lambda i: (0,) * nd)   # DMA'd once, reused

    out = pl.pallas_call(
        _lenet_kernel,
        out_shape=jax.ShapeDtypeStruct((n, 1, _OUT_PAD), jnp.float32),
        grid=(n,),
        in_specs=[pl.BlockSpec((1, 32, 32), lambda i: (i, 0, 0))]
                 + [_const_spec(a) for a in ops],
        out_specs=pl.BlockSpec((1, 1, _OUT_PAD), lambda i: (i, 0, 0)),
        scratch_shapes=[pltpu.VMEM((32, 32), jnp.float32),
                        pltpu.VMEM((14, 84), jnp.float32),
                        pltpu.VMEM((5, 80), jnp.float32)],
        compiler_params=pltpu.CompilerParams(
            dimension_semantics=("parallel",)),   # v7x: samples split across TCs
    )(xl, *ops)
    return out.reshape(n, _OUT_PAD)[:, :10]


# ----------------------------------------------------------------------------
# Pure-JAX reference and test harness
# ----------------------------------------------------------------------------
def lenet_reference(x, params):
    hp = lax.Precision.HIGHEST

    def conv(x, w, b):
        y = lax.conv_general_dilated(
            x, w, window_strides=(1, 1), padding="VALID",
            dimension_numbers=("NCHW", "OIHW", "NCHW"), precision=hp)
        return y + b.reshape(1, -1, 1, 1)

    def pool(x):
        n, c, h, w = x.shape
        return x.reshape(n, c, h // 2, 2, w // 2, 2).mean(axis=(3, 5))

    x = jax.nn.relu(conv(x, params["w1"], params["b1"]))
    x = pool(x)
    x = jax.nn.relu(conv(x, params["w2"], params["b2"]))
    x = pool(x)
    x = jax.nn.relu(conv(x, params["w3"], params["b3"]))
    x = x.reshape(x.shape[0], -1)
    x = jax.nn.relu(jnp.dot(x, params["wl1"].T, precision=hp) + params["bl1"])
    return jnp.dot(x, params["wl2"].T, precision=hp) + params["bl2"]


def init_params(key):
    ks = jax.random.split(key, 10)

    def nrm(k, shape, scale):
        return (scale * jax.random.normal(k, shape)).astype(jnp.float32)

    return {
        "w1": nrm(ks[0], (6, 1, 5, 5), 0.2),     "b1": nrm(ks[1], (6,), 0.1),
        "w2": nrm(ks[2], (16, 6, 5, 5), 0.08),   "b2": nrm(ks[3], (16,), 0.1),
        "w3": nrm(ks[4], (120, 16, 5, 5), 0.05), "b3": nrm(ks[5], (120,), 0.1),
        "wl1": nrm(ks[6], (84, 120), 0.09),      "bl1": nrm(ks[7], (84,), 0.1),
        "wl2": nrm(ks[8], (10, 84), 0.1),        "bl2": nrm(ks[9], (10,), 0.1),
    }


if __name__ == "__main__":
    key = jax.random.PRNGKey(0)
    kx, kp = jax.random.split(key)
    # Small batch; spatial/channels fixed by the architecture (1 x 32 x 32).
    x = jax.random.normal(kx, (2, 1, 32, 32), dtype=jnp.float32)
    params = init_params(kp)

    fwd = jax.jit(lenet_forward)
    out = jax.block_until_ready(fwd(x, params))
    ref = jax.block_until_ready(lenet_reference(x, params))

    assert out.shape == (2, 10)
    assert jnp.allclose(out, ref, atol=1e-3, rtol=1e-3), "mismatch vs reference"
    print("KERNEL_OK")
</pallas_src>

<mosaic_0001>
module attributes {stable_mosaic.version = 11 : i64} {
  func.func @_lenet_kernel(%arg0: i32, %arg1: memref<1x32x32xf32, #tpu.memory_space<vmem>>, %arg2: memref<5x32x168xf32, #tpu.memory_space<vmem>>, %arg3: memref<1x168xf32, #tpu.memory_space<vmem>>, %arg4: memref<14x28xf32, #tpu.memory_space<vmem>>, %arg5: memref<168x84xf32, #tpu.memory_space<vmem>>, %arg6: memref<5x84x160xf32, #tpu.memory_space<vmem>>, %arg7: memref<1x160xf32, #tpu.memory_space<vmem>>, %arg8: memref<5x10xf32, #tpu.memory_space<vmem>>, %arg9: memref<160x80xf32, #tpu.memory_space<vmem>>, %arg10: memref<5x80x120xf32, #tpu.memory_space<vmem>>, %arg11: memref<1x120xf32, #tpu.memory_space<vmem>>, %arg12: memref<120x84xf32, #tpu.memory_space<vmem>>, %arg13: memref<1x84xf32, #tpu.memory_space<vmem>>, %arg14: memref<84x128xf32, #tpu.memory_space<vmem>>, %arg15: memref<1x128xf32, #tpu.memory_space<vmem>>, %arg16: memref<1x1x128xf32, #tpu.memory_space<vmem>>, %arg17: memref<32x32xf32, #tpu.memory_space<vmem>>, %arg18: memref<14x84xf32, #tpu.memory_space<vmem>>, %arg19: memref<5x80xf32, #tpu.memory_space<vmem>>) attributes {dimension_semantics = [#tpu.dimension_semantics<parallel>], iteration_bounds = array<i64: 2>, scalar_prefetch = 0 : i64, scratch_operands = 3 : i64, tpu.core_type = #tpu.core_type<tc>, window_params = [{transform_indices = @transform_0, window_bounds = array<i64: 1, 32, 32>}, {pipeline_mode = #tpu.pipeline_mode<synchronous>, transform_indices = @transform_1, window_bounds = array<i64: 5, 32, 168>}, {pipeline_mode = #tpu.pipeline_mode<synchronous>, transform_indices = @transform_2, window_bounds = array<i64: 1, 168>}, {pipeline_mode = #tpu.pipeline_mode<synchronous>, transform_indices = @transform_3, window_bounds = array<i64: 14, 28>}, {pipeline_mode = #tpu.pipeline_mode<synchronous>, transform_indices = @transform_4, window_bounds = array<i64: 168, 84>}, {pipeline_mode = #tpu.pipeline_mode<synchronous>, transform_indices = @transform_5, window_bounds = array<i64: 5, 84, 160>}, {pipeline_mode = #tpu.pipeline_mode<synchronous>, transform_indices = @transform_6, window_bounds = array<i64: 1, 160>}, {pipeline_mode = #tpu.pipeline_mode<synchronous>, transform_indices = @transform_7, window_bounds = array<i64: 5, 10>}, {pipeline_mode = #tpu.pipeline_mode<synchronous>, transform_indices = @transform_8, window_bounds = array<i64: 160, 80>}, {pipeline_mode = #tpu.pipeline_mode<synchronous>, transform_indices = @transform_9, window_bounds = array<i64: 5, 80, 120>}, {pipeline_mode = #tpu.pipeline_mode<synchronous>, transform_indices = @transform_10, window_bounds = array<i64: 1, 120>}, {pipeline_mode = #tpu.pipeline_mode<synchronous>, transform_indices = @transform_11, window_bounds = array<i64: 120, 84>}, {pipeline_mode = #tpu.pipeline_mode<synchronous>, transform_indices = @transform_12, window_bounds = array<i64: 1, 84>}, {pipeline_mode = #tpu.pipeline_mode<synchronous>, transform_indices = @transform_13, window_bounds = array<i64: 84, 128>}, {pipeline_mode = #tpu.pipeline_mode<synchronous>, transform_indices = @transform_14, window_bounds = array<i64: 1, 128>}, {transform_indices = @transform_15, window_bounds = array<i64: 1, 1, 128>}]} {
    %c0 = arith.constant 0 : index
    %c0_0 = arith.constant 0 : index
    %c0_1 = arith.constant 0 : index
    %0 = vector.load %arg1[%c0, %c0_0, %c0_1] : memref<1x32x32xf32, #tpu.memory_space<vmem>>, vector<1x32x32xf32>
    %1 = vector.shape_cast %0 : vector<1x32x32xf32> to vector<32x32xf32>
    %c0_2 = arith.constant 0 : index
    %c0_3 = arith.constant 0 : index
    %2 = vector.load %arg17[%c0_2, %c0_3] : memref<32x32xf32, #tpu.memory_space<vmem>>, vector<32x32xf32>
    tpu.vector_store %arg17[%c0_2, %c0_3], %1 {strides = array<i32>} : memref<32x32xf32, #tpu.memory_space<vmem>>, vector<32x32xf32>,
    %c0_4 = arith.constant 0 : index
    %c0_5 = arith.constant 0 : index
    %3 = vector.load %arg3[%c0_4, %c0_5] : memref<1x168xf32, #tpu.memory_space<vmem>>, vector<1x168xf32>
    %4 = vector.shape_cast %3 : vector<1x168xf32> to vector<1x168xf32>
    %5 = vector.broadcast %4 : vector<1x168xf32> to vector<28x168xf32>
    %c0_6 = arith.constant 0 : index
    %c0_7 = arith.constant 0 : index
    %6 = vector.load %arg17[%c0_6, %c0_7] : memref<32x32xf32, #tpu.memory_space<vmem>>, vector<28x32xf32>
    %c0_8 = arith.constant 0 : index
    %c0_9 = arith.constant 0 : index
    %c0_10 = arith.constant 0 : index
    %7 = vector.load %arg2[%c0_8, %c0_9, %c0_10] : memref<5x32x168xf32, #tpu.memory_space<vmem>>, vector<1x32x168xf32>
    %8 = vector.shape_cast %7 : vector<1x32x168xf32> to vector<32x168xf32>
    %cst = arith.constant dense<0.000000e+00> : vector<28x168xf32>
    %9 = tpu.matmul %6, %8, %cst {dimension_numbers = #tpu.dot_dimension_numbers<[1], [0], [0], [1], [0, 0, 1, 1], [], []>} : vector<28x32xf32>, vector<32x168xf32>, vector<28x168xf32> -> vector<28x168xf32>
    %10 = arith.addf %5, %9 : vector<28x168xf32>
    %c1 = arith.constant 1 : index
    %c0_11 = arith.constant 0 : index
    %11 = vector.load %arg17[%c1, %c0_11] : memref<32x32xf32, #tpu.memory_space<vmem>>, vector<28x32xf32>
    %c1_12 = arith.constant 1 : index
    %c0_13 = arith.constant 0 : index
    %c0_14 = arith.constant 0 : index
    %12 = vector.load %arg2[%c1_12, %c0_13, %c0_14] : memref<5x32x168xf32, #tpu.memory_space<vmem>>, vector<1x32x168xf32>
    %13 = vector.shape_cast %12 : vector<1x32x168xf32> to vector<32x168xf32>
    %cst_15 = arith.constant dense<0.000000e+00> : vector<28x168xf32>
    %14 = tpu.matmul %11, %13, %cst_15 {dimension_numbers = #tpu.dot_dimension_numbers<[1], [0], [0], [1], [0, 0, 1, 1], [], []>} : vector<28x32xf32>, vector<32x168xf32>, vector<28x168xf32> -> vector<28x168xf32>
    %15 = arith.addf %10, %14 : vector<28x168xf32>
    %c2 = arith.constant 2 : index
    %c0_16 = arith.constant 0 : index
    %16 = vector.load %arg17[%c2, %c0_16] : memref<32x32xf32, #tpu.memory_space<vmem>>, vector<28x32xf32>
    %c2_17 = arith.constant 2 : index
    %c0_18 = arith.constant 0 : index
    %c0_19 = arith.constant 0 : index
    %17 = vector.load %arg2[%c2_17, %c0_18, %c0_19] : memref<5x32x168xf32, #tpu.memory_space<vmem>>, vector<1x32x168xf32>
    %18 = vector.shape_cast %17 : vector<1x32x168xf32> to vector<32x168xf32>
    %cst_20 = arith.constant dense<0.000000e+00> : vector<28x168xf32>
    %19 = tpu.matmul %16, %18, %cst_20 {dimension_numbers = #tpu.dot_dimension_numbers<[1], [0], [0], [1], [0, 0, 1, 1], [], []>} : vector<28x32xf32>, vector<32x168xf32>, vector<28x168xf32> -> vector<28x168xf32>
    %20 = arith.addf %15, %19 : vector<28x168xf32>
    %c3 = arith.constant 3 : index
    %c0_21 = arith.constant 0 : index
    %21 = vector.load %arg17[%c3, %c0_21] : memref<32x32xf32, #tpu.memory_space<vmem>>, vector<28x32xf32>
    %c3_22 = arith.constant 3 : index
    %c0_23 = arith.constant 0 : index
    %c0_24 = arith.constant 0 : index
    %22 = vector.load %arg2[%c3_22, %c0_23, %c0_24] : memref<5x32x168xf32, #tpu.memory_space<vmem>>, vector<1x32x168xf32>
    %23 = vector.shape_cast %22 : vector<1x32x168xf32> to vector<32x168xf32>
    %cst_25 = arith.constant dense<0.000000e+00> : vector<28x168xf32>
    %24 = tpu.matmul %21, %23, %cst_25 {dimension_numbers = #tpu.dot_dimension_numbers<[1], [0], [0], [1], [0, 0, 1, 1], [], []>} : vector<28x32xf32>, vector<32x168xf32>, vector<28x168xf32> -> vector<28x168xf32>
    %25 = arith.addf %20, %24 : vector<28x168xf32>
    %c4 = arith.constant 4 : index
    %c0_26 = arith.constant 0 : index
    %26 = vector.load %arg17[%c4, %c0_26] : memref<32x32xf32, #tpu.memory_space<vmem>>, vector<28x32xf32>
    %c4_27 = arith.constant 4 : index
    %c0_28 = arith.constant 0 : index
    %c0_29 = arith.constant 0 : index
    %27 = vector.load %arg2[%c4_27, %c0_28, %c0_29] : memref<5x32x168xf32, #tpu.memory_space<vmem>>, vector<1x32x168xf32>
    %28 = vector.shape_cast %27 : vector<1x32x168xf32> to vector<32x168xf32>
    %cst_30 = arith.constant dense<0.000000e+00> : vector<28x168xf32>
    %29 = tpu.matmul %26, %28, %cst_30 {dimension_numbers = #tpu.dot_dimension_numbers<[1], [0], [0], [1], [0, 0, 1, 1], [], []>} : vector<28x32xf32>, vector<32x168xf32>, vector<28x168xf32> -> vector<28x168xf32>
    %30 = arith.addf %25, %29 : vector<28x168xf32>
    %cst_31 = arith.constant 0.000000e+00 : f32
    %31 = vector.broadcast %cst_31 : f32 to vector<28x168xf32>
    %32 = arith.maximumf %30, %31 : vector<28x168xf32>
    %c0_32 = arith.constant 0 : index
    %c0_33 = arith.constant 0 : index
    %33 = vector.load %arg4[%c0_32, %c0_33] : memref<14x28xf32, #tpu.memory_space<vmem>>, vector<14x28xf32>
    %cst_34 = arith.constant dense<0.000000e+00> : vector<14x168xf32>
    %34 = tpu.matmul %33, %32, %cst_34 {dimension_numbers = #tpu.dot_dimension_numbers<[1], [0], [0], [1], [0, 0, 1, 1], [], []>} : vector<14x28xf32>, vector<28x168xf32>, vector<14x168xf32> -> vector<14x168xf32>
    %c0_35 = arith.constant 0 : index
    %c0_36 = arith.constant 0 : index
    %35 = vector.load %arg5[%c0_35, %c0_36] : memref<168x84xf32, #tpu.memory_space<vmem>>, vector<168x84xf32>
    %cst_37 = arith.constant dense<0.000000e+00> : vector<14x84xf32>
    %36 = tpu.matmul %34, %35, %cst_37 {dimension_numbers = #tpu.dot_dimension_numbers<[1], [0], [0], [1], [0, 0, 1, 1], [], []>} : vector<14x168xf32>, vector<168x84xf32>, vector<14x84xf32> -> vector<14x84xf32>
    %c0_38 = arith.constant 0 : index
    %c0_39 = arith.constant 0 : index
    %37 = vector.load %arg18[%c0_38, %c0_39] : memref<14x84xf32, #tpu.memory_space<vmem>>, vector<14x84xf32>
    tpu.vector_store %arg18[%c0_38, %c0_39], %36 {strides = array<i32>} : memref<14x84xf32, #tpu.memory_space<vmem>>, vector<14x84xf32>,
    %c0_40 = arith.constant 0 : index
    %c0_41 = arith.constant 0 : index
    %38 = vector.load %arg7[%c0_40, %c0_41] : memref<1x160xf32, #tpu.memory_space<vmem>>, vector<1x160xf32>
    %39 = vector.shape_cast %38 : vector<1x160xf32> to vector<1x160xf32>
    %40 = vector.broadcast %39 : vector<1x160xf32> to vector<10x160xf32>
    %c0_42 = arith.constant 0 : index
    %c0_43 = arith.constant 0 : index
    %41 = vector.load %arg18[%c0_42, %c0_43] : memref<14x84xf32, #tpu.memory_space<vmem>>, vector<10x84xf32>
    %c0_44 = arith.constant 0 : index
    %c0_45 = arith.constant 0 : index
    %c0_46 = arith.constant 0 : index
    %42 = vector.load %arg6[%c0_44, %c0_45, %c0_46] : memref<5x84x160xf32, #tpu.memory_space<vmem>>, vector<1x84x160xf32>
    %43 = vector.shape_cast %42 : vector<1x84x160xf32> to vector<84x160xf32>
    %cst_47 = arith.constant dense<0.000000e+00> : vector<10x160xf32>
    %44 = tpu.matmul %41, %43, %cst_47 {dimension_numbers = #tpu.dot_dimension_numbers<[1], [0], [0], [1], [0, 0, 1, 1], [], []>} : vector<10x84xf32>, vector<84x160xf32>, vector<10x160xf32> -> vector<10x160xf32>
    %45 = arith.addf %40, %44 : vector<10x160xf32>
    %c1_48 = arith.constant 1 : index
    %c0_49 = arith.constant 0 : index
    %46 = vector.load %arg18[%c1_48, %c0_49] : memref<14x84xf32, #tpu.memory_space<vmem>>, vector<10x84xf32>
    %c1_50 = arith.constant 1 : index
    %c0_51 = arith.constant 0 : index
    %c0_52 = arith.constant 0 : index
    %47 = vector.load %arg6[%c1_50, %c0_51, %c0_52] : memref<5x84x160xf32, #tpu.memory_space<vmem>>, vector<1x84x160xf32>
    %48 = vector.shape_cast %47 : vector<1x84x160xf32> to vector<84x160xf32>
    %cst_53 = arith.constant dense<0.000000e+00> : vector<10x160xf32>
    %49 = tpu.matmul %46, %48, %cst_53 {dimension_numbers = #tpu.dot_dimension_numbers<[1], [0], [0], [1], [0, 0, 1, 1], [], []>} : vector<10x84xf32>, vector<84x160xf32>, vector<10x160xf32> -> vector<10x160xf32>
    %50 = arith.addf %45, %49 : vector<10x160xf32>
    %c2_54 = arith.constant 2 : index
    %c0_55 = arith.constant 0 : index
    %51 = vector.load %arg18[%c2_54, %c0_55] : memref<14x84xf32, #tpu.memory_space<vmem>>, vector<10x84xf32>
    %c2_56 = arith.constant 2 : index
    %c0_57 = arith.constant 0 : index
    %c0_58 = arith.constant 0 : index
    %52 = vector.load %arg6[%c2_56, %c0_57, %c0_58] : memref<5x84x160xf32, #tpu.memory_space<vmem>>, vector<1x84x160xf32>
    %53 = vector.shape_cast %52 : vector<1x84x160xf32> to vector<84x160xf32>
    %cst_59 = arith.constant dense<0.000000e+00> : vector<10x160xf32>
    %54 = tpu.matmul %51, %53, %cst_59 {dimension_numbers = #tpu.dot_dimension_numbers<[1], [0], [0], [1], [0, 0, 1, 1], [], []>} : vector<10x84xf32>, vector<84x160xf32>, vector<10x160xf32> -> vector<10x160xf32>
    %55 = arith.addf %50, %54 : vector<10x160xf32>
    %c3_60 = arith.constant 3 : index
    %c0_61 = arith.constant 0 : index
    %56 = vector.load %arg18[%c3_60, %c0_61] : memref<14x84xf32, #tpu.memory_space<vmem>>, vector<10x84xf32>
    %c3_62 = arith.constant 3 : index
    %c0_63 = arith.constant 0 : index
    %c0_64 = arith.constant 0 : index
    %57 = vector.load %arg6[%c3_62, %c0_63, %c0_64] : memref<5x84x160xf32, #tpu.memory_space<vmem>>, vector<1x84x160xf32>
    %58 = vector.shape_cast %57 : vector<1x84x160xf32> to vector<84x160xf32>
    %cst_65 = arith.constant dense<0.000000e+00> : vector<10x160xf32>
    %59 = tpu.matmul %56, %58, %cst_65 {dimension_numbers = #tpu.dot_dimension_numbers<[1], [0], [0], [1], [0, 0, 1, 1], [], []>} : vector<10x84xf32>, vector<84x160xf32>, vector<10x160xf32> -> vector<10x160xf32>
    %60 = arith.addf %55, %59 : vector<10x160xf32>
    %c4_66 = arith.constant 4 : index
    %c0_67 = arith.constant 0 : index
    %61 = vector.load %arg18[%c4_66, %c0_67] : memref<14x84xf32, #tpu.memory_space<vmem>>, vector<10x84xf32>
    %c4_68 = arith.constant 4 : index
    %c0_69 = arith.constant 0 : index
    %c0_70 = arith.constant 0 : index
    %62 = vector.load %arg6[%c4_68, %c0_69, %c0_70] : memref<5x84x160xf32, #tpu.memory_space<vmem>>, vector<1x84x160xf32>
    %63 = vector.shape_cast %62 : vector<1x84x160xf32> to vector<84x160xf32>
    %cst_71 = arith.constant dense<0.000000e+00> : vector<10x160xf32>
    %64 = tpu.matmul %61, %63, %cst_71 {dimension_numbers = #tpu.dot_dimension_numbers<[1], [0], [0], [1], [0, 0, 1, 1], [], []>} : vector<10x84xf32>, vector<84x160xf32>, vector<10x160xf32> -> vector<10x160xf32>
    %65 = arith.addf %60, %64 : vector<10x160xf32>
    %cst_72 = arith.constant 0.000000e+00 : f32
    %66 = vector.broadcast %cst_72 : f32 to vector<10x160xf32>
    %67 = arith.maximumf %65, %66 : vector<10x160xf32>
    %c0_73 = arith.constant 0 : index
    %c0_74 = arith.constant 0 : index
    %68 = vector.load %arg8[%c0_73, %c0_74] : memref<5x10xf32, #tpu.memory_space<vmem>>, vector<5x10xf32>
    %cst_75 = arith.constant dense<0.000000e+00> : vector<5x160xf32>
    %69 = tpu.matmul %68, %67, %cst_75 {dimension_numbers = #tpu.dot_dimension_numbers<[1], [0], [0], [1], [0, 0, 1, 1], [], []>} : vector<5x10xf32>, vector<10x160xf32>, vector<5x160xf32> -> vector<5x160xf32>
    %c0_76 = arith.constant 0 : index
    %c0_77 = arith.constant 0 : index
    %70 = vector.load %arg9[%c0_76, %c0_77] : memref<160x80xf32, #tpu.memory_space<vmem>>, vector<160x80xf32>
    %cst_78 = arith.constant dense<0.000000e+00> : vector<5x80xf32>
    %71 = tpu.matmul %69, %70, %cst_78 {dimension_numbers = #tpu.dot_dimension_numbers<[1], [0], [0], [1], [0, 0, 1, 1], [], []>} : vector<5x160xf32>, vector<160x80xf32>, vector<5x80xf32> -> vector<5x80xf32>
    %c0_79 = arith.constant 0 : index
    %c0_80 = arith.constant 0 : index
    %72 = vector.load %arg19[%c0_79, %c0_80] : memref<5x80xf32, #tpu.memory_space<vmem>>, vector<5x80xf32>
    tpu.vector_store %arg19[%c0_79, %c0_80], %71 {strides = array<i32>} : memref<5x80xf32, #tpu.memory_space<vmem>>, vector<5x80xf32>,
    %c0_81 = arith.constant 0 : index
    %c0_82 = arith.constant 0 : index
    %73 = vector.load %arg11[%c0_81, %c0_82] : memref<1x120xf32, #tpu.memory_space<vmem>>, vector<1x120xf32>
    %c0_83 = arith.constant 0 : index
    %c0_84 = arith.constant 0 : index
    %74 = vector.load %arg19[%c0_83, %c0_84] : memref<5x80xf32, #tpu.memory_space<vmem>>, vector<1x80xf32>
    %c0_85 = arith.constant 0 : index
    %c0_86 = arith.constant 0 : index
    %c0_87 = arith.constant 0 : index
    %75 = vector.load %arg10[%c0_85, %c0_86, %c0_87] : memref<5x80x120xf32, #tpu.memory_space<vmem>>, vector<1x80x120xf32>
    %76 = vector.shape_cast %75 : vector<1x80x120xf32> to vector<80x120xf32>
    %cst_88 = arith.constant dense<0.000000e+00> : vector<1x120xf32>
    %77 = tpu.matmul %74, %76, %cst_88 {dimension_numbers = #tpu.dot_dimension_numbers<[1], [0], [0], [1], [0, 0, 1, 1], [], []>} : vector<1x80xf32>, vector<80x120xf32>, vector<1x120xf32> -> vector<1x120xf32>
    %78 = arith.addf %73, %77 : vector<1x120xf32>
    %c1_89 = arith.constant 1 : index
    %c0_90 = arith.constant 0 : index
    %79 = vector.load %arg19[%c1_89, %c0_90] : memref<5x80xf32, #tpu.memory_space<vmem>>, vector<1x80xf32>
    %c1_91 = arith.constant 1 : index
    %c0_92 = arith.constant 0 : index
    %c0_93 = arith.constant 0 : index
    %80 = vector.load %arg10[%c1_91, %c0_92, %c0_93] : memref<5x80x120xf32, #tpu.memory_space<vmem>>, vector<1x80x120xf32>
    %81 = vector.shape_cast %80 : vector<1x80x120xf32> to vector<80x120xf32>
    %cst_94 = arith.constant dense<0.000000e+00> : vector<1x120xf32>
    %82 = tpu.matmul %79, %81, %cst_94 {dimension_numbers = #tpu.dot_dimension_numbers<[1], [0], [0], [1], [0, 0, 1, 1], [], []>} : vector<1x80xf32>, vector<80x120xf32>, vector<1x120xf32> -> vector<1x120xf32>
    %83 = arith.addf %78, %82 : vector<1x120xf32>
    %c2_95 = arith.constant 2 : index
    %c0_96 = arith.constant 0 : index
    %84 = vector.load %arg19[%c2_95, %c0_96] : memref<5x80xf32, #tpu.memory_space<vmem>>, vector<1x80xf32>
    %c2_97 = arith.constant 2 : index
    %c0_98 = arith.constant 0 : index
    %c0_99 = arith.constant 0 : index
    %85 = vector.load %arg10[%c2_97, %c0_98, %c0_99] : memref<5x80x120xf32, #tpu.memory_space<vmem>>, vector<1x80x120xf32>
    %86 = vector.shape_cast %85 : vector<1x80x120xf32> to vector<80x120xf32>
    %cst_100 = arith.constant dense<0.000000e+00> : vector<1x120xf32>
    %87 = tpu.matmul %84, %86, %cst_100 {dimension_numbers = #tpu.dot_dimension_numbers<[1], [0], [0], [1], [0, 0, 1, 1], [], []>} : vector<1x80xf32>, vector<80x120xf32>, vector<1x120xf32> -> vector<1x120xf32>
    %88 = arith.addf %83, %87 : vector<1x120xf32>
    %c3_101 = arith.constant 3 : index
    %c0_102 = arith.constant 0 : index
    %89 = vector.load %arg19[%c3_101, %c0_102] : memref<5x80xf32, #tpu.memory_space<vmem>>, vector<1x80xf32>
    %c3_103 = arith.constant 3 : index
    %c0_104 = arith.constant 0 : index
    %c0_105 = arith.constant 0 : index
    %90 = vector.load %arg10[%c3_103, %c0_104, %c0_105] : memref<5x80x120xf32, #tpu.memory_space<vmem>>, vector<1x80x120xf32>
    %91 = vector.shape_cast %90 : vector<1x80x120xf32> to vector<80x120xf32>
    %cst_106 = arith.constant dense<0.000000e+00> : vector<1x120xf32>
    %92 = tpu.matmul %89, %91, %cst_106 {dimension_numbers = #tpu.dot_dimension_numbers<[1], [0], [0], [1], [0, 0, 1, 1], [], []>} : vector<1x80xf32>, vector<80x120xf32>, vector<1x120xf32> -> vector<1x120xf32>
    %93 = arith.addf %88, %92 : vector<1x120xf32>
    %c4_107 = arith.constant 4 : index
    %c0_108 = arith.constant 0 : index
    %94 = vector.load %arg19[%c4_107, %c0_108] : memref<5x80xf32, #tpu.memory_space<vmem>>, vector<1x80xf32>
    %c4_109 = arith.constant 4 : index
    %c0_110 = arith.constant 0 : index
    %c0_111 = arith.constant 0 : index
    %95 = vector.load %arg10[%c4_109, %c0_110, %c0_111] : memref<5x80x120xf32, #tpu.memory_space<vmem>>, vector<1x80x120xf32>
    %96 = vector.shape_cast %95 : vector<1x80x120xf32> to vector<80x120xf32>
    %cst_112 = arith.constant dense<0.000000e+00> : vector<1x120xf32>
    %97 = tpu.matmul %94, %96, %cst_112 {dimension_numbers = #tpu.dot_dimension_numbers<[1], [0], [0], [1], [0, 0, 1, 1], [], []>} : vector<1x80xf32>, vector<80x120xf32>, vector<1x120xf32> -> vector<1x120xf32>
    %98 = arith.addf %93, %97 : vector<1x120xf32>
    %cst_113 = arith.constant 0.000000e+00 : f32
    %99 = vector.broadcast %cst_113 : f32 to vector<1x120xf32>
    %100 = arith.maximumf %98, %99 : vector<1x120xf32>
    %c0_114 = arith.constant 0 : index
    %c0_115 = arith.constant 0 : index
    %101 = vector.load %arg12[%c0_114, %c0_115] : memref<120x84xf32, #tpu.memory_space<vmem>>, vector<120x84xf32>
    %cst_116 = arith.constant dense<0.000000e+00> : vector<1x84xf32>
    %102 = tpu.matmul %100, %101, %cst_116 {dimension_numbers = #tpu.dot_dimension_numbers<[1], [0], [0], [1], [0, 0, 1, 1], [], []>} : vector<1x120xf32>, vector<120x84xf32>, vector<1x84xf32> -> vector<1x84xf32>
    %c0_117 = arith.constant 0 : index
    %c0_118 = arith.constant 0 : index
    %103 = vector.load %arg13[%c0_117, %c0_118] : memref<1x84xf32, #tpu.memory_space<vmem>>, vector<1x84xf32>
    %104 = arith.addf %102, %103 : vector<1x84xf32>
    %cst_119 = arith.constant 0.000000e+00 : f32
    %105 = vector.broadcast %cst_119 : f32 to vector<1x84xf32>
    %106 = arith.maximumf %104, %105 : vector<1x84xf32>
    %c0_120 = arith.constant 0 : index
    %c0_121 = arith.constant 0 : index
    %107 = vector.load %arg14[%c0_120, %c0_121] : memref<84x128xf32, #tpu.memory_space<vmem>>, vector<84x128xf32>
    %cst_122 = arith.constant dense<0.000000e+00> : vector<1x128xf32>
    %108 = tpu.matmul %106, %107, %cst_122 {dimension_numbers = #tpu.dot_dimension_numbers<[1], [0], [0], [1], [0, 0, 1, 1], [], []>} : vector<1x84xf32>, vector<84x128xf32>, vector<1x128xf32> -> vector<1x128xf32>
    %c0_123 = arith.constant 0 : index
    %c0_124 = arith.constant 0 : index
    %109 = vector.load %arg15[%c0_123, %c0_124] : memref<1x128xf32, #tpu.memory_space<vmem>>, vector<1x128xf32>
    %110 = arith.addf %108, %109 : vector<1x128xf32>
    %c0_125 = arith.constant 0 : index
    %c0_126 = arith.constant 0 : index
    %c0_127 = arith.constant 0 : index
    %111 = vector.load %arg16[%c0_125, %c0_126, %c0_127] : memref<1x1x128xf32, #tpu.memory_space<vmem>>, vector<1x1x128xf32>
    %112 = vector.shape_cast %111 : vector<1x1x128xf32> to vector<1x128xf32>
    %113 = vector.shape_cast %110 : vector<1x128xf32> to vector<1x1x128xf32>
    tpu.vector_store %arg16[%c0_125, %c0_126, %c0_127], %113 {strides = array<i32>} : memref<1x1x128xf32, #tpu.memory_space<vmem>>, vector<1x1x128xf32>,
    return
  }
  func.func @transform_0(%arg0: i32) -> (i32, i32, i32) {
    %c0_i32 = arith.constant 0 : i32
    %c0_i32_0 = arith.constant 0 : i32
    %c0_i32_1 = arith.constant 0 : i32
    return %arg0, %c0_i32, %c0_i32_0 : i32, i32, i32
  }
  func.func @transform_1(%arg0: i32) -> (i32, i32, i32) {
    %c0_i32 = arith.constant 0 : i32
    %c0_i32_0 = arith.constant 0 : i32
    %c0_i32_1 = arith.constant 0 : i32
    %c0_i32_2 = arith.constant 0 : i32
    return %c0_i32, %c0_i32_0, %c0_i32_1 : i32, i32, i32
  }
  func.func @transform_2(%arg0: i32) -> (i32, i32) {
    %c0_i32 = arith.constant 0 : i32
    %c0_i32_0 = arith.constant 0 : i32
    %c0_i32_1 = arith.constant 0 : i32
    return %c0_i32, %c0_i32_0 : i32, i32
  }
  func.func @transform_3(%arg0: i32) -> (i32, i32) {
    %c0_i32 = arith.constant 0 : i32
    %c0_i32_0 = arith.constant 0 : i32
    %c0_i32_1 = arith.constant 0 : i32
    return %c0_i32, %c0_i32_0 : i32, i32
  }
  func.func @transform_4(%arg0: i32) -> (i32, i32) {
    %c0_i32 = arith.constant 0 : i32
    %c0_i32_0 = arith.constant 0 : i32
    %c0_i32_1 = arith.constant 0 : i32
    return %c0_i32, %c0_i32_0 : i32, i32
  }
  func.func @transform_5(%arg0: i32) -> (i32, i32, i32) {
    %c0_i32 = arith.constant 0 : i32
    %c0_i32_0 = arith.constant 0 : i32
    %c0_i32_1 = arith.constant 0 : i32
    %c0_i32_2 = arith.constant 0 : i32
    return %c0_i32, %c0_i32_0, %c0_i32_1 : i32, i32, i32
  }
  func.func @transform_6(%arg0: i32) -> (i32, i32) {
    %c0_i32 = arith.constant 0 : i32
    %c0_i32_0 = arith.constant 0 : i32
    %c0_i32_1 = arith.constant 0 : i32
    return %c0_i32, %c0_i32_0 : i32, i32
  }
  func.func @transform_7(%arg0: i32) -> (i32, i32) {
    %c0_i32 = arith.constant 0 : i32
    %c0_i32_0 = arith.constant 0 : i32
    %c0_i32_1 = arith.constant 0 : i32
    return %c0_i32, %c0_i32_0 : i32, i32
  }
  func.func @transform_8(%arg0: i32) -> (i32, i32) {
    %c0_i32 = arith.constant 0 : i32
    %c0_i32_0 = arith.constant 0 : i32
    %c0_i32_1 = arith.constant 0 : i32
    return %c0_i32, %c0_i32_0 : i32, i32
  }
  func.func @transform_9(%arg0: i32) -> (i32, i32, i32) {
    %c0_i32 = arith.constant 0 : i32
    %c0_i32_0 = arith.constant 0 : i32
    %c0_i32_1 = arith.constant 0 : i32
    %c0_i32_2 = arith.constant 0 : i32
    return %c0_i32, %c0_i32_0, %c0_i32_1 : i32, i32, i32
  }
  func.func @transform_10(%arg0: i32) -> (i32, i32) {
    %c0_i32 = arith.constant 0 : i32
    %c0_i32_0 = arith.constant 0 : i32
    %c0_i32_1 = arith.constant 0 : i32
    return %c0_i32, %c0_i32_0 : i32, i32
  }
  func.func @transform_11(%arg0: i32) -> (i32, i32) {
    %c0_i32 = arith.constant 0 : i32
    %c0_i32_0 = arith.constant 0 : i32
    %c0_i32_1 = arith.constant 0 : i32
    return %c0_i32, %c0_i32_0 : i32, i32
  }
  func.func @transform_12(%arg0: i32) -> (i32, i32) {
    %c0_i32 = arith.constant 0 : i32
    %c0_i32_0 = arith.constant 0 : i32
    %c0_i32_1 = arith.constant 0 : i32
    return %c0_i32, %c0_i32_0 : i32, i32
  }
  func.func @transform_13(%arg0: i32) -> (i32, i32) {
    %c0_i32 = arith.constant 0 : i32
    %c0_i32_0 = arith.constant 0 : i32
    %c0_i32_1 = arith.constant 0 : i32
    return %c0_i32, %c0_i32_0 : i32, i32
  }
  func.func @transform_14(%arg0: i32) -> (i32, i32) {
    %c0_i32 = arith.constant 0 : i32
    %c0_i32_0 = arith.constant 0 : i32
    %c0_i32_1 = arith.constant 0 : i32
    return %c0_i32, %c0_i32_0 : i32, i32
  }
  func.func @transform_15(%arg0: i32) -> (i32, i32, i32) {
    %c0_i32 = arith.constant 0 : i32
    %c0_i32_0 = arith.constant 0 : i32
    %c0_i32_1 = arith.constant 0 : i32
    return %arg0, %c0_i32, %c0_i32_0 : i32, i32, i32
  }
}

</mosaic_0001>

<llo_original>
// kernel: tile.13
$region0: #{tile.13}
  #allocation0 [shape = 's32[1]{0}', space=sflag, size = 0x4, scoped, tag = 'scoped memory for tile.13']
  %s0 = inlined_call_operand.vmem [shape: f32[6], index: 0, kind: input, shape index: {}]
  %s1 = inlined_call_operand.vmem [shape: f32[28,6], index: 1, kind: output, shape index: {}]
  // Predicated region
  $region2: #{tile.13} parent=0 // pred_check
    _
  $region3: #{tile.13} parent=0 // pred_check_branch
    %3 = sbr.rel (0) target = $region5
  $region4: #{tile.13} parent=0 // pred_region
    _
  $region5: #{tile.13} parent=0 // pred_fallthru
    _
  %v4 = vld [vmem:[%s0] ss:$0 sm:$0xff]
  %5 = vst [vmem:[%s1] sm:$0xff] %v4
  %s6 = scalar_lea.vmem %s1, 8
  %7 = vst [vmem:[%s6] sm:$0xff] %v4
  %s8 = scalar_lea.vmem %s1, 16
  %9 = vst [vmem:[%s8] sm:$0xff] %v4
  %s10 = scalar_lea.vmem %s1, 24
  %11 = vst [vmem:[%s10] sm:$0xff] %v4

// kernel: tile.14
$region0: #{tile.14}
  %s0 = inlined_call_operand.vmem [shape: f32[28,6], index: 0, kind: input, shape index: {}]
  %s1 = inlined_call_operand.vmem [shape: f32[1,168], index: 1, kind: output, shape index: {}]
  $region1: #{tile.14} parent=0
    #allocation0 [shape = 'u8[8192]{0}', space=vmem, size = 0x2000, scoped, tag = 'scoped mem for output reshape']
    %v2 = vld [vmem:[%s0] sm:$0x1]
    %vm3 = vcmask 48128
    %4 = vst.msk [vmem:[#allocation0] sm:$0x1] %vm3, %v2
    %s5 = scalar_lea.vmem %s0, 21
    %v6 = vld [vmem:[%s5] sm:$0x1]
    %s7 = scalar_lea.vmem %s0, 21
    %v8 = vld [vmem:[%s7] sm:$0x1]
    %vm9 = vcmask 15360
    %v10 = vsel %vm9, %v8, %v6
    %11 = vrot.lane.b32.xlu0 %v10, 126
    %v12 = vpop.permute.xlu0 %11
    %vm13 = vcmask 31744
    %s14 = scalar_lea.vmem [#allocation0], 8
    %15 = vst.msk [vmem:[%s14] sm:$0x1] %vm13, %v12
    %vm16 = vcmask 1048560
    %17 = vst.msk [vmem:[#allocation0] sm:$0x1] %vm16, %v12
    %s18 = scalar_lea.vmem %s0, 20
    %v19 = vld [vmem:[%s18] sm:$0x1]
    %20 = vrot.lane.b32.xlu0 %v19, 120
    %v21 = vpop.permute.xlu0 %20
    %vm22 = vcmask 1032128
    %23 = vst.msk [vmem:[#allocation0] sm:$0x1] %vm22, %v21
    %s24 = scalar_lea.vmem %s0, 19
    %v25 = vld [vmem:[%s24] sm:$0x1]
    %26 = vrot.lane.b32.xlu0 %v25, 114
    %v27 = vpop.permute.xlu0 %26
    %vm28 = vcmask 982928
    %29 = vst.msk [vmem:[#allocation0] sm:$0x1] %vm28, %v27
    %s30 = scalar_lea.vmem %s0, 18
    %v31 = vld [vmem:[%s30] sm:$0x1]
    %32 = vrot.lane.b32.xlu0 %v31, 108
    %v33 = vpop.permute.xlu0 %32
    %vm34 = vcmask 933728
    %35 = vst.msk [vmem:[#allocation0] sm:$0x1] %vm34, %v33
    %s36 = scalar_lea.vmem %s0, 17
    %v37 = vld [vmem:[%s36] sm:$0x1]
    %38 = vrot.lane.b32.xlu0 %v37, 102
    %v39 = vpop.permute.xlu0 %38
    %vm40 = vcmask 884528
    %41 = vst.msk [vmem:[#allocation0] sm:$0x1] %vm40, %v39
    %s42 = scalar_lea.vmem %s0, 16
    %v43 = vld [vmem:[%s42] sm:$0x1]
    %44 = vrot.lane.b32.xlu0 %v43, 96
    %v45 = vpop.permute.xlu0 %44
    %vm46 = vcmask 835328
    %47 = vst.msk [vmem:[#allocation0] sm:$0x1] %vm46, %v45
    %s48 = scalar_lea.vmem %s0, 15
    %v49 = vld [vmem:[%s48] sm:$0x1]
    %50 = vrot.lane.b32.xlu0 %v49, 90
    %v51 = vpop.permute.xlu0 %50
    %vm52 = vcmask 786128
    %53 = vst.msk [vmem:[#allocation0] sm:$0x1] %vm52, %v51
    %s54 = scalar_lea.vmem %s0, 14
    %v55 = vld [vmem:[%s54] sm:$0x1]
    %56 = vrot.lane.b32.xlu0 %v55, 84
    %v57 = vpop.permute.xlu0 %56
    %vm58 = vcmask 736928
    %59 = vst.msk [vmem:[#allocation0] sm:$0x1] %vm58, %v57
    %s60 = scalar_lea.vmem %s0, 13
    %v61 = vld [vmem:[%s60] sm:$0x1]
    %62 = vrot.lane.b32.xlu0 %v61, 78
    %v63 = vpop.permute.xlu0 %62
    %vm64 = vcmask 687728
    %65 = vst.msk [vmem:[#allocation0] sm:$0x1] %vm64, %v63
    %s66 = scalar_lea.vmem %s0, 12
    %v67 = vld [vmem:[%s66] sm:$0x1]
    %68 = vrot.lane.b32.xlu0 %v67, 72
    %v69 = vpop.permute.xlu0 %68
    %vm70 = vcmask 638528
    %71 = vst.msk [vmem:[#allocation0] sm:$0x1] %vm70, %v69
    %s72 = scalar_lea.vmem %s0, 11
    %v73 = vld [vmem:[%s72] sm:$0x1]
    %74 = vrot.lane.b32.xlu0 %v73, 66
    %v75 = vpop.permute.xlu0 %74
    %vm76 = vcmask 589328
    %77 = vst.msk [vmem:[#allocation0] sm:$0x1] %vm76, %v75
    %s78 = scalar_lea.vmem %s0, 10
    %v79 = vld [vmem:[%s78] sm:$0x1]
    %80 = vrot.lane.b32.xlu0 %v79, 60
    %v81 = vpop.permute.xlu0 %80
    %vm82 = vcmask 540128
    %83 = vst.msk [vmem:[#allocation0] sm:$0x1] %vm82, %v81
    %s84 = scalar_lea.vmem %s0, 9
    %v85 = vld [vmem:[%s84] sm:$0x1]
    %86 = vrot.lane.b32.xlu0 %v85, 54
    %v87 = vpop.permute.xlu0 %86
    %vm88 = vcmask 490928
    %89 = vst.msk [vmem:[#allocation0] sm:$0x1] %vm88, %v87
    %s90 = scalar_lea.vmem %s0, 8
    %v91 = vld [vmem:[%s90] sm:$0x1]
    %92 = vrot.lane.b32.xlu0 %v91, 48
    %v93 = vpop.permute.xlu0 %92
    %vm94 = vcmask 441728
    %95 = vst.msk [vmem:[#allocation0] sm:$0x1] %vm94, %v93
    %s96 = scalar_lea.vmem %s0, 7
    %v97 = vld [vmem:[%s96] sm:$0x1]
    %98 = vrot.lane.b32.xlu0 %v97, 42
    %v99 = vpop.permute.xlu0 %98
    %vm100 = vcmask 392528
    %101 = vst.msk [vmem:[#allocation0] sm:$0x1] %vm100, %v99
    %s102 = scalar_lea.vmem %s0, 6
    %v103 = vld [vmem:[%s102] sm:$0x1]
    %104 = vrot.lane.b32.xlu0 %v103, 36
    %v105 = vpop.permute.xlu0 %104
    %vm106 = vcmask 343328
    %107 = vst.msk [vmem:[#allocation0] sm:$0x1] %vm106, %v105
    %s108 = scalar_lea.vmem %s0, 27
    %v109 = vld [vmem:[%s108] sm:$0x1]
    %110 = vrot.lane.b32.xlu0 %v109, 34
    %v111 = vpop.permute.xlu0 %110
    %vm112 = vcmask 326928
    %s113 = scalar_lea.vmem [#allocation0], 8
    %114 = vst.msk [vmem:[%s113] sm:$0x1] %vm112, %v111
    %s115 = scalar_lea.vmem %s0, 5
    %v116 = vld [vmem:[%s115] sm:$0x1]
    %117 = vrot.lane.b32.xlu0 %v116, 30
    %v118 = vpop.permute.xlu0 %117
    %vm119 = vcmask 294128
    %120 = vst.msk [vmem:[#allocation0] sm:$0x1] %vm119, %v118
    %s121 = scalar_lea.vmem %s0, 26
    %v122 = vld [vmem:[%s121] sm:$0x1]
    %123 = vrot.lane.b32.xlu0 %v122, 28
    %v124 = vpop.permute.xlu0 %123
    %vm125 = vcmask 277728
    %s126 = scalar_lea.vmem [#allocation0], 8
    %127 = vst.msk [vmem:[%s126] sm:$0x1] %vm125, %v124
    %s128 = scalar_lea.vmem %s0, 4
    %v129 = vld [vmem:[%s128] sm:$0x1]
    %130 = vrot.lane.b32.xlu0 %v129, 24
    %v131 = vpop.permute.xlu0 %130
    %vm132 = vcmask 244928
    %133 = vst.msk [vmem:[#allocation0] sm:$0x1] %vm132, %v131
    %s134 = scalar_lea.vmem %s0, 25
    %v135 = vld [vmem:[%s134] sm:$0x1]
    %136 = vrot.lane.b32.xlu0 %v135, 22
    %v137 = vpop.permute.xlu0 %136
    %vm138 = vcmask 228528
    %s139 = scalar_lea.vmem [#allocation0], 8
    %140 = vst.msk [vmem:[%s139] sm:$0x1] %vm138, %v137
    %s141 = scalar_lea.vmem %s0, 3
    %v142 = vld [vmem:[%s141] sm:$0x1]
    %143 = vrot.lane.b32.xlu0 %v142, 18
    %v144 = vpop.permute.xlu0 %143
    %vm145 = vcmask 195728
    %146 = vst.msk [vmem:[#allocation0] sm:$0x1] %vm145, %v144
    %s147 = scalar_lea.vmem %s0, 24
    %v148 = vld [vmem:[%s147] sm:$0x1]
    %149 = vrot.lane.b32.xlu0 %v148, 16
    %v150 = vpop.permute.xlu0 %149
    %vm151 = vcmask 179328
    %s152 = scalar_lea.vmem [#allocation0], 8
    %153 = vst.msk [vmem:[%s152] sm:$0x1] %vm151, %v150
    %s154 = scalar_lea.vmem %s0, 2
    %v155 = vld [vmem:[%s154] sm:$0x1]
    %156 = vrot.lane.b32.xlu0 %v155, 12
    %v157 = vpop.permute.xlu0 %156
    %vm158 = vcmask 146528
    %159 = vst.msk [vmem:[#allocation0] sm:$0x1] %vm158, %v157
    %s160 = scalar_lea.vmem %s0, 23
    %v161 = vld [vmem:[%s160] sm:$0x1]
    %162 = vrot.lane.b32.xlu0 %v161, 10
    %v163 = vpop.permute.xlu0 %162
    %vm164 = vcmask 130128
    %s165 = scalar_lea.vmem [#allocation0], 8
    %166 = vst.msk [vmem:[%s165] sm:$0x1] %vm164, %v163
    %s167 = scalar_lea.vmem %s0, 1
    %v168 = vld [vmem:[%s167] sm:$0x1]
    %169 = vrot.lane.b32.xlu0 %v168, 6
    %v170 = vpop.permute.xlu0 %169
    %vm171 = vcmask 97328
    %172 = vst.msk [vmem:[#allocation0] sm:$0x1] %vm171, %v170
    %s173 = scalar_lea.vmem %s0, 22
    %v174 = vld [vmem:[%s173] sm:$0x1]
    %175 = vrot.lane.b32.xlu0 %v174, 4
    %v176 = vpop.permute.xlu0 %175
    %vm177 = vcmask 80928
    %s178 = scalar_lea.vmem [#allocation0], 8
    %179 = vst.msk [vmem:[%s178] sm:$0x1] %vm177, %v176
    %s181 = sshllo.u32 0, 1
    %v183 = vld [vmem:[#allocation0] sm:%s181]
    %s184 = sshllo.u32 0, 1
    %185 = vst [vmem:[%s1] sm:%s184] %v183
    %s186 = scalar_lea.vmem [#allocation0], 8
    %v187 = vld [vmem:[%s186] sm:%s181]
    %s188 = sshllo.u32 0, 1
    %s189 = scalar_lea.vmem %s1, 1
    %190 = vst [vmem:[%s189] sm:%s188] %v187

// kernel: tile.18
$region0: #{tile.18}
  #allocation0 [shape = 's32[1]{0}', space=sflag, size = 0x4, scoped, tag = 'scoped memory for tile.18']
  %s0 = inlined_call_operand.vmem [shape: f32[16], index: 0, kind: input, shape index: {}]
  %s1 = inlined_call_operand.vmem [shape: f32[10,16], index: 1, kind: output, shape index: {}]
  // Predicated region
  $region2: #{tile.18} parent=0 // pred_check
    _
  $region3: #{tile.18} parent=0 // pred_check_branch
    %3 = sbr.rel (0) target = $region5
  $region4: #{tile.18} parent=0 // pred_region
    _
  $region5: #{tile.18} parent=0 // pred_fallthru
    _
  %v4 = vld [vmem:[%s0] ss:$0 sm:$0xff]
  %5 = vst [vmem:[%s1] sm:$0xff] %v4
  %s6 = scalar_lea.vmem %s1, 8
  %7 = vst [vmem:[%s6] sm:$0xff] %v4

// kernel: tile.19
$region0: #{tile.19}
  %s0 = inlined_call_operand.vmem [shape: f32[10,16], index: 0, kind: input, shape index: {}]
  %s1 = inlined_call_operand.vmem [shape: f32[1,160], index: 1, kind: output, shape index: {}]
  $region1: #{tile.19} parent=0
    #allocation0 [shape = 'u8[8192]{0}', space=vmem, size = 0x2000, scoped, tag = 'scoped mem for output reshape']
    %s2 = smov 3
    %v3 = vld [vmem:[%s0] ss:$8 sm:%s2]
    %vm4 = vcmask 130048
    %5 = vst.msk [vmem:[#allocation0] ss:$8 sm:$0x3] %vm4, %v3
    %s6 = scalar_lea.vmem %s0, 7
    %v7 = vld [vmem:[%s6] sm:$0x1]
    %8 = vrot.lane.b32.xlu0 %v7, 112
    %v9 = vpop.permute.xlu0 %8
    %vm10 = vcmask 1048448
    %11 = vst.msk [vmem:[#allocation0] sm:$0x1] %vm10, %v9
    %s12 = scalar_lea.vmem %s0, 6
    %v13 = vld [vmem:[%s12] sm:$0x1]
    %14 = vrot.lane.b32.xlu0 %v13, 96
    %v15 = vpop.permute.xlu0 %14
    %vm16 = vcmask 917248
    %17 = vst.msk [vmem:[#allocation0] sm:$0x1] %vm16, %v15
    %s18 = scalar_lea.vmem %s0, 5
    %v19 = vld [vmem:[%s18] sm:$0x1]
    %20 = vrot.lane.b32.xlu0 %v19, 80
    %v21 = vpop.permute.xlu0 %20
    %vm22 = vcmask 786048
    %23 = vst.msk [vmem:[#allocation0] sm:$0x1] %vm22, %v21
    %s24 = scalar_lea.vmem %s0, 4
    %v25 = vld [vmem:[%s24] sm:$0x1]
    %26 = vrot.lane.b32.xlu0 %v25, 64
    %v27 = vpop.permute.xlu0 %26
    %vm28 = vcmask 654848
    %29 = vst.msk [vmem:[#allocation0] sm:$0x1] %vm28, %v27
    %s30 = scalar_lea.vmem %s0, 3
    %v31 = vld [vmem:[%s30] sm:$0x1]
    %32 = vrot.lane.b32.xlu0 %v31, 48
    %v33 = vpop.permute.xlu0 %32
    %vm34 = vcmask 523648
    %35 = vst.msk [vmem:[#allocation0] sm:$0x1] %vm34, %v33
    %s36 = scalar_lea.vmem %s0, 2
    %v37 = vld [vmem:[%s36] sm:$0x1]
    %38 = vrot.lane.b32.xlu0 %v37, 32
    %v39 = vpop.permute.xlu0 %38
    %vm40 = vcmask 392448
    %41 = vst.msk [vmem:[#allocation0] sm:$0x1] %vm40, %v39
    %s42 = scalar_lea.vmem %s0, 1
    %s43 = smov 3
    %v44 = vld [vmem:[%s42] ss:$8 sm:%s43]
    %45 = vrot.lane.b32.xlu0 %v44, 16
    %v46 = vpop.permute.xlu0 %45
    %vm47 = vcmask 261248
    %48 = vst.msk [vmem:[#allocation0] ss:$8 sm:$0x3] %vm47, %v46
    %s50 = sshllo.u32 0, 1
    %v52 = vld [vmem:[#allocation0] sm:%s50]
    %s53 = sshllo.u32 0, 1
    %54 = vst [vmem:[%s1] sm:%s53] %v52
    %s55 = scalar_lea.vmem [#allocation0], 8
    %v56 = vld [vmem:[%s55] sm:%s50]
    %s57 = sshllo.u32 0, 1
    %s58 = scalar_lea.vmem %s1, 1
    %59 = vst [vmem:[%s58] sm:%s57] %v56

// kernel: lenet_forward.1
$region0: #{lenet_forward.1}
  #allocation0 [shape = 'u32[]', space=smem, size = 0x4, offset = 0x4, fixed_abs, tag = 'smem constant byte address 0x4 - core index']
  #allocation1 [shape = 'u32[144,128]{1,0:T(1,128)}', space=vmem, size = 0x12000, scoped, tag = 'internal scratch']
  #allocation2 [shape = 'f32[32,32]{1,0:T(8,128)}', space=vmem, size = 0x4000, scoped, tag = 'scratch operand']
  #allocation3 [shape = 'f32[14,84]{1,0:T(8,128)}', space=vmem, size = 0x2000, scoped, tag = 'scratch operand']
  #allocation4 [shape = 'f32[5,80]{1,0:T(8,128)}', space=vmem, size = 0x1000, scoped, tag = 'scratch operand']
  %s0 = inlined_call_operand.vmem [shape: f32[2,32,32], index: 0, kind: input, shape index: {}]
  %s1 = inlined_call_operand.vmem [shape: f32[5,32,168], index: 1, kind: input, shape index: {}]
  %s2 = inlined_call_operand.vmem [shape: f32[1,168], index: 2, kind: input, shape index: {}]
  %s3 = inlined_call_operand.vmem [shape: f32[14,28], index: 3, kind: input, shape index: {}]
  %s4 = inlined_call_operand.vmem [shape: f32[168,84], index: 4, kind: input, shape index: {}]
  %s5 = inlined_call_operand.vmem [shape: f32[5,84,160], index: 5, kind: input, shape index: {}]
  %s6 = inlined_call_operand.vmem [shape: f32[1,160], index: 6, kind: input, shape index: {}]
  %s7 = inlined_call_operand.vmem [shape: f32[5,10], index: 7, kind: input, shape index: {}]
  %s8 = inlined_call_operand.vmem [shape: f32[160,80], index: 8, kind: input, shape index: {}]
  %s9 = inlined_call_operand.vmem [shape: f32[5,80,120], index: 9, kind: input, shape index: {}]
  %s10 = inlined_call_operand.vmem [shape: f32[1,120], index: 10, kind: input, shape index: {}]
  %s11 = inlined_call_operand.vmem [shape: f32[120,84], index: 11, kind: input, shape index: {}]
  %s12 = inlined_call_operand.vmem [shape: f32[1,84], index: 12, kind: input, shape index: {}]
  %s13 = inlined_call_operand.vmem [shape: f32[84,128], index: 13, kind: input, shape index: {}]
  %s14 = inlined_call_operand.vmem [shape: f32[1,128], index: 14, kind: input, shape index: {}]
  %s15 = inlined_call_operand.hbm [shape: f32[2,1,128], index: 15, kind: output, shape index: {}]
  %s16 = sld [smem:[#allocation0]]
  $region93: #{lenet_forward.1} parent=0
    _
  %s18 = ssub.s32 1, %s16
  %s19 = scalar_select 0, %s18, %s16
  $region1: #{lenet_forward.1} parent=0
    #allocation5 [shape = 'u8[1024]{0}', space=vmem, size = 0x400, scoped, tag = 'output window, operand 0']
    #allocation6 [shape = 's32[2]{0}', space=sflag, size = 0x8, scoped, tag = 'scoped memory for lenet_forward.1']
    %20 = vsyncpa [#allocation6], 0
    %s21 = scalar_lea.sflag [#allocation6], 1
    %22 = vsyncpa %s21, 0
    loop: start=0, step=1, limit=4
    $region2: #{lenet_forward.1} parent=1 // loop_pre_header
      _
    $region3: #{lenet_forward.1} parent=1 // loop_header
      %s24 = sphi 0, %s28
      %p25 = scmp.ge.s32.totalorder %s24, 4
      %s34 = sphi 0, %s36
      %s37 = sphi 0, %s34
      %s38 = sphi 0, %s37
      %s54 = sphi 0, %s38
      %s58 = sphi 0, %s58
      %s60 = sphi 0, %s58
      %s61 = sphi 0, %s60
      %s75 = sphi 0, %s61
      %s79 = sphi 0, %s79
      %s81 = sphi 0, %s79
      %s82 = sphi 0, %s81
      %s96 = sphi 0, %s82
      %s100 = sphi 0, %s100
      %s102 = sphi 0, %s100
      %s103 = sphi 0, %s102
      %s117 = sphi 0, %s103
      %s121 = sphi 0, %s121
      %s123 = sphi 0, %s121
      %s124 = sphi 0, %s123
      %s138 = sphi 0, %s124
      %s142 = sphi 0, %s142
      %s144 = sphi 0, %s142
      %s145 = sphi 0, %s144
      %s159 = sphi 0, %s145
      %s163 = sphi 0, %s163
      %s165 = sphi 0, %s163
      %s166 = sphi 0, %s165
      %s180 = sphi 0, %s166
      %s184 = sphi 0, %s184
      %s186 = sphi 0, %s184
      %s187 = sphi 0, %s186
      %s201 = sphi 0, %s187
      %s205 = sphi 0, %s205
      %s207 = sphi 0, %s205
      %s208 = sphi 0, %s207
      %s222 = sphi 0, %s208
      %s226 = sphi 0, %s226
      %s228 = sphi 0, %s226
      %s229 = sphi 0, %s228
      %s243 = sphi 0, %s229
      %s247 = sphi 0, %s247
      %s249 = sphi 0, %s247
      %s250 = sphi 0, %s249
      %s264 = sphi 0, %s250
      %s268 = sphi 0, %s268
      %s270 = sphi 0, %s268
      %s271 = sphi 0, %s270
      %s285 = sphi 0, %s271
      %s289 = sphi 0, %s289
      %s291 = sphi 0, %s289
      %s292 = sphi 0, %s291
      %s306 = sphi 0, %s292
      %s310 = sphi 0, %s310
      %s312 = sphi 0, %s310
      %s313 = sphi 0, %s312
      %s327 = sphi 0, %s313
      %s331 = sphi 0, %s331
      %s333 = sphi 0, %s331
      %s334 = sphi 0, %s333
      %s348 = sphi 0, %s334
      %s354 = sphi 0, %s356
      %s357 = sphi 0, %s354
      %s358 = sphi 0, %s357
      %s374 = sphi 0, %s358
    $region4: #{lenet_forward.1} parent=1 // loop_header_branch
      %27 = sbr.rel (%p25) target = $region8
    $region5: #{lenet_forward.1} parent=1 // loop_body
      %s29 = ssub.s32 %s24, 1
      %s30 = ssub.s32 %s24, 2
      %s31 = sadd.s32 %s24, 1
      %s32 = ssub.s32 %s24, %s31
      %p33 = scmp.eq.s32.totalorder %s32, 0
      %s35 = sadd.s32 %s34, 1
      %s36 = scalar_select %p33, %s34, %s35
      %p39 = pneg %p33
      %p40 = scmp.eq.s32.totalorder %s24, 1
      %p41 = por %p39, %p40
      %p42 = scmp.ne.s32.totalorder %s34, %s37
      %p43 = scmp.eq.s32.totalorder %s24, 0
      %p44 = por %p42, %p43
      %p45 = scmp.ne.s32.totalorder %s34, %s37
      %p46 = scmp.eq.s32.totalorder %s29, 1
      %p47 = por %p45, %p46
      %p48 = scmp.ne.s32.totalorder %s37, %s38
      %p49 = scmp.eq.s32.totalorder %s29, 0
      %p50 = por %p48, %p49
      %p51 = scmp.ne.s32.totalorder %s37, %s38
      %p52 = scmp.eq.s32.totalorder %s30, 1
      %p53 = por %p51, %p52
      %p55 = scmp.ne.s32.totalorder %s38, %s54
      %p56 = scmp.eq.s32.totalorder %s30, 0
      %p57 = por %p55, %p56
      %s59 = sadd.s32 %s58, 1
      %p62 = scmp.eq.s32.totalorder %s24, 1
      %p63 = scmp.ne.s32.totalorder %s58, %s60
      %p64 = scmp.eq.s32.totalorder %s24, 0
      %p65 = por %p63, %p64
      %p66 = scmp.ne.s32.totalorder %s58, %s60
      %p67 = scmp.eq.s32.totalorder %s29, 1
      %p68 = por %p66, %p67
      %p69 = scmp.ne.s32.totalorder %s60, %s61
      %p70 = scmp.eq.s32.totalorder %s29, 0
      %p71 = por %p69, %p70
      %p72 = scmp.ne.s32.totalorder %s60, %s61
      %p73 = scmp.eq.s32.totalorder %s30, 1
      %p74 = por %p72, %p73
      %p76 = scmp.ne.s32.totalorder %s61, %s75
      %p77 = scmp.eq.s32.totalorder %s30, 0
      %p78 = por %p76, %p77
      %s80 = sadd.s32 %s79, 1
      %p83 = scmp.eq.s32.totalorder %s24, 1
      %p84 = scmp.ne.s32.totalorder %s79, %s81
      %p85 = scmp.eq.s32.totalorder %s24, 0
      %p86 = por %p84, %p85
      %p87 = scmp.ne.s32.totalorder %s79, %s81
      %p88 = scmp.eq.s32.totalorder %s29, 1
      %p89 = por %p87, %p88
      %p90 = scmp.ne.s32.totalorder %s81, %s82
      %p91 = scmp.eq.s32.totalorder %s29, 0
      %p92 = por %p90, %p91
      %p93 = scmp.ne.s32.totalorder %s81, %s82
      %p94 = scmp.eq.s32.totalorder %s30, 1
      %p95 = por %p93, %p94
      %p97 = scmp.ne.s32.totalorder %s82, %s96
      %p98 = scmp.eq.s32.totalorder %s30, 0
      %p99 = por %p97, %p98
      %s101 = sadd.s32 %s100, 1
      %p104 = scmp.eq.s32.totalorder %s24, 1
      %p105 = scmp.ne.s32.totalorder %s100, %s102
      %p106 = scmp.eq.s32.totalorder %s24, 0
      %p107 = por %p105, %p106
      %p108 = scmp.ne.s32.totalorder %s100, %s102
      %p109 = scmp.eq.s32.totalorder %s29, 1
      %p110 = por %p108, %p109
      %p111 = scmp.ne.s32.totalorder %s102, %s103
      %p112 = scmp.eq.s32.totalorder %s29, 0
      %p113 = por %p111, %p112
      %p114 = scmp.ne.s32.totalorder %s102, %s103
      %p115 = scmp.eq.s32.totalorder %s30, 1
      %p116 = por %p114, %p115
      %p118 = scmp.ne.s32.totalorder %s103, %s117
      %p119 = scmp.eq.s32.totalorder %s30, 0
      %p120 = por %p118, %p119
      %s122 = sadd.s32 %s121, 1
      %p125 = scmp.eq.s32.totalorder %s24, 1
      %p126 = scmp.ne.s32.totalorder %s121, %s123
      %p127 = scmp.eq.s32.totalorder %s24, 0
      %p128 = por %p126, %p127
      %p129 = scmp.ne.s32.totalorder %s121, %s123
      %p130 = scmp.eq.s32.totalorder %s29, 1
      %p131 = por %p129, %p130
      %p132 = scmp.ne.s32.totalorder %s123, %s124
      %p133 = scmp.eq.s32.totalorder %s29, 0
      %p134 = por %p132, %p133
      %p135 = scmp.ne.s32.totalorder %s123, %s124
      %p136 = scmp.eq.s32.totalorder %s30, 1
      %p137 = por %p135, %p136
      %p139 = scmp.ne.s32.totalorder %s124, %s138
      %p140 = scmp.eq.s32.totalorder %s30, 0
      %p141 = por %p139, %p140
      %s143 = sadd.s32 %s142, 1
      %p146 = scmp.eq.s32.totalorder %s24, 1
      %p147 = scmp.ne.s32.totalorder %s142, %s144
      %p148 = scmp.eq.s32.totalorder %s24, 0
      %p149 = por %p147, %p148
      %p150 = scmp.ne.s32.totalorder %s142, %s144
      %p151 = scmp.eq.s32.totalorder %s29, 1
      %p152 = por %p150, %p151
      %p153 = scmp.ne.s32.totalorder %s144, %s145
      %p154 = scmp.eq.s32.totalorder %s29, 0
      %p155 = por %p153, %p154
      %p156 = scmp.ne.s32.totalorder %s144, %s145
      %p157 = scmp.eq.s32.totalorder %s30, 1
      %p158 = por %p156, %p157
      %p160 = scmp.ne.s32.totalorder %s145, %s159
      %p161 = scmp.eq.s32.totalorder %s30, 0
      %p162 = por %p160, %p161
      %s164 = sadd.s32 %s163, 1
      %p167 = scmp.eq.s32.totalorder %s24, 1
      %p168 = scmp.ne.s32.totalorder %s163, %s165
      %p169 = scmp.eq.s32.totalorder %s24, 0
      %p170 = por %p168, %p169
      %p171 = scmp.ne.s32.totalorder %s163, %s165
      %p172 = scmp.eq.s32.totalorder %s29, 1
      %p173 = por %p171, %p172
      %p174 = scmp.ne.s32.totalorder %s165, %s166
      %p175 = scmp.eq.s32.totalorder %s29, 0
      %p176 = por %p174, %p175
      %p177 = scmp.ne.s32.totalorder %s165, %s166
      %p178 = scmp.eq.s32.totalorder %s30, 1
      %p179 = por %p177, %p178
      %p181 = scmp.ne.s32.totalorder %s166, %s180
      %p182 = scmp.eq.s32.totalorder %s30, 0
      %p183 = por %p181, %p182
      %s185 = sadd.s32 %s184, 1
      %p188 = scmp.eq.s32.totalorder %s24, 1
      %p189 = scmp.ne.s32.totalorder %s184, %s186
      %p190 = scmp.eq.s32.totalorder %s24, 0
      %p191 = por %p189, %p190
      %p192 = scmp.ne.s32.totalorder %s184, %s186
      %p193 = scmp.eq.s32.totalorder %s29, 1
      %p194 = por %p192, %p193
      %p195 = scmp.ne.s32.totalorder %s186, %s187
      %p196 = scmp.eq.s32.totalorder %s29, 0
      %p197 = por %p195, %p196
      %p198 = scmp.ne.s32.totalorder %s186, %s187
      %p199 = scmp.eq.s32.totalorder %s30, 1
      %p200 = por %p198, %p199
      %p202 = scmp.ne.s32.totalorder %s187, %s201
      %p203 = scmp.eq.s32.totalorder %s30, 0
      %p204 = por %p202, %p203
      %s206 = sadd.s32 %s205, 1
      %p209 = scmp.eq.s32.totalorder %s24, 1
      %p210 = scmp.ne.s32.totalorder %s205, %s207
      %p211 = scmp.eq.s32.totalorder %s24, 0
      %p212 = por %p210, %p211
      %p213 = scmp.ne.s32.totalorder %s205, %s207
      %p214 = scmp.eq.s32.totalorder %s29, 1
      %p215 = por %p213, %p214
      %p216 = scmp.ne.s32.totalorder %s207, %s208
      %p217 = scmp.eq.s32.totalorder %s29, 0
      %p218 = por %p216, %p217
      %p219 = scmp.ne.s32.totalorder %s207, %s208
      %p220 = scmp.eq.s32.totalorder %s30, 1
      %p221 = por %p219, %p220
      %p223 = scmp.ne.s32.totalorder %s208, %s222
      %p224 = scmp.eq.s32.totalorder %s30, 0
      %p225 = por %p223, %p224
      %s227 = sadd.s32 %s226, 1
      %p230 = scmp.eq.s32.totalorder %s24, 1
      %p231 = scmp.ne.s32.totalorder %s226, %s228
      %p232 = scmp.eq.s32.totalorder %s24, 0
      %p233 = por %p231, %p232
      %p234 = scmp.ne.s32.totalorder %s226, %s228
      %p235 = scmp.eq.s32.totalorder %s29, 1
      %p236 = por %p234, %p235
      %p237 = scmp.ne.s32.totalorder %s228, %s229
      %p238 = scmp.eq.s32.totalorder %s29, 0
      %p239 = por %p237, %p238
      %p240 = scmp.ne.s32.totalorder %s228, %s229
      %p241 = scmp.eq.s32.totalorder %s30, 1
      %p242 = por %p240, %p241
      %p244 = scmp.ne.s32.totalorder %s229, %s243
      %p245 = scmp.eq.s32.totalorder %s30, 0
      %p246 = por %p244, %p245
      %s248 = sadd.s32 %s247, 1
      %p251 = scmp.eq.s32.totalorder %s24, 1
      %p252 = scmp.ne.s32.totalorder %s247, %s249
      %p253 = scmp.eq.s32.totalorder %s24, 0
      %p254 = por %p252, %p253
      %p255 = scmp.ne.s32.totalorder %s247, %s249
      %p256 = scmp.eq.s32.totalorder %s29, 1
      %p257 = por %p255, %p256
      %p258 = scmp.ne.s32.totalorder %s249, %s250
      %p259 = scmp.eq.s32.totalorder %s29, 0
      %p260 = por %p258, %p259
      %p261 = scmp.ne.s32.totalorder %s249, %s250
      %p262 = scmp.eq.s32.totalorder %s30, 1
      %p263 = por %p261, %p262
      %p265 = scmp.ne.s32.totalorder %s250, %s264
      %p266 = scmp.eq.s32.totalorder %s30, 0
      %p267 = por %p265, %p266
      %s269 = sadd.s32 %s268, 1
      %p272 = scmp.eq.s32.totalorder %s24, 1
      %p273 = scmp.ne.s32.totalorder %s268, %s270
      %p274 = scmp.eq.s32.totalorder %s24, 0
      %p275 = por %p273, %p274
      %p276 = scmp.ne.s32.totalorder %s268, %s270
      %p277 = scmp.eq.s32.totalorder %s29, 1
      %p278 = por %p276, %p277
      %p279 = scmp.ne.s32.totalorder %s270, %s271
      %p280 = scmp.eq.s32.totalorder %s29, 0
      %p281 = por %p279, %p280
      %p282 = scmp.ne.s32.totalorder %s270, %s271
      %p283 = scmp.eq.s32.totalorder %s30, 1
      %p284 = por %p282, %p283
      %p286 = scmp.ne.s32.totalorder %s271, %s285
      %p287 = scmp.eq.s32.totalorder %s30, 0
      %p288 = por %p286, %p287
      %s290 = sadd.s32 %s289, 1
      %p293 = scmp.eq.s32.totalorder %s24, 1
      %p294 = scmp.ne.s32.totalorder %s289, %s291
      %p295 = scmp.eq.s32.totalorder %s24, 0
      %p296 = por %p294, %p295
      %p297 = scmp.ne.s32.totalorder %s289, %s291
      %p298 = scmp.eq.s32.totalorder %s29, 1
      %p299 = por %p297, %p298
      %p300 = scmp.ne.s32.totalorder %s291, %s292
      %p301 = scmp.eq.s32.totalorder %s29, 0
      %p302 = por %p300, %p301
      %p303 = scmp.ne.s32.totalorder %s291, %s292
      %p304 = scmp.eq.s32.totalorder %s30, 1
      %p305 = por %p303, %p304
      %p307 = scmp.ne.s32.totalorder %s292, %s306
      %p308 = scmp.eq.s32.totalorder %s30, 0
      %p309 = por %p307, %p308
      %s311 = sadd.s32 %s310, 1
      %p314 = scmp.eq.s32.totalorder %s24, 1
      %p315 = scmp.ne.s32.totalorder %s310, %s312
      %p316 = scmp.eq.s32.totalorder %s24, 0
      %p317 = por %p315, %p316
      %p318 = scmp.ne.s32.totalorder %s310, %s312
      %p319 = scmp.eq.s32.totalorder %s29, 1
      %p320 = por %p318, %p319
      %p321 = scmp.ne.s32.totalorder %s312, %s313
      %p322 = scmp.eq.s32.totalorder %s29, 0
      %p323 = por %p321, %p322
      %p324 = scmp.ne.s32.totalorder %s312, %s313
      %p325 = scmp.eq.s32.totalorder %s30, 1
      %p326 = por %p324, %p325
      %p328 = scmp.ne.s32.totalorder %s313, %s327
      %p329 = scmp.eq.s32.totalorder %s30, 0
      %p330 = por %p328, %p329
      %s332 = sadd.s32 %s331, 1
      %p335 = scmp.eq.s32.totalorder %s24, 1
      %p336 = scmp.ne.s32.totalorder %s331, %s333
      %p337 = scmp.eq.s32.totalorder %s24, 0
      %p338 = por %p336, %p337
      %p339 = scmp.ne.s32.totalorder %s331, %s333
      %p340 = scmp.eq.s32.totalorder %s29, 1
      %p341 = por %p339, %p340
      %p342 = scmp.ne.s32.totalorder %s333, %s334
      %p343 = scmp.eq.s32.totalorder %s29, 0
      %p344 = por %p342, %p343
      %p345 = scmp.ne.s32.totalorder %s333, %s334
      %p346 = scmp.eq.s32.totalorder %s30, 1
      %p347 = por %p345, %p346
      %p349 = scmp.ne.s32.totalorder %s334, %s348
      %p350 = scmp.eq.s32.totalorder %s30, 0
      %p351 = por %p349, %p350
      %s352 = ssub.s32 %s24, %s31
      %p353 = scmp.eq.s32.totalorder %s352, 0
      %s355 = sadd.s32 %s354, 1
      %s356 = scalar_select %p353, %s354, %s355
      %p359 = pneg %p353
      %p360 = scmp.eq.s32.totalorder %s24, 1
      %p361 = por %p359, %p360
      %p362 = scmp.ne.s32.totalorder %s354, %s357
      %p363 = scmp.eq.s32.totalorder %s24, 0
      %p364 = por %p362, %p363
      %p365 = scmp.ne.s32.totalorder %s354, %s357
      %p366 = scmp.eq.s32.totalorder %s29, 1
      %p367 = por %p365, %p366
      %p368 = scmp.ne.s32.totalorder %s357, %s358
      %p369 = scmp.eq.s32.totalorder %s29, 0
      %p370 = por %p368, %p369
      %p371 = scmp.ne.s32.totalorder %s357, %s358
      %p372 = scmp.eq.s32.totalorder %s30, 1
      %p373 = por %p371, %p372
      %p375 = scmp.ne.s32.totalorder %s358, %s374
      %p376 = scmp.eq.s32.totalorder %s30, 0
      %p377 = por %p375, %p376
      %p378 = scmp.le.s32.totalorder 1, %s24
      %p379 = scmp.lt.s32.totalorder %s24, 3
      %p380 = pnand %p378, %p379
      %p381 = pneg %p380
      // Predicated region
      $region9: #{lenet_forward.1} parent=5 // pred_check
        _
      $region10: #{lenet_forward.1} parent=5 // pred_check_branch
        %383 = sbr.rel (%p380) target = $region12
      $region11: #{lenet_forward.1} parent=5 // pred_region
        %s384 = ssub.s32 %s24, 1
        // Predicated region
        $region13: #{lenet_forward.1} parent=11 // pred_check
          %p385 = pneg %p71
        $region14: #{lenet_forward.1} parent=11 // pred_check_branch
          %387 = sbr.rel (%p385) target = $region16
        $region15: #{lenet_forward.1} parent=11 // pred_region
          _
        $region16: #{lenet_forward.1} parent=11 // pred_fallthru
          _
        // Predicated region
        $region17: #{lenet_forward.1} parent=11 // pred_check
          %p388 = pneg %p92
        $region18: #{lenet_forward.1} parent=11 // pred_check_branch
          %390 = sbr.rel (%p388) target = $region20
        $region19: #{lenet_forward.1} parent=11 // pred_region
          _
        $region20: #{lenet_forward.1} parent=11 // pred_fallthru
          _
        // Predicated region
        $region21: #{lenet_forward.1} parent=11 // pred_check
          %p391 = pneg %p113
        $region22: #{lenet_forward.1} parent=11 // pred_check_branch
          %393 = sbr.rel (%p391) target = $region24
        $region23: #{lenet_forward.1} parent=11 // pred_region
          _
        $region24: #{lenet_forward.1} parent=11 // pred_fallthru
          _
        // Predicated region
        $region25: #{lenet_forward.1} parent=11 // pred_check
          %p394 = pneg %p134
        $region26: #{lenet_forward.1} parent=11 // pred_check_branch
          %396 = sbr.rel (%p394) target = $region28
        $region27: #{lenet_forward.1} parent=11 // pred_region
          _
        $region28: #{lenet_forward.1} parent=11 // pred_fallthru
          _
        // Predicated region
        $region29: #{lenet_forward.1} parent=11 // pred_check
          %p397 = pneg %p155
        $region30: #{lenet_forward.1} parent=11 // pred_check_branch
          %399 = sbr.rel (%p397) target = $region32
        $region31: #{lenet_forward.1} parent=11 // pred_region
          _
        $region32: #{lenet_forward.1} parent=11 // pred_fallthru
          _
        // Predicated region
        $region33: #{lenet_forward.1} parent=11 // pred_check
          %p400 = pneg %p176
        $region34: #{lenet_forward.1} parent=11 // pred_check_branch
          %402 = sbr.rel (%p400) target = $region36
        $region35: #{lenet_forward.1} parent=11 // pred_region
          _
        $region36: #{lenet_forward.1} parent=11 // pred_fallthru
          _
        // Predicated region
        $region37: #{lenet_forward.1} parent=11 // pred_check
          %p403 = pneg %p197
        $region38: #{lenet_forward.1} parent=11 // pred_check_branch
          %405 = sbr.rel (%p403) target = $region40
        $region39: #{lenet_forward.1} parent=11 // pred_region
          _
        $region40: #{lenet_forward.1} parent=11 // pred_fallthru
          _
        // Predicated region
        $region41: #{lenet_forward.1} parent=11 // pred_check
          %p406 = pneg %p218
        $region42: #{lenet_forward.1} parent=11 // pred_check_branch
          %408 = sbr.rel (%p406) target = $region44
        $region43: #{lenet_forward.1} parent=11 // pred_region
          _
        $region44: #{lenet_forward.1} parent=11 // pred_fallthru
          _
        // Predicated region
        $region45: #{lenet_forward.1} parent=11 // pred_check
          %p409 = pneg %p239
        $region46: #{lenet_forward.1} parent=11 // pred_check_branch
          %411 = sbr.rel (%p409) target = $region48
        $region47: #{lenet_forward.1} parent=11 // pred_region
          _
        $region48: #{lenet_forward.1} parent=11 // pred_fallthru
          _
        // Predicated region
        $region49: #{lenet_forward.1} parent=11 // pred_check
          %p412 = pneg %p260
        $region50: #{lenet_forward.1} parent=11 // pred_check_branch
          %414 = sbr.rel (%p412) target = $region52
        $region51: #{lenet_forward.1} parent=11 // pred_region
          _
        $region52: #{lenet_forward.1} parent=11 // pred_fallthru
          _
        // Predicated region
        $region53: #{lenet_forward.1} parent=11 // pred_check
          %p415 = pneg %p281
        $region54: #{lenet_forward.1} parent=11 // pred_check_branch
          %417 = sbr.rel (%p415) target = $region56
        $region55: #{lenet_forward.1} parent=11 // pred_region
          _
        $region56: #{lenet_forward.1} parent=11 // pred_fallthru
          _
        // Predicated region
        $region57: #{lenet_forward.1} parent=11 // pred_check
          %p418 = pneg %p302
        $region58: #{lenet_forward.1} parent=11 // pred_check_branch
          %420 = sbr.rel (%p418) target = $region60
        $region59: #{lenet_forward.1} parent=11 // pred_region
          _
        $region60: #{lenet_forward.1} parent=11 // pred_fallthru
          _
        // Predicated region
        $region61: #{lenet_forward.1} parent=11 // pred_check
          %p421 = pneg %p323
        $region62: #{lenet_forward.1} parent=11 // pred_check_branch
          %423 = sbr.rel (%p421) target = $region64
        $region63: #{lenet_forward.1} parent=11 // pred_region
          _
        $region64: #{lenet_forward.1} parent=11 // pred_fallthru
          _
        // Predicated region
        $region65: #{lenet_forward.1} parent=11 // pred_check
          %p424 = pneg %p344
        $region66: #{lenet_forward.1} parent=11 // pred_check_branch
          %426 = sbr.rel (%p424) target = $region68
        $region67: #{lenet_forward.1} parent=11 // pred_region
          _
        $region68: #{lenet_forward.1} parent=11 // pred_fallthru
          _
      $region12: #{lenet_forward.1} parent=5 // pred_fallthru
        _
      %p427 = scmp.lt.s32.totalorder %s24, 2
      // Predicated region
      $region69: #{lenet_forward.1} parent=5 // pred_check
        %p428 = pneg %p427
      $region70: #{lenet_forward.1} parent=5 // pred_check_branch
        %430 = sbr.rel (%p428) target = $region72
      $region71: #{lenet_forward.1} parent=5 // pred_region
        // Predicated region
        $region73: #{lenet_forward.1} parent=71 // pred_check
          %p431 = pneg %p44
        $region74: #{lenet_forward.1} parent=71 // pred_check_branch
          %433 = sbr.rel (%p431) target = $region76
        $region75: #{lenet_forward.1} parent=71 // pred_region
          %p434 = scmp.lt.s32.totalorder %s24, 1
          %s435 = scalar_select %p434, %s24, 1
          %s436 = smul.addr %s435, 4
          %s437 = smul.addr %s436, 8
          %s438 = scalar_lea.vmem %s0, %s437
        $region76: #{lenet_forward.1} parent=71 // pred_fallthru
          _
      $region72: #{lenet_forward.1} parent=5 // pred_fallthru
        _
      %p439 = scmp.le.s32.totalorder 1, %s24
      %p440 = scmp.lt.s32.totalorder %s24, 3
      %p441 = pnand %p439, %p440
      %p442 = pneg %p441
      // Predicated region
      $region77: #{lenet_forward.1} parent=5 // pred_check
        _
      $region78: #{lenet_forward.1} parent=5 // pred_check_branch
        %444 = sbr.rel (%p441) target = $region80
      $region79: #{lenet_forward.1} parent=5 // pred_region
        %s445 = ssub.s32 %s24, 1
        %p446 = scmp.lt.s32.totalorder %s29, 1
        %s447 = scalar_select %p446, %s29, 1
        %s448 = smul.addr %s447, 4
        %s449 = smul.addr %s448, 8
        %s450 = scalar_lea.vmem %s0, %s449
        %p451 = pneg %p50
        %p452 = pneg %p47
        %p453 = pneg %p71
        %p454 = pneg %p68
        %p455 = pneg %p92
        %p456 = pneg %p89
        %p457 = pneg %p113
        %p458 = pneg %p110
        %p459 = pneg %p134
        %p460 = pneg %p131
        %p461 = pneg %p155
        %p462 = pneg %p152
        %p463 = pneg %p176
        %p464 = pneg %p173
        %p465 = pneg %p197
        %p466 = pneg %p194
        %p467 = pneg %p218
        %p468 = pneg %p215
        %p469 = pneg %p239
        %p470 = pneg %p236
        %p471 = pneg %p260
        %p472 = pneg %p257
        %p473 = pneg %p281
        %p474 = pneg %p278
        %p475 = pneg %p302
        %p476 = pneg %p299
        %p477 = pneg %p323
        %p478 = pneg %p320
        %p479 = pneg %p344
        %p480 = pneg %p341
        %p481 = pneg %p370
        %p482 = pneg %p367
        %s483 = sand.u32 %s357, 1
        %s484 = scalar_lea.sflag [#allocation6], %s483
        %s485 = sand.u32 %s357, 1
        %s486 = scalar_lea.vmem [#allocation5], %s485
        %p487 = scmp.lt.s32.totalorder %s29, 1
        %s488 = scalar_select %p487, %s29, 1
        %s489 = smul.addr %s488, 4
        %s490 = smul.addr %s489, 8
        %s491 = scalar_lea.vmem %s0, %s490
        %v492 = vld [vmem:[%s491] sm:$0xff]
        %v493 = vld [vmem:[%s491 + $0x8] sm:$0xff]
        %v494 = vld [vmem:[%s491 + $0x10] sm:$0xff]
        %v495 = vld [vmem:[%s491 + $0x18] sm:$0xff]
        %vm496 = vcmask 261120
        %497 = vst.msk [vmem:[#allocation2] sm:$0xff] %vm496, %v492
        %498 = vst.msk [vmem:[#allocation2 + $0x8] sm:$0xff] %vm496, %v493
        %499 = vst.msk [vmem:[#allocation2 + $0x10] sm:$0xff] %vm496, %v494
        %500 = vst.msk [vmem:[#allocation2 + $0x18] sm:$0xff] %vm496, %v495
        %v501 = vld [vmem:[%s2] sm:$0x3]
        %v503 = vlaneseq
        %v504 = vshrl.u32 %v503, 7
        %v505 = vsub.s32 0, %v504
        %v506 = vrot.slane %v501, %v505
        %v507 = vlaneseq
        %v508 = vshrl.u32 %v507, 7
        %v509 = vsub.s32 1, %v508
        %v510 = vrot.slane %v501, %v509
        %v513 = vld [vmem:[#allocation2] sm:$0xff]
        %v514 = vld [vmem:[#allocation2 + $0x8] sm:$0xff]
        %v515 = vld [vmem:[#allocation2 + $0x10] sm:$0xff]
        %v516 = vld [vmem:[#allocation2 + $0x18] sm:$0xf]
        %v517 = vld [vmem:[%s1] sm:$0xff]
        %v518 = vld [vmem:[%s1 + $0x8] sm:$0xff]
        %v519 = vld [vmem:[%s1 + $0x10] sm:$0xff]
        %v520 = vld [vmem:[%s1 + $0x18] sm:$0xff]
        %v521 = vld [vmem:[%s1 + $0x20] sm:$0xff]
        %v522 = vld [vmem:[%s1 + $0x28] sm:$0xff]
        %v523 = vld [vmem:[%s1 + $0x30] sm:$0xff]
        %v524 = vld [vmem:[%s1 + $0x38] sm:$0xff]
        %v526 = vsel %vm496, %v513, 0
        %v529 = vsel %vm496, %v514, 0
        %v532 = vsel %vm496, %v515, 0
        %v535 = vsel %vm496, %v516, 0
        %537 = vmatprep.subr.mxu0 %v518
        %538 = vmatpush1.msra.mxu0 %v517
        %539 = vmatprep.subr.mxu0 %v520
        %540 = vmatpush1.msra.mxu0 %v519
        %541 = vmatprep.subr.mxu0 %v522
        %542 = vmatpush1.msra.mxu0 %v521
        %543 = vmatprep.subr.mxu0 %v524
        %544 = vmatpush1.msra.mxu0 %v523
        %545 = vmatprep.subr.mxu0 0.0
        %546 = vmatpush1.msra.mxu0 0.0
        %547 = vmatprep.subr.mxu0 0.0
        %548 = vmatpush1.msra.mxu0 0.0
        %549 = vmatprep.subr.mxu0 0.0
        %550 = vmatpush1.msra.mxu0 0.0
        %551 = vmatprep.subr.mxu0 0.0
        %552 = vmatpush1.msra.mxu0 0.0
        %553 = vmatprep.subr.mxu0 0.0
        %554 = vmatpush1.msra.mxu0 0.0
        %555 = vmatprep.subr.mxu0 0.0
        %556 = vmatpush1.msra.mxu0 0.0
        %557 = vmatprep.subr.mxu0 0.0
        %558 = vmatpush1.msra.mxu0 0.0
        %559 = vmatprep.subr.mxu0 0.0
        %560 = vmatpush1.msra.mxu0 0.0
        %561 = vmatprep.subr.mxu0 0.0
        %562 = vmatpush1.msra.mxu0 0.0
        %563 = vmatprep.subr.mxu0 0.0
        %564 = vmatpush1.msra.mxu0 0.0
        %565 = vmatprep.subr.mxu0 0.0
        %566 = vmatpush1.msra.mxu0 0.0
        %567 = vmatprep.subr.mxu0 0.0
        %568 = vmatpush1.msra.mxu0 0.0
        %569 = vmatprep.subr.mxu0 0.0
        %570 = vmatpush1.msra.mxu0 0.0
        %571 = vmatprep.subr.mxu0 0.0
        %572 = vmatpush1.msra.mxu0 0.0
        %573 = vmatprep.subr.mxu0 0.0
        %574 = vmatpush1.msra.mxu0 0.0
        %575 = vmatprep.subr.mxu0 0.0
        %576 = vmatpush1.msra.mxu0 0.0
        %577 = vmatprep.subr.mxu0 0.0
        %578 = vmatpush1.msra.mxu0 0.0
        %579 = vmatprep.subr.mxu0 0.0
        %580 = vmatpush1.msra.mxu0 0.0
        %581 = vmatprep.subr.mxu0 0.0
        %582 = vmatpush1.msra.mxu0 0.0
        %583 = vmatprep.subr.mxu0 0.0
        %584 = vmatpush1.msra.mxu0 0.0
        %585 = vmatprep.subr.mxu0 0.0
        %586 = vmatpush1.msra.mxu0 0.0
        %587 = vmatprep.subr.mxu0 0.0
        %588 = vmatpush1.msra.mxu0 0.0
        %589 = vmatprep.subr.mxu0 0.0
        %590 = vmatpush1.msra.mxu0 0.0
        %591 = vmatprep.subr.mxu0 0.0
        %592 = vmatpush1.msra.mxu0 0.0
        %593 = vmatprep.subr.mxu0 0.0
        %594 = vmatpush1.msra.mxu0 0.0
        %595 = vmatprep.subr.mxu0 0.0
        %596 = vmatpush1.msra.mxu0 0.0
        %597 = vmatprep.subr.mxu0 0.0
        %598 = vmatpush1.msra.mxu0 0.0
        %599 = vmatprep.subr.mxu0 0.0
        %600 = vmatpush1.msra.mxu0 0.0
        %601 = vmatprep.mubr.f32.mxu0 0.0
        %602 = vmatmul.mubr.f32.gmra.mrb[0].mxu0 %v526
        %v603 = vpop.f32.mrb[0].mxu0
        %v604 = vadd.f32 0.0, %v603
        %v605 = vpop.f32.mrb[0].mxu0
        %v606 = vadd.f32 0.0, %v605
        %607 = vmatprep.mubr.f32.mxu0 0.0
        %608 = vmatmul.mubr.f32.gmra.mrb[0].mxu0 %v529
        %v609 = vpop.f32.mrb[0].mxu0
        %v610 = vadd.f32 0.0, %v609
        %v611 = vpop.f32.mrb[0].mxu0
        %v612 = vadd.f32 0.0, %v611
        %613 = vmatprep.mubr.f32.mxu0 0.0
        %614 = vmatmul.mubr.f32.gmra.mrb[0].mxu0 %v532
        %v615 = vpop.f32.mrb[0].mxu0
        %v616 = vadd.f32 0.0, %v615
        %v617 = vpop.f32.mrb[0].mxu0
        %v618 = vadd.f32 0.0, %v617
        %619 = vmatprep.mubr.f32.mxu0 0.0
        %620 = vmatmul.mubr.f32.gmra.mrb[0].mxu0 %v535
        %v621 = vpop.f32.mrb[0].mxu0
        %v622 = vadd.f32 0.0, %v621
        %v623 = vpop.f32.mrb[0].mxu0
        %v624 = vadd.f32 0.0, %v623
        %625 = vdwg.mxu0
        %v626 = vadd.f32 %v506, %v604
        %v627 = vadd.f32 %v510, %v606
        %v628 = vadd.f32 %v506, %v610
        %v629 = vadd.f32 %v510, %v612
        %v630 = vadd.f32 %v506, %v616
        %v631 = vadd.f32 %v510, %v618
        %v632 = vadd.f32 %v506, %v622
        %v633 = vadd.f32 %v510, %v624
        %v634 = vld [vmem:[#allocation2 + $0x1] sm:$0xff]
        %v635 = vld [vmem:[#allocation2 + $0x9] sm:$0xff]
        %v636 = vld [vmem:[#allocation2 + $0x11] sm:$0xff]
        %v637 = vld [vmem:[#allocation2 + $0x19] sm:$0xf]
        %s638 = scalar_lea.vmem %s1, 64
        %v639 = vld [vmem:[%s638] sm:$0xff]
        %v640 = vld [vmem:[%s638 + $0x8] sm:$0xff]
        %v641 = vld [vmem:[%s638 + $0x10] sm:$0xff]
        %v642 = vld [vmem:[%s638 + $0x18] sm:$0xff]
        %v643 = vld [vmem:[%s638 + $0x20] sm:$0xff]
        %v644 = vld [vmem:[%s638 + $0x28] sm:$0xff]
        %v645 = vld [vmem:[%s638 + $0x30] sm:$0xff]
        %v646 = vld [vmem:[%s638 + $0x38] sm:$0xff]
        %v648 = vsel %vm496, %v634, 0
        %v651 = vsel %vm496, %v635, 0
        %v654 = vsel %vm496, %v636, 0
        %v657 = vsel %vm496, %v637, 0
        %659 = vmatprep.subr.mxu0 %v640
        %660 = vmatpush1.msra.mxu0 %v639
        %661 = vmatprep.subr.mxu0 %v642
        %662 = vmatpush1.msra.mxu0 %v641
        %663 = vmatprep.subr.mxu0 %v644
        %664 = vmatpush1.msra.mxu0 %v643
        %665 = vmatprep.subr.mxu0 %v646
        %666 = vmatpush1.msra.mxu0 %v645
        %667 = vmatprep.subr.mxu0 0.0
        %668 = vmatpush1.msra.mxu0 0.0
        %669 = vmatprep.subr.mxu0 0.0
        %670 = vmatpush1.msra.mxu0 0.0
        %671 = vmatprep.subr.mxu0 0.0
        %672 = vmatpush1.msra.mxu0 0.0
        %673 = vmatprep.subr.mxu0 0.0
        %674 = vmatpush1.msra.mxu0 0.0
        %675 = vmatprep.subr.mxu0 0.0
        %676 = vmatpush1.msra.mxu0 0.0
        %677 = vmatprep.subr.mxu0 0.0
        %678 = vmatpush1.msra.mxu0 0.0
        %679 = vmatprep.subr.mxu0 0.0
        %680 = vmatpush1.msra.mxu0 0.0
        %681 = vmatprep.subr.mxu0 0.0
        %682 = vmatpush1.msra.mxu0 0.0
        %683 = vmatprep.subr.mxu0 0.0
        %684 = vmatpush1.msra.mxu0 0.0
        %685 = vmatprep.subr.mxu0 0.0
        %686 = vmatpush1.msra.mxu0 0.0
        %687 = vmatprep.subr.mxu0 0.0
        %688 = vmatpush1.msra.mxu0 0.0
        %689 = vmatprep.subr.mxu0 0.0
        %690 = vmatpush1.msra.mxu0 0.0
        %691 = vmatprep.subr.mxu0 0.0
        %692 = vmatpush1.msra.mxu0 0.0
        %693 = vmatprep.subr.mxu0 0.0
        %694 = vmatpush1.msra.mxu0 0.0
        %695 = vmatprep.subr.mxu0 0.0
        %696 = vmatpush1.msra.mxu0 0.0
        %697 = vmatprep.subr.mxu0 0.0
        %698 = vmatpush1.msra.mxu0 0.0
        %699 = vmatprep.subr.mxu0 0.0
        %700 = vmatpush1.msra.mxu0 0.0
        %701 = vmatprep.subr.mxu0 0.0
        %702 = vmatpush1.msra.mxu0 0.0
        %703 = vmatprep.subr.mxu0 0.0
        %704 = vmatpush1.msra.mxu0 0.0
        %705 = vmatprep.subr.mxu0 0.0
        %706 = vmatpush1.msra.mxu0 0.0
        %707 = vmatprep.subr.mxu0 0.0
        %708 = vmatpush1.msra.mxu0 0.0
        %709 = vmatprep.subr.mxu0 0.0
        %710 = vmatpush1.msra.mxu0 0.0
        %711 = vmatprep.subr.mxu0 0.0
        %712 = vmatpush1.msra.mxu0 0.0
        %713 = vmatprep.subr.mxu0 0.0
        %714 = vmatpush1.msra.mxu0 0.0
        %715 = vmatprep.subr.mxu0 0.0
        %716 = vmatpush1.msra.mxu0 0.0
        %717 = vmatprep.subr.mxu0 0.0
        %718 = vmatpush1.msra.mxu0 0.0
        %719 = vmatprep.subr.mxu0 0.0
        %720 = vmatpush1.msra.mxu0 0.0
        %721 = vmatprep.subr.mxu0 0.0
        %722 = vmatpush1.msra.mxu0 0.0
        %723 = vmatprep.mubr.f32.mxu0 0.0
        %724 = vmatmul.mubr.f32.gmra.mrb[0].mxu0 %v648
        %v725 = vpop.f32.mrb[0].mxu0
        %v726 = vadd.f32 0.0, %v725
        %v727 = vpop.f32.mrb[0].mxu0
        %v728 = vadd.f32 0.0, %v727
        %729 = vmatprep.mubr.f32.mxu0 0.0
        %730 = vmatmul.mubr.f32.gmra.mrb[0].mxu0 %v651
        %v731 = vpop.f32.mrb[0].mxu0
        %v732 = vadd.f32 0.0, %v731
        %v733 = vpop.f32.mrb[0].mxu0
        %v734 = vadd.f32 0.0, %v733
        %735 = vmatprep.mubr.f32.mxu0 0.0
        %736 = vmatmul.mubr.f32.gmra.mrb[0].mxu0 %v654
        %v737 = vpop.f32.mrb[0].mxu0
        %v738 = vadd.f32 0.0, %v737
        %v739 = vpop.f32.mrb[0].mxu0
        %v740 = vadd.f32 0.0, %v739
        %741 = vmatprep.mubr.f32.mxu0 0.0
        %742 = vmatmul.mubr.f32.gmra.mrb[0].mxu0 %v657
        %v743 = vpop.f32.mrb[0].mxu0
        %v744 = vadd.f32 0.0, %v743
        %v745 = vpop.f32.mrb[0].mxu0
        %v746 = vadd.f32 0.0, %v745
        %747 = vdwg.mxu0
        %v748 = vadd.f32 %v626, %v726
        %v749 = vadd.f32 %v627, %v728
        %v750 = vadd.f32 %v628, %v732
        %v751 = vadd.f32 %v629, %v734
        %v752 = vadd.f32 %v630, %v738
        %v753 = vadd.f32 %v631, %v740
        %v754 = vadd.f32 %v632, %v744
        %v755 = vadd.f32 %v633, %v746
        %v756 = vld [vmem:[#allocation2 + $0x2] sm:$0xff]
        %v757 = vld [vmem:[#allocation2 + $0xa] sm:$0xff]
        %v758 = vld [vmem:[#allocation2 + $0x12] sm:$0xff]
        %v759 = vld [vmem:[#allocation2 + $0x1a] sm:$0xf]
        %s760 = scalar_lea.vmem %s1, 128
        %v761 = vld [vmem:[%s760] sm:$0xff]
        %v762 = vld [vmem:[%s760 + $0x8] sm:$0xff]
        %v763 = vld [vmem:[%s760 + $0x10] sm:$0xff]
        %v764 = vld [vmem:[%s760 + $0x18] sm:$0xff]
        %v765 = vld [vmem:[%s760 + $0x20] sm:$0xff]
        %v766 = vld [vmem:[%s760 + $0x28] sm:$0xff]
        %v767 = vld [vmem:[%s760 + $0x30] sm:$0xff]
        %v768 = vld [vmem:[%s760 + $0x38] sm:$0xff]
        %v770 = vsel %vm496, %v756, 0
        %v773 = vsel %vm496, %v757, 0
        %v776 = vsel %vm496, %v758, 0
        %v779 = vsel %vm496, %v759, 0
        %781 = vmatprep.subr.mxu0 %v762
        %782 = vmatpush1.msra.mxu0 %v761
        %783 = vmatprep.subr.mxu0 %v764
        %784 = vmatpush1.msra.mxu0 %v763
        %785 = vmatprep.subr.mxu0 %v766
        %786 = vmatpush1.msra.mxu0 %v765
        %787 = vmatprep.subr.mxu0 %v768
        %788 = vmatpush1.msra.mxu0 %v767
        %789 = vmatprep.subr.mxu0 0.0
        %790 = vmatpush1.msra.mxu0 0.0
        %791 = vmatprep.subr.mxu0 0.0
        %792 = vmatpush1.msra.mxu0 0.0
        %793 = vmatprep.subr.mxu0 0.0
        %794 = vmatpush1.msra.mxu0 0.0
        %795 = vmatprep.subr.mxu0 0.0
        %796 = vmatpush1.msra.mxu0 0.0
        %797 = vmatprep.subr.mxu0 0.0
        %798 = vmatpush1.msra.mxu0 0.0
        %799 = vmatprep.subr.mxu0 0.0
        %800 = vmatpush1.msra.mxu0 0.0
        %801 = vmatprep.subr.mxu0 0.0
        %802 = vmatpush1.msra.mxu0 0.0
        %803 = vmatprep.subr.mxu0 0.0
        %804 = vmatpush1.msra.mxu0 0.0
        %805 = vmatprep.subr.mxu0 0.0
        %806 = vmatpush1.msra.mxu0 0.0
        %807 = vmatprep.subr.mxu0 0.0
        %808 = vmatpush1.msra.mxu0 0.0
        %809 = vmatprep.subr.mxu0 0.0
        %810 = vmatpush1.msra.mxu0 0.0
        %811 = vmatprep.subr.mxu0 0.0
        %812 = vmatpush1.msra.mxu0 0.0
        %813 = vmatprep.subr.mxu0 0.0
        %814 = vmatpush1.msra.mxu0 0.0
        %815 = vmatprep.subr.mxu0 0.0
        %816 = vmatpush1.msra.mxu0 0.0
        %817 = vmatprep.subr.mxu0 0.0
        %818 = vmatpush1.msra.mxu0 0.0
        %819 = vmatprep.subr.mxu0 0.0
        %820 = vmatpush1.msra.mxu0 0.0
        %821 = vmatprep.subr.mxu0 0.0
        %822 = vmatpush1.msra.mxu0 0.0
        %823 = vmatprep.subr.mxu0 0.0
        %824 = vmatpush1.msra.mxu0 0.0
        %825 = vmatprep.subr.mxu0 0.0
        %826 = vmatpush1.msra.mxu0 0.0
        %827 = vmatprep.subr.mxu0 0.0
        %828 = vmatpush1.msra.mxu0 0.0
        %829 = vmatprep.subr.mxu0 0.0
        %830 = vmatpush1.msra.mxu0 0.0
        %831 = vmatprep.subr.mxu0 0.0
        %832 = vmatpush1.msra.mxu0 0.0
        %833 = vmatprep.subr.mxu0 0.0
        %834 = vmatpush1.msra.mxu0 0.0
        %835 = vmatprep.subr.mxu0 0.0
        %836 = vmatpush1.msra.mxu0 0.0
        %837 = vmatprep.subr.mxu0 0.0
        %838 = vmatpush1.msra.mxu0 0.0
        %839 = vmatprep.subr.mxu0 0.0
        %840 = vmatpush1.msra.mxu0 0.0
        %841 = vmatprep.subr.mxu0 0.0
        %842 = vmatpush1.msra.mxu0 0.0
        %843 = vmatprep.subr.mxu0 0.0
        %844 = vmatpush1.msra.mxu0 0.0
        %845 = vmatprep.mubr.f32.mxu0 0.0
        %846 = vmatmul.mubr.f32.gmra.mrb[0].mxu0 %v770
        %v847 = vpop.f32.mrb[0].mxu0
        %v848 = vadd.f32 0.0, %v847
        %v849 = vpop.f32.mrb[0].mxu0
        %v850 = vadd.f32 0.0, %v849
        %851 = vmatprep.mubr.f32.mxu0 0.0
        %852 = vmatmul.mubr.f32.gmra.mrb[0].mxu0 %v773
        %v853 = vpop.f32.mrb[0].mxu0
        %v854 = vadd.f32 0.0, %v853
        %v855 = vpop.f32.mrb[0].mxu0
        %v856 = vadd.f32 0.0, %v855
        %857 = vmatprep.mubr.f32.mxu0 0.0
        %858 = vmatmul.mubr.f32.gmra.mrb[0].mxu0 %v776
        %v859 = vpop.f32.mrb[0].mxu0
        %v860 = vadd.f32 0.0, %v859
        %v861 = vpop.f32.mrb[0].mxu0
        %v862 = vadd.f32 0.0, %v861
        %863 = vmatprep.mubr.f32.mxu0 0.0
        %864 = vmatmul.mubr.f32.gmra.mrb[0].mxu0 %v779
        %v865 = vpop.f32.mrb[0].mxu0
        %v866 = vadd.f32 0.0, %v865
        %v867 = vpop.f32.mrb[0].mxu0
        %v868 = vadd.f32 0.0, %v867
        %869 = vdwg.mxu0
        %v870 = vadd.f32 %v748, %v848
        %v871 = vadd.f32 %v749, %v850
        %v872 = vadd.f32 %v750, %v854
        %v873 = vadd.f32 %v751, %v856
        %v874 = vadd.f32 %v752, %v860
        %v875 = vadd.f32 %v753, %v862
        %v876 = vadd.f32 %v754, %v866
        %v877 = vadd.f32 %v755, %v868
        %v878 = vld [vmem:[#allocation2 + $0x3] sm:$0xff]
        %v879 = vld [vmem:[#allocation2 + $0xb] sm:$0xff]
        %v880 = vld [vmem:[#allocation2 + $0x13] sm:$0xff]
        %v881 = vld [vmem:[#allocation2 + $0x1b] sm:$0xf]
        %s882 = scalar_lea.vmem %s1, 192
        %v883 = vld [vmem:[%s882] sm:$0xff]
        %v884 = vld [vmem:[%s882 + $0x8] sm:$0xff]
        %v885 = vld [vmem:[%s882 + $0x10] sm:$0xff]
        %v886 = vld [vmem:[%s882 + $0x18] sm:$0xff]
        %v887 = vld [vmem:[%s882 + $0x20] sm:$0xff]
        %v888 = vld [vmem:[%s882 + $0x28] sm:$0xff]
        %v889 = vld [vmem:[%s882 + $0x30] sm:$0xff]
        %v890 = vld [vmem:[%s882 + $0x38] sm:$0xff]
        %v892 = vsel %vm496, %v878, 0
        %v895 = vsel %vm496, %v879, 0
        %v898 = vsel %vm496, %v880, 0
        %v901 = vsel %vm496, %v881, 0
        %903 = vmatprep.subr.mxu0 %v884
        %904 = vmatpush1.msra.mxu0 %v883
        %905 = vmatprep.subr.mxu0 %v886
        %906 = vmatpush1.msra.mxu0 %v885
        %907 = vmatprep.subr.mxu0 %v888
        %908 = vmatpush1.msra.mxu0 %v887
        %909 = vmatprep.subr.mxu0 %v890
        %910 = vmatpush1.msra.mxu0 %v889
        %911 = vmatprep.subr.mxu0 0.0
        %912 = vmatpush1.msra.mxu0 0.0
        %913 = vmatprep.subr.mxu0 0.0
        %914 = vmatpush1.msra.mxu0 0.0
        %915 = vmatprep.subr.mxu0 0.0
        %916 = vmatpush1.msra.mxu0 0.0
        %917 = vmatprep.subr.mxu0 0.0
        %918 = vmatpush1.msra.mxu0 0.0
        %919 = vmatprep.subr.mxu0 0.0
        %920 = vmatpush1.msra.mxu0 0.0
        %921 = vmatprep.subr.mxu0 0.0
        %922 = vmatpush1.msra.mxu0 0.0
        %923 = vmatprep.subr.mxu0 0.0
        %924 = vmatpush1.msra.mxu0 0.0
        %925 = vmatprep.subr.mxu0 0.0
        %926 = vmatpush1.msra.mxu0 0.0
        %927 = vmatprep.subr.mxu0 0.0
        %928 = vmatpush1.msra.mxu0 0.0
        %929 = vmatprep.subr.mxu0 0.0
        %930 = vmatpush1.msra.mxu0 0.0
        %931 = vmatprep.subr.mxu0 0.0
        %932 = vmatpush1.msra.mxu0 0.0
        %933 = vmatprep.subr.mxu0 0.0
        %934 = vmatpush1.msra.mxu0 0.0
        %935 = vmatprep.subr.mxu0 0.0
        %936 = vmatpush1.msra.mxu0 0.0
        %937 = vmatprep.subr.mxu0 0.0
        %938 = vmatpush1.msra.mxu0 0.0
        %939 = vmatprep.subr.mxu0 0.0
        %940 = vmatpush1.msra.mxu0 0.0
        %941 = vmatprep.subr.mxu0 0.0
        %942 = vmatpush1.msra.mxu0 0.0
        %943 = vmatprep.subr.mxu0 0.0
        %944 = vmatpush1.msra.mxu0 0.0
        %945 = vmatprep.subr.mxu0 0.0
        %946 = vmatpush1.msra.mxu0 0.0
        %947 = vmatprep.subr.mxu0 0.0
        %948 = vmatpush1.msra.mxu0 0.0
        %949 = vmatprep.subr.mxu0 0.0
        %950 = vmatpush1.msra.mxu0 0.0
        %951 = vmatprep.subr.mxu0 0.0
        %952 = vmatpush1.msra.mxu0 0.0
        %953 = vmatprep.subr.mxu0 0.0
        %954 = vmatpush1.msra.mxu0 0.0
        %955 = vmatprep.subr.mxu0 0.0
        %956 = vmatpush1.msra.mxu0 0.0
        %957 = vmatprep.subr.mxu0 0.0
        %958 = vmatpush1.msra.mxu0 0.0
        %959 = vmatprep.subr.mxu0 0.0
        %960 = vmatpush1.msra.mxu0 0.0
        %961 = vmatprep.subr.mxu0 0.0
        %962 = vmatpush1.msra.mxu0 0.0
        %963 = vmatprep.subr.mxu0 0.0
        %964 = vmatpush1.msra.mxu0 0.0
        %965 = vmatprep.subr.mxu0 0.0
        %966 = vmatpush1.msra.mxu0 0.0
        %967 = vmatprep.mubr.f32.mxu0 0.0
        %968 = vmatmul.mubr.f32.gmra.mrb[0].mxu0 %v892
        %v969 = vpop.f32.mrb[0].mxu0
        %v970 = vadd.f32 0.0, %v969
        %v971 = vpop.f32.mrb[0].mxu0
        %v972 = vadd.f32 0.0, %v971
        %973 = vmatprep.mubr.f32.mxu0 0.0
        %974 = vmatmul.mubr.f32.gmra.mrb[0].mxu0 %v895
        %v975 = vpop.f32.mrb[0].mxu0
        %v976 = vadd.f32 0.0, %v975
        %v977 = vpop.f32.mrb[0].mxu0
        %v978 = vadd.f32 0.0, %v977
        %979 = vmatprep.mubr.f32.mxu0 0.0
        %980 = vmatmul.mubr.f32.gmra.mrb[0].mxu0 %v898
        %v981 = vpop.f32.mrb[0].mxu0
        %v982 = vadd.f32 0.0, %v981
        %v983 = vpop.f32.mrb[0].mxu0
        %v984 = vadd.f32 0.0, %v983
        %985 = vmatprep.mubr.f32.mxu0 0.0
        %986 = vmatmul.mubr.f32.gmra.mrb[0].mxu0 %v901
        %v987 = vpop.f32.mrb[0].mxu0
        %v988 = vadd.f32 0.0, %v987
        %v989 = vpop.f32.mrb[0].mxu0
        %v990 = vadd.f32 0.0, %v989
        %991 = vdwg.mxu0
        %v992 = vadd.f32 %v870, %v970
        %v993 = vadd.f32 %v871, %v972
        %v994 = vadd.f32 %v872, %v976
        %v995 = vadd.f32 %v873, %v978
        %v996 = vadd.f32 %v874, %v982
        %v997 = vadd.f32 %v875, %v984
        %v998 = vadd.f32 %v876, %v988
        %v999 = vadd.f32 %v877, %v990
        %v1000 = vld [vmem:[#allocation2 + $0x4] sm:$0xff]
        %v1001 = vld [vmem:[#allocation2 + $0xc] sm:$0xff]
        %v1002 = vld [vmem:[#allocation2 + $0x14] sm:$0xff]
        %v1003 = vld [vmem:[#allocation2 + $0x1c] sm:$0xf]
        %s1004 = scalar_lea.vmem %s1, 256
        %v1005 = vld [vmem:[%s1004] sm:$0xff]
        %v1006 = vld [vmem:[%s1004 + $0x8] sm:$0xff]
        %v1007 = vld [vmem:[%s1004 + $0x10] sm:$0xff]
        %v1008 = vld [vmem:[%s1004 + $0x18] sm:$0xff]
        %v1009 = vld [vmem:[%s1004 + $0x20] sm:$0xff]
        %v1010 = vld [vmem:[%s1004 + $0x28] sm:$0xff]
        %v1011 = vld [vmem:[%s1004 + $0x30] sm:$0xff]
        %v1012 = vld [vmem:[%s1004 + $0x38] sm:$0xff]
        %v1014 = vsel %vm496, %v1000, 0
        %v1017 = vsel %vm496, %v1001, 0
        %v1020 = vsel %vm496, %v1002, 0
        %v1023 = vsel %vm496, %v1003, 0
        %1025 = vmatprep.subr.mxu0 %v1006
        %1026 = vmatpush1.msra.mxu0 %v1005
        %1027 = vmatprep.subr.mxu0 %v1008
        %1028 = vmatpush1.msra.mxu0 %v1007
        %1029 = vmatprep.subr.mxu0 %v1010
        %1030 = vmatpush1.msra.mxu0 %v1009
        %1031 = vmatprep.subr.mxu0 %v1012
        %1032 = vmatpush1.msra.mxu0 %v1011
        %1033 = vmatprep.subr.mxu0 0.0
        %1034 = vmatpush1.msra.mxu0 0.0
        %1035 = vmatprep.subr.mxu0 0.0
        %1036 = vmatpush1.msra.mxu0 0.0
        %1037 = vmatprep.subr.mxu0 0.0
        %1038 = vmatpush1.msra.mxu0 0.0
        %1039 = vmatprep.subr.mxu0 0.0
        %1040 = vmatpush1.msra.mxu0 0.0
        %1041 = vmatprep.subr.mxu0 0.0
        %1042 = vmatpush1.msra.mxu0 0.0
        %1043 = vmatprep.subr.mxu0 0.0
        %1044 = vmatpush1.msra.mxu0 0.0
        %1045 = vmatprep.subr.mxu0 0.0
        %1046 = vmatpush1.msra.mxu0 0.0
        %1047 = vmatprep.subr.mxu0 0.0
        %1048 = vmatpush1.msra.mxu0 0.0
        %1049 = vmatprep.subr.mxu0 0.0
        %1050 = vmatpush1.msra.mxu0 0.0
        %1051 = vmatprep.subr.mxu0 0.0
        %1052 = vmatpush1.msra.mxu0 0.0
        %1053 = vmatprep.subr.mxu0 0.0
        %1054 = vmatpush1.msra.mxu0 0.0
        %1055 = vmatprep.subr.mxu0 0.0
        %1056 = vmatpush1.msra.mxu0 0.0
        %1057 = vmatprep.subr.mxu0 0.0
        %1058 = vmatpush1.msra.mxu0 0.0
        %1059 = vmatprep.subr.mxu0 0.0
        %1060 = vmatpush1.msra.mxu0 0.0
        %1061 = vmatprep.subr.mxu0 0.0
        %1062 = vmatpush1.msra.mxu0 0.0
        %1063 = vmatprep.subr.mxu0 0.0
        %1064 = vmatpush1.msra.mxu0 0.0
        %1065 = vmatprep.subr.mxu0 0.0
        %1066 = vmatpush1.msra.mxu0 0.0
        %1067 = vmatprep.subr.mxu0 0.0
        %1068 = vmatpush1.msra.mxu0 0.0
        %1069 = vmatprep.subr.mxu0 0.0
        %1070 = vmatpush1.msra.mxu0 0.0
        %1071 = vmatprep.subr.mxu0 0.0
        %1072 = vmatpush1.msra.mxu0 0.0
        %1073 = vmatprep.subr.mxu0 0.0
        %1074 = vmatpush1.msra.mxu0 0.0
        %1075 = vmatprep.subr.mxu0 0.0
        %1076 = vmatpush1.msra.mxu0 0.0
        %1077 = vmatprep.subr.mxu0 0.0
        %1078 = vmatpush1.msra.mxu0 0.0
        %1079 = vmatprep.subr.mxu0 0.0
        %1080 = vmatpush1.msra.mxu0 0.0
        %1081 = vmatprep.subr.mxu0 0.0
        %1082 = vmatpush1.msra.mxu0 0.0
        %1083 = vmatprep.subr.mxu0 0.0
        %1084 = vmatpush1.msra.mxu0 0.0
        %1085 = vmatprep.subr.mxu0 0.0
        %1086 = vmatpush1.msra.mxu0 0.0
        %1087 = vmatprep.subr.mxu0 0.0
        %1088 = vmatpush1.msra.mxu0 0.0
        %1089 = vmatprep.mubr.f32.mxu0 0.0
        %1090 = vmatmul.mubr.f32.gmra.mrb[0].mxu0 %v1014
        %v1091 = vpop.f32.mrb[0].mxu0
        %v1092 = vadd.f32 0.0, %v1091
        %v1093 = vpop.f32.mrb[0].mxu0
        %v1094 = vadd.f32 0.0, %v1093
        %1095 = vmatprep.mubr.f32.mxu0 0.0
        %1096 = vmatmul.mubr.f32.gmra.mrb[0].mxu0 %v1017
        %v1097 = vpop.f32.mrb[0].mxu0
        %v1098 = vadd.f32 0.0, %v1097
        %v1099 = vpop.f32.mrb[0].mxu0
        %v1100 = vadd.f32 0.0, %v1099
        %1101 = vmatprep.mubr.f32.mxu0 0.0
        %1102 = vmatmul.mubr.f32.gmra.mrb[0].mxu0 %v1020
        %v1103 = vpop.f32.mrb[0].mxu0
        %v1104 = vadd.f32 0.0, %v1103
        %v1105 = vpop.f32.mrb[0].mxu0
        %v1106 = vadd.f32 0.0, %v1105
        %1107 = vmatprep.mubr.f32.mxu0 0.0
        %1108 = vmatmul.mubr.f32.gmra.mrb[0].mxu0 %v1023
        %v1109 = vpop.f32.mrb[0].mxu0
        %v1110 = vadd.f32 0.0, %v1109
        %v1111 = vpop.f32.mrb[0].mxu0
        %v1112 = vadd.f32 0.0, %v1111
        %1113 = vdwg.mxu0
        %v1114 = vadd.f32 %v992, %v1092
        %v1115 = vadd.f32 %v993, %v1094
        %v1116 = vadd.f32 %v994, %v1098
        %v1117 = vadd.f32 %v995, %v1100
        %v1118 = vadd.f32 %v996, %v1104
        %v1119 = vadd.f32 %v997, %v1106
        %v1120 = vadd.f32 %v998, %v1110
        %v1121 = vadd.f32 %v999, %v1112
        %v1122 = vmax.f32 %v1114, 0.0
        %v1123 = vmax.f32 %v1115, 0.0
        %v1124 = vmax.f32 %v1116, 0.0
        %v1125 = vmax.f32 %v1117, 0.0
        %v1126 = vmax.f32 %v1118, 0.0
        %v1127 = vmax.f32 %v1119, 0.0
        %v1128 = vmax.f32 %v1120, 0.0
        %v1129 = vmax.f32 %v1121, 0.0
        %v1130 = vld [vmem:[%s3] sm:$0xff]
        %v1131 = vld [vmem:[%s3 + $0x8] sm:$0x3f]
        %vm1132 = vcmask 228352
        %v1134 = vsel %vm1132, %v1130, 0
        %v1137 = vsel %vm1132, %v1131, 0
        %vm1139 = vcmask 1043456
        %v1141 = vsel %vm1139, %v1128, 0
        %v1144 = vsel %vm1139, %v1129, 0
        %1146 = vmatprep.subr.mxu0 %v1123
        %1147 = vmatpush1.msra.mxu0 %v1122
        %1148 = vmatprep.subr.mxu0 %v1125
        %1149 = vmatpush1.msra.mxu0 %v1124
        %1150 = vmatprep.subr.mxu0 %v1127
        %1151 = vmatpush1.msra.mxu0 %v1126
        %1152 = vmatprep.subr.mxu0 %v1144
        %1153 = vmatpush1.msra.mxu0 %v1141
        %1154 = vmatprep.subr.mxu0 0.0
        %1155 = vmatpush1.msra.mxu0 0.0
        %1156 = vmatprep.subr.mxu0 0.0
        %1157 = vmatpush1.msra.mxu0 0.0
        %1158 = vmatprep.subr.mxu0 0.0
        %1159 = vmatpush1.msra.mxu0 0.0
        %1160 = vmatprep.subr.mxu0 0.0
        %1161 = vmatpush1.msra.mxu0 0.0
        %1162 = vmatprep.subr.mxu0 0.0
        %1163 = vmatpush1.msra.mxu0 0.0
        %1164 = vmatprep.subr.mxu0 0.0
        %1165 = vmatpush1.msra.mxu0 0.0
        %1166 = vmatprep.subr.mxu0 0.0
        %1167 = vmatpush1.msra.mxu0 0.0
        %1168 = vmatprep.subr.mxu0 0.0
        %1169 = vmatpush1.msra.mxu0 0.0
        %1170 = vmatprep.subr.mxu0 0.0
        %1171 = vmatpush1.msra.mxu0 0.0
        %1172 = vmatprep.subr.mxu0 0.0
        %1173 = vmatpush1.msra.mxu0 0.0
        %1174 = vmatprep.subr.mxu0 0.0
        %1175 = vmatpush1.msra.mxu0 0.0
        %1176 = vmatprep.subr.mxu0 0.0
        %1177 = vmatpush1.msra.mxu0 0.0
        %1178 = vmatprep.subr.mxu0 0.0
        %1179 = vmatpush1.msra.mxu0 0.0
        %1180 = vmatprep.subr.mxu0 0.0
        %1181 = vmatpush1.msra.mxu0 0.0
        %1182 = vmatprep.subr.mxu0 0.0
        %1183 = vmatpush1.msra.mxu0 0.0
        %1184 = vmatprep.subr.mxu0 0.0
        %1185 = vmatpush1.msra.mxu0 0.0
        %1186 = vmatprep.subr.mxu0 0.0
        %1187 = vmatpush1.msra.mxu0 0.0
        %1188 = vmatprep.subr.mxu0 0.0
        %1189 = vmatpush1.msra.mxu0 0.0
        %1190 = vmatprep.subr.mxu0 0.0
        %1191 = vmatpush1.msra.mxu0 0.0
        %1192 = vmatprep.subr.mxu0 0.0
        %1193 = vmatpush1.msra.mxu0 0.0
        %1194 = vmatprep.subr.mxu0 0.0
        %1195 = vmatpush1.msra.mxu0 0.0
        %1196 = vmatprep.subr.mxu0 0.0
        %1197 = vmatpush1.msra.mxu0 0.0
        %1198 = vmatprep.subr.mxu0 0.0
        %1199 = vmatpush1.msra.mxu0 0.0
        %1200 = vmatprep.subr.mxu0 0.0
        %1201 = vmatpush1.msra.mxu0 0.0
        %1202 = vmatprep.subr.mxu0 0.0
        %1203 = vmatpush1.msra.mxu0 0.0
        %1204 = vmatprep.subr.mxu0 0.0
        %1205 = vmatpush1.msra.mxu0 0.0
        %1206 = vmatprep.subr.mxu0 0.0
        %1207 = vmatpush1.msra.mxu0 0.0
        %1208 = vmatprep.subr.mxu0 0.0
        %1209 = vmatpush1.msra.mxu0 0.0
        %1210 = vmatprep.mubr.f32.mxu0 0.0
        %1211 = vmatmul.mubr.f32.gmra.mrb[0].mxu0 %v1134
        %v1212 = vpop.f32.mrb[0].mxu0
        %v1213 = vadd.f32 0.0, %v1212
        %v1214 = vpop.f32.mrb[0].mxu0
        %v1215 = vadd.f32 0.0, %v1214
        %1216 = vmatprep.mubr.f32.mxu0 0.0
        %1217 = vmatmul.mubr.f32.gmra.mrb[0].mxu0 %v1137
        %v1218 = vpop.f32.mrb[0].mxu0
        %v1219 = vadd.f32 0.0, %v1218
        %v1220 = vpop.f32.mrb[0].mxu0
        %v1221 = vadd.f32 0.0, %v1220
        %1222 = vdwg.mxu0
        %v1223 = vld [vmem:[%s4] sm:$0xff]
        %v1224 = vld [vmem:[%s4 + $0x8] sm:$0xff]
        %v1225 = vld [vmem:[%s4 + $0x10] sm:$0xff]
        %v1226 = vld [vmem:[%s4 + $0x18] sm:$0xff]
        %v1227 = vld [vmem:[%s4 + $0x20] sm:$0xff]
        %v1228 = vld [vmem:[%s4 + $0x28] sm:$0xff]
        %v1229 = vld [vmem:[%s4 + $0x30] sm:$0xff]
        %v1230 = vld [vmem:[%s4 + $0x38] sm:$0xff]
        %v1231 = vld [vmem:[%s4 + $0x40] sm:$0xff]
        %v1232 = vld [vmem:[%s4 + $0x48] sm:$0xff]
        %v1233 = vld [vmem:[%s4 + $0x50] sm:$0xff]
        %v1234 = vld [vmem:[%s4 + $0x58] sm:$0xff]
        %v1235 = vld [vmem:[%s4 + $0x60] sm:$0xff]
        %v1236 = vld [vmem:[%s4 + $0x68] sm:$0xff]
        %v1237 = vld [vmem:[%s4 + $0x70] sm:$0xff]
        %v1238 = vld [vmem:[%s4 + $0x78] sm:$0xff]
        %v1239 = vld [vmem:[%s4 + $0x80] sm:$0xff]
        %v1240 = vld [vmem:[%s4 + $0x88] sm:$0xff]
        %v1241 = vld [vmem:[%s4 + $0x90] sm:$0xff]
        %v1242 = vld [vmem:[%s4 + $0x98] sm:$0xff]
        %v1243 = vld [vmem:[%s4 + $0xa0] sm:$0xff]
        %vm1244 = vcmask 326656
        %v1246 = vsel %vm1244, %v1215, 0
        %v1249 = vsel %vm1244, %v1221, 0
        %1251 = vmatprep.subr.mxu0 0.0
        %1252 = vmatpush1.msra.mxu0 %v1223
        %1253 = vmatprep.subr.mxu0 0.0
        %1254 = vmatpush1.msra.mxu0 %v1224
        %1255 = vmatprep.subr.mxu0 0.0
        %1256 = vmatpush1.msra.mxu0 %v1225
        %1257 = vmatprep.subr.mxu0 0.0
        %1258 = vmatpush1.msra.mxu0 %v1226
        %1259 = vmatprep.subr.mxu0 0.0
        %1260 = vmatpush1.msra.mxu0 %v1227
        %1261 = vmatprep.subr.mxu0 0.0
        %1262 = vmatpush1.msra.mxu0 %v1228
        %1263 = vmatprep.subr.mxu0 0.0
        %1264 = vmatpush1.msra.mxu0 %v1229
        %1265 = vmatprep.subr.mxu0 0.0
        %1266 = vmatpush1.msra.mxu0 %v1230
        %1267 = vmatprep.subr.mxu0 0.0
        %1268 = vmatpush1.msra.mxu0 %v1231
        %1269 = vmatprep.subr.mxu0 0.0
        %1270 = vmatpush1.msra.mxu0 %v1232
        %1271 = vmatprep.subr.mxu0 0.0
        %1272 = vmatpush1.msra.mxu0 %v1233
        %1273 = vmatprep.subr.mxu0 0.0
        %1274 = vmatpush1.msra.mxu0 %v1234
        %1275 = vmatprep.subr.mxu0 0.0
        %1276 = vmatpush1.msra.mxu0 %v1235
        %1277 = vmatprep.subr.mxu0 0.0
        %1278 = vmatpush1.msra.mxu0 %v1236
        %1279 = vmatprep.subr.mxu0 0.0
        %1280 = vmatpush1.msra.mxu0 %v1237
        %1281 = vmatprep.subr.mxu0 0.0
        %1282 = vmatpush1.msra.mxu0 %v1238
        %1283 = vmatprep.subr.mxu0 0.0
        %1284 = vmatpush1.msra.mxu0 %v1239
        %1285 = vmatprep.subr.mxu0 0.0
        %1286 = vmatpush1.msra.mxu0 %v1240
        %1287 = vmatprep.subr.mxu0 0.0
        %1288 = vmatpush1.msra.mxu0 %v1241
        %1289 = vmatprep.subr.mxu0 0.0
        %1290 = vmatpush1.msra.mxu0 %v1242
        %1291 = vmatprep.subr.mxu0 0.0
        %1292 = vmatpush1.msra.mxu0 %v1243
        %1293 = vmatprep.subr.mxu0 0.0
        %1294 = vmatpush1.msra.mxu0 0.0
        %1295 = vmatprep.subr.mxu0 0.0
        %1296 = vmatpush1.msra.mxu0 0.0
        %1297 = vmatprep.subr.mxu0 0.0
        %1298 = vmatpush1.msra.mxu0 0.0
        %1299 = vmatprep.subr.mxu0 0.0
        %1300 = vmatpush1.msra.mxu0 0.0
        %1301 = vmatprep.subr.mxu0 0.0
        %1302 = vmatpush1.msra.mxu0 0.0
        %1303 = vmatprep.subr.mxu0 0.0
        %1304 = vmatpush1.msra.mxu0 0.0
        %1305 = vmatprep.subr.mxu0 0.0
        %1306 = vmatpush1.msra.mxu0 0.0
        %1307 = vmatprep.subr.mxu0 0.0
        %1308 = vmatpush1.msra.mxu0 0.0
        %1309 = vmatprep.subr.mxu0 0.0
        %1310 = vmatpush1.msra.mxu0 0.0
        %1311 = vmatprep.subr.mxu0 0.0
        %1312 = vmatpush1.msra.mxu0 0.0
        %1313 = vmatprep.subr.mxu0 0.0
        %1314 = vmatpush1.msra.mxu0 0.0
        %1315 = vmatprep.mubr.f32.mxu0 %v1246
        %1316 = vmatmul.mubr.f32.gmra.mrb[0].mxu0 %v1213
        %v1317 = vpop.f32.mrb[0].mxu0
        %v1318 = vadd.f32 0.0, %v1317
        %v1319 = vpop.f32.mrb[0].mxu0
        %1320 = vmatprep.mubr.f32.mxu0 %v1249
        %1321 = vmatmul.mubr.f32.gmra.mrb[0].mxu0 %v1219
        %v1322 = vpop.f32.mrb[0].mxu0
        %v1323 = vadd.f32 0.0, %v1322
        %v1324 = vpop.f32.mrb[0].mxu0
        %1325 = vdwg.mxu0
        %vm1326 = vcmask 687104
        %1327 = vst.msk [vmem:[#allocation3] sm:$0xff] %vm1326, %v1318
        %vm1328 = vcmask 685056
        %1329 = vst.msk [vmem:[#allocation3 + $0x8] sm:$0x3f] %vm1328, %v1323
        %v1330 = vld [vmem:[%s6] sm:$0x3]
        %v1332 = vlaneseq
        %v1333 = vshrl.u32 %v1332, 7
        %v1334 = vsub.s32 0, %v1333
        %v1335 = vrot.slane %v1330, %v1334
        %v1336 = vlaneseq
        %v1337 = vshrl.u32 %v1336, 7
        %v1338 = vsub.s32 1, %v1337
        %v1339 = vrot.slane %v1330, %v1338
        %v1342 = vld [vmem:[#allocation3] sm:$0xff]
        %v1343 = vld [vmem:[#allocation3 + $0x8] sm:$0x3]
        %v1344 = vld [vmem:[%s5] sm:$0xff]
        %v1345 = vld [vmem:[%s5 + $0x8] sm:$0xff]
        %v1346 = vld [vmem:[%s5 + $0x10] sm:$0xff]
        %v1347 = vld [vmem:[%s5 + $0x18] sm:$0xff]
        %v1348 = vld [vmem:[%s5 + $0x20] sm:$0xff]
        %v1349 = vld [vmem:[%s5 + $0x28] sm:$0xff]
        %v1350 = vld [vmem:[%s5 + $0x30] sm:$0xff]
        %v1351 = vld [vmem:[%s5 + $0x38] sm:$0xff]
        %v1352 = vld [vmem:[%s5 + $0x40] sm:$0xff]
        %v1353 = vld [vmem:[%s5 + $0x48] sm:$0xff]
        %v1354 = vld [vmem:[%s5 + $0x50] sm:$0xff]
        %v1355 = vld [vmem:[%s5 + $0x58] sm:$0xff]
        %v1356 = vld [vmem:[%s5 + $0x60] sm:$0xff]
        %v1357 = vld [vmem:[%s5 + $0x68] sm:$0xff]
        %v1358 = vld [vmem:[%s5 + $0x70] sm:$0xff]
        %v1359 = vld [vmem:[%s5 + $0x78] sm:$0xff]
        %v1360 = vld [vmem:[%s5 + $0x80] sm:$0xff]
        %v1361 = vld [vmem:[%s5 + $0x88] sm:$0xff]
        %v1362 = vld [vmem:[%s5 + $0x90] sm:$0xff]
        %v1363 = vld [vmem:[%s5 + $0x98] sm:$0xff]
        %v1364 = vld [vmem:[%s5 + $0xa0] sm:$0xf]
        %v1365 = vld [vmem:[%s5 + $0xa8] sm:$0xf]
        %v1367 = vsel %vm1326, %v1342, 0
        %v1370 = vsel %vm1326, %v1343, 0
        %v1373 = vsel %vm1139, %v1364, 0
        %v1376 = vsel %vm1139, %v1365, 0
        %1378 = vmatprep.subr.mxu0 %v1345
        %1379 = vmatpush1.msra.mxu0 %v1344
        %1380 = vmatprep.subr.mxu0 %v1347
        %1381 = vmatpush1.msra.mxu0 %v1346
        %1382 = vmatprep.subr.mxu0 %v1349
        %1383 = vmatpush1.msra.mxu0 %v1348
        %1384 = vmatprep.subr.mxu0 %v1351
        %1385 = vmatpush1.msra.mxu0 %v1350
        %1386 = vmatprep.subr.mxu0 %v1353
        %1387 = vmatpush1.msra.mxu0 %v1352
        %1388 = vmatprep.subr.mxu0 %v1355
        %1389 = vmatpush1.msra.mxu0 %v1354
        %1390 = vmatprep.subr.mxu0 %v1357
        %1391 = vmatpush1.msra.mxu0 %v1356
        %1392 = vmatprep.subr.mxu0 %v1359
        %1393 = vmatpush1.msra.mxu0 %v1358
        %1394 = vmatprep.subr.mxu0 %v1361
        %1395 = vmatpush1.msra.mxu0 %v1360
        %1396 = vmatprep.subr.mxu0 %v1363
        %1397 = vmatpush1.msra.mxu0 %v1362
        %1398 = vmatprep.subr.mxu0 %v1376
        %1399 = vmatpush1.msra.mxu0 %v1373
        %1400 = vmatprep.subr.mxu0 0.0
        %1401 = vmatpush1.msra.mxu0 0.0
        %1402 = vmatprep.subr.mxu0 0.0
        %1403 = vmatpush1.msra.mxu0 0.0
        %1404 = vmatprep.subr.mxu0 0.0
        %1405 = vmatpush1.msra.mxu0 0.0
        %1406 = vmatprep.subr.mxu0 0.0
        %1407 = vmatpush1.msra.mxu0 0.0
        %1408 = vmatprep.subr.mxu0 0.0
        %1409 = vmatpush1.msra.mxu0 0.0
        %1410 = vmatprep.subr.mxu0 0.0
        %1411 = vmatpush1.msra.mxu0 0.0
        %1412 = vmatprep.subr.mxu0 0.0
        %1413 = vmatpush1.msra.mxu0 0.0
        %1414 = vmatprep.subr.mxu0 0.0
        %1415 = vmatpush1.msra.mxu0 0.0
        %1416 = vmatprep.subr.mxu0 0.0
        %1417 = vmatpush1.msra.mxu0 0.0
        %1418 = vmatprep.subr.mxu0 0.0
        %1419 = vmatpush1.msra.mxu0 0.0
        %1420 = vmatprep.subr.mxu0 0.0
        %1421 = vmatpush1.msra.mxu0 0.0
        %1422 = vmatprep.subr.mxu0 0.0
        %1423 = vmatpush1.msra.mxu0 0.0
        %1424 = vmatprep.subr.mxu0 0.0
        %1425 = vmatpush1.msra.mxu0 0.0
        %1426 = vmatprep.subr.mxu0 0.0
        %1427 = vmatpush1.msra.mxu0 0.0
        %1428 = vmatprep.subr.mxu0 0.0
        %1429 = vmatpush1.msra.mxu0 0.0
        %1430 = vmatprep.subr.mxu0 0.0
        %1431 = vmatpush1.msra.mxu0 0.0
        %1432 = vmatprep.subr.mxu0 0.0
        %1433 = vmatpush1.msra.mxu0 0.0
        %1434 = vmatprep.subr.mxu0 0.0
        %1435 = vmatpush1.msra.mxu0 0.0
        %1436 = vmatprep.subr.mxu0 0.0
        %1437 = vmatpush1.msra.mxu0 0.0
        %1438 = vmatprep.subr.mxu0 0.0
        %1439 = vmatpush1.msra.mxu0 0.0
        %1440 = vmatprep.subr.mxu0 0.0
        %1441 = vmatpush1.msra.mxu0 0.0
        %1442 = vmatprep.mubr.f32.mxu0 0.0
        %1443 = vmatmul.mubr.f32.gmra.mrb[0].mxu0 %v1367
        %v1444 = vpop.f32.mrb[0].mxu0
        %v1445 = vadd.f32 0.0, %v1444
        %v1446 = vpop.f32.mrb[0].mxu0
        %v1447 = vadd.f32 0.0, %v1446
        %1448 = vmatprep.mubr.f32.mxu0 0.0
        %1449 = vmatmul.mubr.f32.gmra.mrb[0].mxu0 %v1370
        %v1450 = vpop.f32.mrb[0].mxu0
        %v1451 = vadd.f32 0.0, %v1450
        %v1452 = vpop.f32.mrb[0].mxu0
        %v1453 = vadd.f32 0.0, %v1452
        %1454 = vdwg.mxu0
        %v1455 = vadd.f32 %v1335, %v1445
        %v1456 = vadd.f32 %v1339, %v1447
        %v1457 = vadd.f32 %v1335, %v1451
        %v1458 = vadd.f32 %v1339, %v1453
        %v1459 = vld [vmem:[#allocation3 + $0x1] sm:$0xff]
        %v1460 = vld [vmem:[#allocation3 + $0x9] sm:$0x3]
        %s1461 = scalar_lea.vmem %s5, 176
        %v1462 = vld [vmem:[%s1461] sm:$0xff]
        %v1463 = vld [vmem:[%s1461 + $0x8] sm:$0xff]
        %v1464 = vld [vmem:[%s1461 + $0x10] sm:$0xff]
        %v1465 = vld [vmem:[%s1461 + $0x18] sm:$0xff]
        %v1466 = vld [vmem:[%s1461 + $0x20] sm:$0xff]
        %v1467 = vld [vmem:[%s1461 + $0x28] sm:$0xff]
        %v1468 = vld [vmem:[%s1461 + $0x30] sm:$0xff]
        %v1469 = vld [vmem:[%s1461 + $0x38] sm:$0xff]
        %v1470 = vld [vmem:[%s1461 + $0x40] sm:$0xff]
        %v1471 = vld [vmem:[%s1461 + $0x48] sm:$0xff]
        %v1472 = vld [vmem:[%s1461 + $0x50] sm:$0xff]
        %v1473 = vld [vmem:[%s1461 + $0x58] sm:$0xff]
        %v1474 = vld [vmem:[%s1461 + $0x60] sm:$0xff]
        %v1475 = vld [vmem:[%s1461 + $0x68] sm:$0xff]
        %v1476 = vld [vmem:[%s1461 + $0x70] sm:$0xff]
        %v1477 = vld [vmem:[%s1461 + $0x78] sm:$0xff]
        %v1478 = vld [vmem:[%s1461 + $0x80] sm:$0xff]
        %v1479 = vld [vmem:[%s1461 + $0x88] sm:$0xff]
        %v1480 = vld [vmem:[%s1461 + $0x90] sm:$0xff]
        %v1481 = vld [vmem:[%s1461 + $0x98] sm:$0xff]
        %v1482 = vld [vmem:[%s1461 + $0xa0] sm:$0xf]
        %v1483 = vld [vmem:[%s1461 + $0xa8] sm:$0xf]
        %v1485 = vsel %vm1326, %v1459, 0
        %v1488 = vsel %vm1326, %v1460, 0
        %v1491 = vsel %vm1139, %v1482, 0
        %v1494 = vsel %vm1139, %v1483, 0
        %1496 = vmatprep.subr.mxu0 %v1463
        %1497 = vmatpush1.msra.mxu0 %v1462
        %1498 = vmatprep.subr.mxu0 %v1465
        %1499 = vmatpush1.msra.mxu0 %v1464
        %1500 = vmatprep.subr.mxu0 %v1467
        %1501 = vmatpush1.msra.mxu0 %v1466
        %1502 = vmatprep.subr.mxu0 %v1469
        %1503 = vmatpush1.msra.mxu0 %v1468
        %1504 = vmatprep.subr.mxu0 %v1471
        %1505 = vmatpush1.msra.mxu0 %v1470
        %1506 = vmatprep.subr.mxu0 %v1473
        %1507 = vmatpush1.msra.mxu0 %v1472
        %1508 = vmatprep.subr.mxu0 %v1475
        %1509 = vmatpush1.msra.mxu0 %v1474
        %1510 = vmatprep.subr.mxu0 %v1477
        %1511 = vmatpush1.msra.mxu0 %v1476
        %1512 = vmatprep.subr.mxu0 %v1479
        %1513 = vmatpush1.msra.mxu0 %v1478
        %1514 = vmatprep.subr.mxu0 %v1481
        %1515 = vmatpush1.msra.mxu0 %v1480
        %1516 = vmatprep.subr.mxu0 %v1494
        %1517 = vmatpush1.msra.mxu0 %v1491
        %1518 = vmatprep.subr.mxu0 0.0
        %1519 = vmatpush1.msra.mxu0 0.0
        %1520 = vmatprep.subr.mxu0 0.0
        %1521 = vmatpush1.msra.mxu0 0.0
        %1522 = vmatprep.subr.mxu0 0.0
        %1523 = vmatpush1.msra.mxu0 0.0
        %1524 = vmatprep.subr.mxu0 0.0
        %1525 = vmatpush1.msra.mxu0 0.0
        %1526 = vmatprep.subr.mxu0 0.0
        %1527 = vmatpush1.msra.mxu0 0.0
        %1528 = vmatprep.subr.mxu0 0.0
        %1529 = vmatpush1.msra.mxu0 0.0
        %1530 = vmatprep.subr.mxu0 0.0
        %1531 = vmatpush1.msra.mxu0 0.0
        %1532 = vmatprep.subr.mxu0 0.0
        %1533 = vmatpush1.msra.mxu0 0.0
        %1534 = vmatprep.subr.mxu0 0.0
        %1535 = vmatpush1.msra.mxu0 0.0
        %1536 = vmatprep.subr.mxu0 0.0
        %1537 = vmatpush1.msra.mxu0 0.0
        %1538 = vmatprep.subr.mxu0 0.0
        %1539 = vmatpush1.msra.mxu0 0.0
        %1540 = vmatprep.subr.mxu0 0.0
        %1541 = vmatpush1.msra.mxu0 0.0
        %1542 = vmatprep.subr.mxu0 0.0
        %1543 = vmatpush1.msra.mxu0 0.0
        %1544 = vmatprep.subr.mxu0 0.0
        %1545 = vmatpush1.msra.mxu0 0.0
        %1546 = vmatprep.subr.mxu0 0.0
        %1547 = vmatpush1.msra.mxu0 0.0
        %1548 = vmatprep.subr.mxu0 0.0
        %1549 = vmatpush1.msra.mxu0 0.0
        %1550 = vmatprep.subr.mxu0 0.0
        %1551 = vmatpush1.msra.mxu0 0.0
        %1552 = vmatprep.subr.mxu0 0.0
        %1553 = vmatpush1.msra.mxu0 0.0
        %1554 = vmatprep.subr.mxu0 0.0
        %1555 = vmatpush1.msra.mxu0 0.0
        %1556 = vmatprep.subr.mxu0 0.0
        %1557 = vmatpush1.msra.mxu0 0.0
        %1558 = vmatprep.subr.mxu0 0.0
        %1559 = vmatpush1.msra.mxu0 0.0
        %1560 = vmatprep.mubr.f32.mxu0 0.0
        %1561 = vmatmul.mubr.f32.gmra.mrb[0].mxu0 %v1485
        %v1562 = vpop.f32.mrb[0].mxu0
        %v1563 = vadd.f32 0.0, %v1562
        %v1564 = vpop.f32.mrb[0].mxu0
        %v1565 = vadd.f32 0.0, %v1564
        %1566 = vmatprep.mubr.f32.mxu0 0.0
        %1567 = vmatmul.mubr.f32.gmra.mrb[0].mxu0 %v1488
        %v1568 = vpop.f32.mrb[0].mxu0
        %v1569 = vadd.f32 0.0, %v1568
        %v1570 = vpop.f32.mrb[0].mxu0
        %v1571 = vadd.f32 0.0, %v1570
        %1572 = vdwg.mxu0
        %v1573 = vadd.f32 %v1455, %v1563
        %v1574 = vadd.f32 %v1456, %v1565
        %v1575 = vadd.f32 %v1457, %v1569
        %v1576 = vadd.f32 %v1458, %v1571
        %v1577 = vld [vmem:[#allocation3 + $0x2] sm:$0xff]
        %v1578 = vld [vmem:[#allocation3 + $0xa] sm:$0x3]
        %s1579 = scalar_lea.vmem %s5, 352
        %v1580 = vld [vmem:[%s1579] sm:$0xff]
        %v1581 = vld [vmem:[%s1579 + $0x8] sm:$0xff]
        %v1582 = vld [vmem:[%s1579 + $0x10] sm:$0xff]
        %v1583 = vld [vmem:[%s1579 + $0x18] sm:$0xff]
        %v1584 = vld [vmem:[%s1579 + $0x20] sm:$0xff]
        %v1585 = vld [vmem:[%s1579 + $0x28] sm:$0xff]
        %v1586 = vld [vmem:[%s1579 + $0x30] sm:$0xff]
        %v1587 = vld [vmem:[%s1579 + $0x38] sm:$0xff]
        %v1588 = vld [vmem:[%s1579 + $0x40] sm:$0xff]
        %v1589 = vld [vmem:[%s1579 + $0x48] sm:$0xff]
        %v1590 = vld [vmem:[%s1579 + $0x50] sm:$0xff]
        %v1591 = vld [vmem:[%s1579 + $0x58] sm:$0xff]
        %v1592 = vld [vmem:[%s1579 + $0x60] sm:$0xff]
        %v1593 = vld [vmem:[%s1579 + $0x68] sm:$0xff]
        %v1594 = vld [vmem:[%s1579 + $0x70] sm:$0xff]
        %v1595 = vld [vmem:[%s1579 + $0x78] sm:$0xff]
        %v1596 = vld [vmem:[%s1579 + $0x80] sm:$0xff]
        %v1597 = vld [vmem:[%s1579 + $0x88] sm:$0xff]
        %v1598 = vld [vmem:[%s1579 + $0x90] sm:$0xff]
        %v1599 = vld [vmem:[%s1579 + $0x98] sm:$0xff]
        %v1600 = vld [vmem:[%s1579 + $0xa0] sm:$0xf]
        %v1601 = vld [vmem:[%s1579 + $0xa8] sm:$0xf]
        %v1603 = vsel %vm1326, %v1577, 0
        %v1606 = vsel %vm1326, %v1578, 0
        %v1609 = vsel %vm1139, %v1600, 0
        %v1612 = vsel %vm1139, %v1601, 0
        %1614 = vmatprep.subr.mxu0 %v1581
        %1615 = vmatpush1.msra.mxu0 %v1580
        %1616 = vmatprep.subr.mxu0 %v1583
        %1617 = vmatpush1.msra.mxu0 %v1582
        %1618 = vmatprep.subr.mxu0 %v1585
        %1619 = vmatpush1.msra.mxu0 %v1584
        %1620 = vmatprep.subr.mxu0 %v1587
        %1621 = vmatpush1.msra.mxu0 %v1586
        %1622 = vmatprep.subr.mxu0 %v1589
        %1623 = vmatpush1.msra.mxu0 %v1588
        %1624 = vmatprep.subr.mxu0 %v1591
        %1625 = vmatpush1.msra.mxu0 %v1590
        %1626 = vmatprep.subr.mxu0 %v1593
        %1627 = vmatpush1.msra.mxu0 %v1592
        %1628 = vmatprep.subr.mxu0 %v1595
        %1629 = vmatpush1.msra.mxu0 %v1594
        %1630 = vmatprep.subr.mxu0 %v1597
        %1631 = vmatpush1.msra.mxu0 %v1596
        %1632 = vmatprep.subr.mxu0 %v1599
        %1633 = vmatpush1.msra.mxu0 %v1598
        %1634 = vmatprep.subr.mxu0 %v1612
        %1635 = vmatpush1.msra.mxu0 %v1609
        %1636 = vmatprep.subr.mxu0 0.0
        %1637 = vmatpush1.msra.mxu0 0.0
        %1638 = vmatprep.subr.mxu0 0.0
        %1639 = vmatpush1.msra.mxu0 0.0
        %1640 = vmatprep.subr.mxu0 0.0
        %1641 = vmatpush1.msra.mxu0 0.0
        %1642 = vmatprep.subr.mxu0 0.0
        %1643 = vmatpush1.msra.mxu0 0.0
        %1644 = vmatprep.subr.mxu0 0.0
        %1645 = vmatpush1.msra.mxu0 0.0
        %1646 = vmatprep.subr.mxu0 0.0
        %1647 = vmatpush1.msra.mxu0 0.0
        %1648 = vmatprep.subr.mxu0 0.0
        %1649 = vmatpush1.msra.mxu0 0.0
        %1650 = vmatprep.subr.mxu0 0.0
        %1651 = vmatpush1.msra.mxu0 0.0
        %1652 = vmatprep.subr.mxu0 0.0
        %1653 = vmatpush1.msra.mxu0 0.0
        %1654 = vmatprep.subr.mxu0 0.0
        %1655 = vmatpush1.msra.mxu0 0.0
        %1656 = vmatprep.subr.mxu0 0.0
        %1657 = vmatpush1.msra.mxu0 0.0
        %1658 = vmatprep.subr.mxu0 0.0
        %1659 = vmatpush1.msra.mxu0 0.0
        %1660 = vmatprep.subr.mxu0 0.0
        %1661 = vmatpush1.msra.mxu0 0.0
        %1662 = vmatprep.subr.mxu0 0.0
        %1663 = vmatpush1.msra.mxu0 0.0
        %1664 = vmatprep.subr.mxu0 0.0
        %1665 = vmatpush1.msra.mxu0 0.0
        %1666 = vmatprep.subr.mxu0 0.0
        %1667 = vmatpush1.msra.mxu0 0.0
        %1668 = vmatprep.subr.mxu0 0.0
        %1669 = vmatpush1.msra.mxu0 0.0
        %1670 = vmatprep.subr.mxu0 0.0
        %1671 = vmatpush1.msra.mxu0 0.0
        %1672 = vmatprep.subr.mxu0 0.0
        %1673 = vmatpush1.msra.mxu0 0.0
        %1674 = vmatprep.subr.mxu0 0.0
        %1675 = vmatpush1.msra.mxu0 0.0
        %1676 = vmatprep.subr.mxu0 0.0
        %1677 = vmatpush1.msra.mxu0 0.0
        %1678 = vmatprep.mubr.f32.mxu0 0.0
        %1679 = vmatmul.mubr.f32.gmra.mrb[0].mxu0 %v1603
        %v1680 = vpop.f32.mrb[0].mxu0
        %v1681 = vadd.f32 0.0, %v1680
        %v1682 = vpop.f32.mrb[0].mxu0
        %v1683 = vadd.f32 0.0, %v1682
        %1684 = vmatprep.mubr.f32.mxu0 0.0
        %1685 = vmatmul.mubr.f32.gmra.mrb[0].mxu0 %v1606
        %v1686 = vpop.f32.mrb[0].mxu0
        %v1687 = vadd.f32 0.0, %v1686
        %v1688 = vpop.f32.mrb[0].mxu0
        %v1689 = vadd.f32 0.0, %v1688
        %1690 = vdwg.mxu0
        %v1691 = vadd.f32 %v1573, %v1681
        %v1692 = vadd.f32 %v1574, %v1683
        %v1693 = vadd.f32 %v1575, %v1687
        %v1694 = vadd.f32 %v1576, %v1689
        %v1695 = vld [vmem:[#allocation3 + $0x3] sm:$0xff]
        %v1696 = vld [vmem:[#allocation3 + $0xb] sm:$0x3]
        %s1697 = scalar_lea.vmem %s5, 528
        %v1698 = vld [vmem:[%s1697] sm:$0xff]
        %v1699 = vld [vmem:[%s1697 + $0x8] sm:$0xff]
        %v1700 = vld [vmem:[%s1697 + $0x10] sm:$0xff]
        %v1701 = vld [vmem:[%s1697 + $0x18] sm:$0xff]
        %v1702 = vld [vmem:[%s1697 + $0x20] sm:$0xff]
        %v1703 = vld [vmem:[%s1697 + $0x28] sm:$0xff]
        %v1704 = vld [vmem:[%s1697 + $0x30] sm:$0xff]
        %v1705 = vld [vmem:[%s1697 + $0x38] sm:$0xff]
        %v1706 = vld [vmem:[%s1697 + $0x40] sm:$0xff]
        %v1707 = vld [vmem:[%s1697 + $0x48] sm:$0xff]
        %v1708 = vld [vmem:[%s1697 + $0x50] sm:$0xff]
        %v1709 = vld [vmem:[%s1697 + $0x58] sm:$0xff]
        %v1710 = vld [vmem:[%s1697 + $0x60] sm:$0xff]
        %v1711 = vld [vmem:[%s1697 + $0x68] sm:$0xff]
        %v1712 = vld [vmem:[%s1697 + $0x70] sm:$0xff]
        %v1713 = vld [vmem:[%s1697 + $0x78] sm:$0xff]
        %v1714 = vld [vmem:[%s1697 + $0x80] sm:$0xff]
        %v1715 = vld [vmem:[%s1697 + $0x88] sm:$0xff]
        %v1716 = vld [vmem:[%s1697 + $0x90] sm:$0xff]
        %v1717 = vld [vmem:[%s1697 + $0x98] sm:$0xff]
        %v1718 = vld [vmem:[%s1697 + $0xa0] sm:$0xf]
        %v1719 = vld [vmem:[%s1697 + $0xa8] sm:$0xf]
        %v1721 = vsel %vm1326, %v1695, 0
        %v1724 = vsel %vm1326, %v1696, 0
        %v1727 = vsel %vm1139, %v1718, 0
        %v1730 = vsel %vm1139, %v1719, 0
        %1732 = vmatprep.subr.mxu0 %v1699
        %1733 = vmatpush1.msra.mxu0 %v1698
        %1734 = vmatprep.subr.mxu0 %v1701
        %1735 = vmatpush1.msra.mxu0 %v1700
        %1736 = vmatprep.subr.mxu0 %v1703
        %1737 = vmatpush1.msra.mxu0 %v1702
        %1738 = vmatprep.subr.mxu0 %v1705
        %1739 = vmatpush1.msra.mxu0 %v1704
        %1740 = vmatprep.subr.mxu0 %v1707
        %1741 = vmatpush1.msra.mxu0 %v1706
        %1742 = vmatprep.subr.mxu0 %v1709
        %1743 = vmatpush1.msra.mxu0 %v1708
        %1744 = vmatprep.subr.mxu0 %v1711
        %1745 = vmatpush1.msra.mxu0 %v1710
        %1746 = vmatprep.subr.mxu0 %v1713
        %1747 = vmatpush1.msra.mxu0 %v1712
        %1748 = vmatprep.subr.mxu0 %v1715
        %1749 = vmatpush1.msra.mxu0 %v1714
        %1750 = vmatprep.subr.mxu0 %v1717
        %1751 = vmatpush1.msra.mxu0 %v1716
        %1752 = vmatprep.subr.mxu0 %v1730
        %1753 = vmatpush1.msra.mxu0 %v1727
        %1754 = vmatprep.subr.mxu0 0.0
        %1755 = vmatpush1.msra.mxu0 0.0
        %1756 = vmatprep.subr.mxu0 0.0
        %1757 = vmatpush1.msra.mxu0 0.0
        %1758 = vmatprep.subr.mxu0 0.0
        %1759 = vmatpush1.msra.mxu0 0.0
        %1760 = vmatprep.subr.mxu0 0.0
        %1761 = vmatpush1.msra.mxu0 0.0
        %1762 = vmatprep.subr.mxu0 0.0
        %1763 = vmatpush1.msra.mxu0 0.0
        %1764 = vmatprep.subr.mxu0 0.0
        %1765 = vmatpush1.msra.mxu0 0.0
        %1766 = vmatprep.subr.mxu0 0.0
        %1767 = vmatpush1.msra.mxu0 0.0
        %1768 = vmatprep.subr.mxu0 0.0
        %1769 = vmatpush1.msra.mxu0 0.0
        %1770 = vmatprep.subr.mxu0 0.0
        %1771 = vmatpush1.msra.mxu0 0.0
        %1772 = vmatprep.subr.mxu0 0.0
        %1773 = vmatpush1.msra.mxu0 0.0
        %1774 = vmatprep.subr.mxu0 0.0
        %1775 = vmatpush1.msra.mxu0 0.0
        %1776 = vmatprep.subr.mxu0 0.0
        %1777 = vmatpush1.msra.mxu0 0.0
        %1778 = vmatprep.subr.mxu0 0.0
        %1779 = vmatpush1.msra.mxu0 0.0
        %1780 = vmatprep.subr.mxu0 0.0
        %1781 = vmatpush1.msra.mxu0 0.0
        %1782 = vmatprep.subr.mxu0 0.0
        %1783 = vmatpush1.msra.mxu0 0.0
        %1784 = vmatprep.subr.mxu0 0.0
        %1785 = vmatpush1.msra.mxu0 0.0
        %1786 = vmatprep.subr.mxu0 0.0
        %1787 = vmatpush1.msra.mxu0 0.0
        %1788 = vmatprep.subr.mxu0 0.0
        %1789 = vmatpush1.msra.mxu0 0.0
        %1790 = vmatprep.subr.mxu0 0.0
        %1791 = vmatpush1.msra.mxu0 0.0
        %1792 = vmatprep.subr.mxu0 0.0
        %1793 = vmatpush1.msra.mxu0 0.0
        %1794 = vmatprep.subr.mxu0 0.0
        %1795 = vmatpush1.msra.mxu0 0.0
        %1796 = vmatprep.mubr.f32.mxu0 0.0
        %1797 = vmatmul.mubr.f32.gmra.mrb[0].mxu0 %v1721
        %v1798 = vpop.f32.mrb[0].mxu0
        %v1799 = vadd.f32 0.0, %v1798
        %v1800 = vpop.f32.mrb[0].mxu0
        %v1801 = vadd.f32 0.0, %v1800
        %1802 = vmatprep.mubr.f32.mxu0 0.0
        %1803 = vmatmul.mubr.f32.gmra.mrb[0].mxu0 %v1724
        %v1804 = vpop.f32.mrb[0].mxu0
        %v1805 = vadd.f32 0.0, %v1804
        %v1806 = vpop.f32.mrb[0].mxu0
        %v1807 = vadd.f32 0.0, %v1806
        %1808 = vdwg.mxu0
        %v1809 = vadd.f32 %v1691, %v1799
        %v1810 = vadd.f32 %v1692, %v1801
        %v1811 = vadd.f32 %v1693, %v1805
        %v1812 = vadd.f32 %v1694, %v1807
        %v1813 = vld [vmem:[#allocation3 + $0x4] sm:$0xff]
        %v1814 = vld [vmem:[#allocation3 + $0xc] sm:$0x3]
        %s1815 = scalar_lea.vmem %s5, 704
        %v1816 = vld [vmem:[%s1815] sm:$0xff]
        %v1817 = vld [vmem:[%s1815 + $0x8] sm:$0xff]
        %v1818 = vld [vmem:[%s1815 + $0x10] sm:$0xff]
        %v1819 = vld [vmem:[%s1815 + $0x18] sm:$0xff]
        %v1820 = vld [vmem:[%s1815 + $0x20] sm:$0xff]
        %v1821 = vld [vmem:[%s1815 + $0x28] sm:$0xff]
        %v1822 = vld [vmem:[%s1815 + $0x30] sm:$0xff]
        %v1823 = vld [vmem:[%s1815 + $0x38] sm:$0xff]
        %v1824 = vld [vmem:[%s1815 + $0x40] sm:$0xff]
        %v1825 = vld [vmem:[%s1815 + $0x48] sm:$0xff]
        %v1826 = vld [vmem:[%s1815 + $0x50] sm:$0xff]
        %v1827 = vld [vmem:[%s1815 + $0x58] sm:$0xff]
        %v1828 = vld [vmem:[%s1815 + $0x60] sm:$0xff]
        %v1829 = vld [vmem:[%s1815 + $0x68] sm:$0xff]
        %v1830 = vld [vmem:[%s1815 + $0x70] sm:$0xff]
        %v1831 = vld [vmem:[%s1815 + $0x78] sm:$0xff]
        %v1832 = vld [vmem:[%s1815 + $0x80] sm:$0xff]
        %v1833 = vld [vmem:[%s1815 + $0x88] sm:$0xff]
        %v1834 = vld [vmem:[%s1815 + $0x90] sm:$0xff]
        %v1835 = vld [vmem:[%s1815 + $0x98] sm:$0xff]
        %v1836 = vld [vmem:[%s1815 + $0xa0] sm:$0xf]
        %v1837 = vld [vmem:[%s1815 + $0xa8] sm:$0xf]
        %v1839 = vsel %vm1326, %v1813, 0
        %v1842 = vsel %vm1326, %v1814, 0
        %v1845 = vsel %vm1139, %v1836, 0
        %v1848 = vsel %vm1139, %v1837, 0
        %1850 = vmatprep.subr.mxu0 %v1817
        %1851 = vmatpush1.msra.mxu0 %v1816
        %1852 = vmatprep.subr.mxu0 %v1819
        %1853 = vmatpush1.msra.mxu0 %v1818
        %1854 = vmatprep.subr.mxu0 %v1821
        %1855 = vmatpush1.msra.mxu0 %v1820
        %1856 = vmatprep.subr.mxu0 %v1823
        %1857 = vmatpush1.msra.mxu0 %v1822
        %1858 = vmatprep.subr.mxu0 %v1825
        %1859 = vmatpush1.msra.mxu0 %v1824
        %1860 = vmatprep.subr.mxu0 %v1827
        %1861 = vmatpush1.msra.mxu0 %v1826
        %1862 = vmatprep.subr.mxu0 %v1829
        %1863 = vmatpush1.msra.mxu0 %v1828
        %1864 = vmatprep.subr.mxu0 %v1831
        %1865 = vmatpush1.msra.mxu0 %v1830
        %1866 = vmatprep.subr.mxu0 %v1833
        %1867 = vmatpush1.msra.mxu0 %v1832
        %1868 = vmatprep.subr.mxu0 %v1835
        %1869 = vmatpush1.msra.mxu0 %v1834
        %1870 = vmatprep.subr.mxu0 %v1848
        %1871 = vmatpush1.msra.mxu0 %v1845
        %1872 = vmatprep.subr.mxu0 0.0
        %1873 = vmatpush1.msra.mxu0 0.0
        %1874 = vmatprep.subr.mxu0 0.0
        %1875 = vmatpush1.msra.mxu0 0.0
        %1876 = vmatprep.subr.mxu0 0.0
        %1877 = vmatpush1.msra.mxu0 0.0
        %1878 = vmatprep.subr.mxu0 0.0
        %1879 = vmatpush1.msra.mxu0 0.0
        %1880 = vmatprep.subr.mxu0 0.0
        %1881 = vmatpush1.msra.mxu0 0.0
        %1882 = vmatprep.subr.mxu0 0.0
        %1883 = vmatpush1.msra.mxu0 0.0
        %1884 = vmatprep.subr.mxu0 0.0
        %1885 = vmatpush1.msra.mxu0 0.0
        %1886 = vmatprep.subr.mxu0 0.0
        %1887 = vmatpush1.msra.mxu0 0.0
        %1888 = vmatprep.subr.mxu0 0.0
        %1889 = vmatpush1.msra.mxu0 0.0
        %1890 = vmatprep.subr.mxu0 0.0
        %1891 = vmatpush1.msra.mxu0 0.0
        %1892 = vmatprep.subr.mxu0 0.0
        %1893 = vmatpush1.msra.mxu0 0.0
        %1894 = vmatprep.subr.mxu0 0.0
        %1895 = vmatpush1.msra.mxu0 0.0
        %1896 = vmatprep.subr.mxu0 0.0
        %1897 = vmatpush1.msra.mxu0 0.0
        %1898 = vmatprep.subr.mxu0 0.0
        %1899 = vmatpush1.msra.mxu0 0.0
        %1900 = vmatprep.subr.mxu0 0.0
        %1901 = vmatpush1.msra.mxu0 0.0
        %1902 = vmatprep.subr.mxu0 0.0
        %1903 = vmatpush1.msra.mxu0 0.0
        %1904 = vmatprep.subr.mxu0 0.0
        %1905 = vmatpush1.msra.mxu0 0.0
        %1906 = vmatprep.subr.mxu0 0.0
        %1907 = vmatpush1.msra.mxu0 0.0
        %1908 = vmatprep.subr.mxu0 0.0
        %1909 = vmatpush1.msra.mxu0 0.0
        %1910 = vmatprep.subr.mxu0 0.0
        %1911 = vmatpush1.msra.mxu0 0.0
        %1912 = vmatprep.subr.mxu0 0.0
        %1913 = vmatpush1.msra.mxu0 0.0
        %1914 = vmatprep.mubr.f32.mxu0 0.0
        %1915 = vmatmul.mubr.f32.gmra.mrb[0].mxu0 %v1839
        %v1916 = vpop.f32.mrb[0].mxu0
        %v1917 = vadd.f32 0.0, %v1916
        %v1918 = vpop.f32.mrb[0].mxu0
        %v1919 = vadd.f32 0.0, %v1918
        %1920 = vmatprep.mubr.f32.mxu0 0.0
        %1921 = vmatmul.mubr.f32.gmra.mrb[0].mxu0 %v1842
        %v1922 = vpop.f32.mrb[0].mxu0
        %v1923 = vadd.f32 0.0, %v1922
        %v1924 = vpop.f32.mrb[0].mxu0
        %v1925 = vadd.f32 0.0, %v1924
        %1926 = vdwg.mxu0
        %v1927 = vadd.f32 %v1809, %v1917
        %v1928 = vadd.f32 %v1810, %v1919
        %v1929 = vadd.f32 %v1811, %v1923
        %v1930 = vadd.f32 %v1812, %v1925
        %v1931 = vmax.f32 %v1927, 0.0
        %v1932 = vmax.f32 %v1928, 0.0
        %v1933 = vmax.f32 %v1929, 0.0
        %v1934 = vmax.f32 %v1930, 0.0
        %v1935 = vld [vmem:[%s7] sm:$0x1f]
        %vm1936 = vcmask 80896
        %v1938 = vsel %vm1936, %v1935, 0
        %vm1940 = vcmask 1041408
        %v1942 = vsel %vm1940, %v1933, 0
        %v1945 = vsel %vm1940, %v1934, 0
        %1947 = vmatprep.subr.mxu0 %v1932
        %1948 = vmatpush1.msra.mxu0 %v1931
        %1949 = vmatprep.subr.mxu0 %v1945
        %1950 = vmatpush1.msra.mxu0 %v1942
        %1951 = vmatprep.subr.mxu0 0.0
        %1952 = vmatpush1.msra.mxu0 0.0
        %1953 = vmatprep.subr.mxu0 0.0
        %1954 = vmatpush1.msra.mxu0 0.0
        %1955 = vmatprep.subr.mxu0 0.0
        %1956 = vmatpush1.msra.mxu0 0.0
        %1957 = vmatprep.subr.mxu0 0.0
        %1958 = vmatpush1.msra.mxu0 0.0
        %1959 = vmatprep.subr.mxu0 0.0
        %1960 = vmatpush1.msra.mxu0 0.0
        %1961 = vmatprep.subr.mxu0 0.0
        %1962 = vmatpush1.msra.mxu0 0.0
        %1963 = vmatprep.subr.mxu0 0.0
        %1964 = vmatpush1.msra.mxu0 0.0
        %1965 = vmatprep.subr.mxu0 0.0
        %1966 = vmatpush1.msra.mxu0 0.0
        %1967 = vmatprep.subr.mxu0 0.0
        %1968 = vmatpush1.msra.mxu0 0.0
        %1969 = vmatprep.subr.mxu0 0.0
        %1970 = vmatpush1.msra.mxu0 0.0
        %1971 = vmatprep.subr.mxu0 0.0
        %1972 = vmatpush1.msra.mxu0 0.0
        %1973 = vmatprep.subr.mxu0 0.0
        %1974 = vmatpush1.msra.mxu0 0.0
        %1975 = vmatprep.subr.mxu0 0.0
        %1976 = vmatpush1.msra.mxu0 0.0
        %1977 = vmatprep.subr.mxu0 0.0
        %1978 = vmatpush1.msra.mxu0 0.0
        %1979 = vmatprep.subr.mxu0 0.0
        %1980 = vmatpush1.msra.mxu0 0.0
        %1981 = vmatprep.subr.mxu0 0.0
        %1982 = vmatpush1.msra.mxu0 0.0
        %1983 = vmatprep.subr.mxu0 0.0
        %1984 = vmatpush1.msra.mxu0 0.0
        %1985 = vmatprep.subr.mxu0 0.0
        %1986 = vmatpush1.msra.mxu0 0.0
        %1987 = vmatprep.subr.mxu0 0.0
        %1988 = vmatpush1.msra.mxu0 0.0
        %1989 = vmatprep.subr.mxu0 0.0
        %1990 = vmatpush1.msra.mxu0 0.0
        %1991 = vmatprep.subr.mxu0 0.0
        %1992 = vmatpush1.msra.mxu0 0.0
        %1993 = vmatprep.subr.mxu0 0.0
        %1994 = vmatpush1.msra.mxu0 0.0
        %1995 = vmatprep.subr.mxu0 0.0
        %1996 = vmatpush1.msra.mxu0 0.0
        %1997 = vmatprep.subr.mxu0 0.0
        %1998 = vmatpush1.msra.mxu0 0.0
        %1999 = vmatprep.subr.mxu0 0.0
        %2000 = vmatpush1.msra.mxu0 0.0
        %2001 = vmatprep.subr.mxu0 0.0
        %2002 = vmatpush1.msra.mxu0 0.0
        %2003 = vmatprep.subr.mxu0 0.0
        %2004 = vmatpush1.msra.mxu0 0.0
        %2005 = vmatprep.subr.mxu0 0.0
        %2006 = vmatpush1.msra.mxu0 0.0
        %2007 = vmatprep.subr.mxu0 0.0
        %2008 = vmatpush1.msra.mxu0 0.0
        %2009 = vmatprep.subr.mxu0 0.0
        %2010 = vmatpush1.msra.mxu0 0.0
        %2011 = vmatprep.mubr.f32.mxu0 0.0
        %2012 = vmatmul.mubr.f32.gmra.mrb[0].mxu0 %v1938
        %v2013 = vpop.f32.mrb[0].mxu0
        %v2014 = vadd.f32 0.0, %v2013
        %v2015 = vpop.f32.mrb[0].mxu0
        %v2016 = vadd.f32 0.0, %v2015
        %2017 = vdwg.mxu0
        %v2018 = vld [vmem:[%s8] sm:$0xff]
        %v2019 = vld [vmem:[%s8 + $0x8] sm:$0xff]
        %v2020 = vld [vmem:[%s8 + $0x10] sm:$0xff]
        %v2021 = vld [vmem:[%s8 + $0x18] sm:$0xff]
        %v2022 = vld [vmem:[%s8 + $0x20] sm:$0xff]
        %v2023 = vld [vmem:[%s8 + $0x28] sm:$0xff]
        %v2024 = vld [vmem:[%s8 + $0x30] sm:$0xff]
        %v2025 = vld [vmem:[%s8 + $0x38] sm:$0xff]
        %v2026 = vld [vmem:[%s8 + $0x40] sm:$0xff]
        %v2027 = vld [vmem:[%s8 + $0x48] sm:$0xff]
        %v2028 = vld [vmem:[%s8 + $0x50] sm:$0xff]
        %v2029 = vld [vmem:[%s8 + $0x58] sm:$0xff]
        %v2030 = vld [vmem:[%s8 + $0x60] sm:$0xff]
        %v2031 = vld [vmem:[%s8 + $0x68] sm:$0xff]
        %v2032 = vld [vmem:[%s8 + $0x70] sm:$0xff]
        %v2033 = vld [vmem:[%s8 + $0x78] sm:$0xff]
        %v2034 = vld [vmem:[%s8 + $0x80] sm:$0xff]
        %v2035 = vld [vmem:[%s8 + $0x88] sm:$0xff]
        %v2036 = vld [vmem:[%s8 + $0x90] sm:$0xff]
        %v2037 = vld [vmem:[%s8 + $0x98] sm:$0xff]
        %v2039 = vsel %vm496, %v2016, 0
        %2041 = vmatprep.subr.mxu0 0.0
        %2042 = vmatpush1.msra.mxu0 %v2018
        %2043 = vmatprep.subr.mxu0 0.0
        %2044 = vmatpush1.msra.mxu0 %v2019
        %2045 = vmatprep.subr.mxu0 0.0
        %2046 = vmatpush1.msra.mxu0 %v2020
        %2047 = vmatprep.subr.mxu0 0.0
        %2048 = vmatpush1.msra.mxu0 %v2021
        %2049 = vmatprep.subr.mxu0 0.0
        %2050 = vmatpush1.msra.mxu0 %v2022
        %2051 = vmatprep.subr.mxu0 0.0
        %2052 = vmatpush1.msra.mxu0 %v2023
        %2053 = vmatprep.subr.mxu0 0.0
        %2054 = vmatpush1.msra.mxu0 %v2024
        %2055 = vmatprep.subr.mxu0 0.0
        %2056 = vmatpush1.msra.mxu0 %v2025
        %2057 = vmatprep.subr.mxu0 0.0
        %2058 = vmatpush1.msra.mxu0 %v2026
        %2059 = vmatprep.subr.mxu0 0.0
        %2060 = vmatpush1.msra.mxu0 %v2027
        %2061 = vmatprep.subr.mxu0 0.0
        %2062 = vmatpush1.msra.mxu0 %v2028
        %2063 = vmatprep.subr.mxu0 0.0
        %2064 = vmatpush1.msra.mxu0 %v2029
        %2065 = vmatprep.subr.mxu0 0.0
        %2066 = vmatpush1.msra.mxu0 %v2030
        %2067 = vmatprep.subr.mxu0 0.0
        %2068 = vmatpush1.msra.mxu0 %v2031
        %2069 = vmatprep.subr.mxu0 0.0
        %2070 = vmatpush1.msra.mxu0 %v2032
        %2071 = vmatprep.subr.mxu0 0.0
        %2072 = vmatpush1.msra.mxu0 %v2033
        %2073 = vmatprep.subr.mxu0 0.0
        %2074 = vmatpush1.msra.mxu0 %v2034
        %2075 = vmatprep.subr.mxu0 0.0
        %2076 = vmatpush1.msra.mxu0 %v2035
        %2077 = vmatprep.subr.mxu0 0.0
        %2078 = vmatpush1.msra.mxu0 %v2036
        %2079 = vmatprep.subr.mxu0 0.0
        %2080 = vmatpush1.msra.mxu0 %v2037
        %2081 = vmatprep.subr.mxu0 0.0
        %2082 = vmatpush1.msra.mxu0 0.0
        %2083 = vmatprep.subr.mxu0 0.0
        %2084 = vmatpush1.msra.mxu0 0.0
        %2085 = vmatprep.subr.mxu0 0.0
        %2086 = vmatpush1.msra.mxu0 0.0
        %2087 = vmatprep.subr.mxu0 0.0
        %2088 = vmatpush1.msra.mxu0 0.0
        %2089 = vmatprep.subr.mxu0 0.0
        %2090 = vmatpush1.msra.mxu0 0.0
        %2091 = vmatprep.subr.mxu0 0.0
        %2092 = vmatpush1.msra.mxu0 0.0
        %2093 = vmatprep.subr.mxu0 0.0
        %2094 = vmatpush1.msra.mxu0 0.0
        %2095 = vmatprep.subr.mxu0 0.0
        %2096 = vmatpush1.msra.mxu0 0.0
        %2097 = vmatprep.subr.mxu0 0.0
        %2098 = vmatpush1.msra.mxu0 0.0
        %2099 = vmatprep.subr.mxu0 0.0
        %2100 = vmatpush1.msra.mxu0 0.0
        %2101 = vmatprep.subr.mxu0 0.0
        %2102 = vmatpush1.msra.mxu0 0.0
        %2103 = vmatprep.subr.mxu0 0.0
        %2104 = vmatpush1.msra.mxu0 0.0
        %2105 = vmatprep.mubr.f32.mxu0 %v2039
        %2106 = vmatmul.mubr.f32.gmra.mrb[0].mxu0 %v2014
        %v2107 = vpop.f32.mrb[0].mxu0
        %v2108 = vadd.f32 0.0, %v2107
        %v2109 = vpop.f32.mrb[0].mxu0
        %2110 = vdwg.mxu0
        %vm2111 = vcmask 651264
        %2112 = vst.msk [vmem:[#allocation4] sm:$0x1f] %vm2111, %v2108
        %v2113 = vld [vmem:[%s10] sm:$0x1]
        %v2114 = vld [vmem:[#allocation4] sm:$0x1]
        %v2115 = vld [vmem:[%s9] sm:$0xff]
        %v2116 = vld [vmem:[%s9 + $0x8] sm:$0xff]
        %v2117 = vld [vmem:[%s9 + $0x10] sm:$0xff]
        %v2118 = vld [vmem:[%s9 + $0x18] sm:$0xff]
        %v2119 = vld [vmem:[%s9 + $0x20] sm:$0xff]
        %v2120 = vld [vmem:[%s9 + $0x28] sm:$0xff]
        %v2121 = vld [vmem:[%s9 + $0x30] sm:$0xff]
        %v2122 = vld [vmem:[%s9 + $0x38] sm:$0xff]
        %v2123 = vld [vmem:[%s9 + $0x40] sm:$0xff]
        %v2124 = vld [vmem:[%s9 + $0x48] sm:$0xff]
        %vm2125 = vcmask 654336
        %v2127 = vsel %vm2125, %v2114, 0
        %2129 = vmatprep.subr.mxu0 0.0
        %2130 = vmatpush1.msra.mxu0 %v2115
        %2131 = vmatprep.subr.mxu0 0.0
        %2132 = vmatpush1.msra.mxu0 %v2116
        %2133 = vmatprep.subr.mxu0 0.0
        %2134 = vmatpush1.msra.mxu0 %v2117
        %2135 = vmatprep.subr.mxu0 0.0
        %2136 = vmatpush1.msra.mxu0 %v2118
        %2137 = vmatprep.subr.mxu0 0.0
        %2138 = vmatpush1.msra.mxu0 %v2119
        %2139 = vmatprep.subr.mxu0 0.0
        %2140 = vmatpush1.msra.mxu0 %v2120
        %2141 = vmatprep.subr.mxu0 0.0
        %2142 = vmatpush1.msra.mxu0 %v2121
        %2143 = vmatprep.subr.mxu0 0.0
        %2144 = vmatpush1.msra.mxu0 %v2122
        %2145 = vmatprep.subr.mxu0 0.0
        %2146 = vmatpush1.msra.mxu0 %v2123
        %2147 = vmatprep.subr.mxu0 0.0
        %2148 = vmatpush1.msra.mxu0 %v2124
        %2149 = vmatprep.subr.mxu0 0.0
        %2150 = vmatpush1.msra.mxu0 0.0
        %2151 = vmatprep.subr.mxu0 0.0
        %2152 = vmatpush1.msra.mxu0 0.0
        %2153 = vmatprep.subr.mxu0 0.0
        %2154 = vmatpush1.msra.mxu0 0.0
        %2155 = vmatprep.subr.mxu0 0.0
        %2156 = vmatpush1.msra.mxu0 0.0
        %2157 = vmatprep.subr.mxu0 0.0
        %2158 = vmatpush1.msra.mxu0 0.0
        %2159 = vmatprep.subr.mxu0 0.0
        %2160 = vmatpush1.msra.mxu0 0.0
        %2161 = vmatprep.subr.mxu0 0.0
        %2162 = vmatpush1.msra.mxu0 0.0
        %2163 = vmatprep.subr.mxu0 0.0
        %2164 = vmatpush1.msra.mxu0 0.0
        %2165 = vmatprep.subr.mxu0 0.0
        %2166 = vmatpush1.msra.mxu0 0.0
        %2167 = vmatprep.subr.mxu0 0.0
        %2168 = vmatpush1.msra.mxu0 0.0
        %2169 = vmatprep.subr.mxu0 0.0
        %2170 = vmatpush1.msra.mxu0 0.0
        %2171 = vmatprep.subr.mxu0 0.0
        %2172 = vmatpush1.msra.mxu0 0.0
        %2173 = vmatprep.subr.mxu0 0.0
        %2174 = vmatpush1.msra.mxu0 0.0
        %2175 = vmatprep.subr.mxu0 0.0
        %2176 = vmatpush1.msra.mxu0 0.0
        %2177 = vmatprep.subr.mxu0 0.0
        %2178 = vmatpush1.msra.mxu0 0.0
        %2179 = vmatprep.subr.mxu0 0.0
        %2180 = vmatpush1.msra.mxu0 0.0
        %2181 = vmatprep.subr.mxu0 0.0
        %2182 = vmatpush1.msra.mxu0 0.0
        %2183 = vmatprep.subr.mxu0 0.0
        %2184 = vmatpush1.msra.mxu0 0.0
        %2185 = vmatprep.subr.mxu0 0.0
        %2186 = vmatpush1.msra.mxu0 0.0
        %2187 = vmatprep.subr.mxu0 0.0
        %2188 = vmatpush1.msra.mxu0 0.0
        %2189 = vmatprep.subr.mxu0 0.0
        %2190 = vmatpush1.msra.mxu0 0.0
        %2191 = vmatprep.subr.mxu0 0.0
        %2192 = vmatpush1.msra.mxu0 0.0
        %2193 = vmatprep.mubr.f32.mxu0 0.0
        %2194 = vmatmul.mubr.f32.gmra.mrb[0].mxu0 %v2127
        %v2195 = vpop.f32.mrb[0].mxu0
        %v2196 = vadd.f32 0.0, %v2195
        %v2197 = vpop.f32.mrb[0].mxu0
        %2198 = vdwg.mxu0
        %v2199 = vadd.f32 %v2113, %v2196
        %v2200 = vld [vmem:[#allocation4 + $0x1] sm:$0x1]
        %s2201 = scalar_lea.vmem %s9, 80
        %v2202 = vld [vmem:[%s2201] sm:$0xff]
        %v2203 = vld [vmem:[%s2201 + $0x8] sm:$0xff]
        %v2204 = vld [vmem:[%s2201 + $0x10] sm:$0xff]
        %v2205 = vld [vmem:[%s2201 + $0x18] sm:$0xff]
        %v2206 = vld [vmem:[%s2201 + $0x20] sm:$0xff]
        %v2207 = vld [vmem:[%s2201 + $0x28] sm:$0xff]
        %v2208 = vld [vmem:[%s2201 + $0x30] sm:$0xff]
        %v2209 = vld [vmem:[%s2201 + $0x38] sm:$0xff]
        %v2210 = vld [vmem:[%s2201 + $0x40] sm:$0xff]
        %v2211 = vld [vmem:[%s2201 + $0x48] sm:$0xff]
        %v2213 = vsel %vm2125, %v2200, 0
        %2215 = vmatprep.subr.mxu0 0.0
        %2216 = vmatpush1.msra.mxu0 %v2202
        %2217 = vmatprep.subr.mxu0 0.0
        %2218 = vmatpush1.msra.mxu0 %v2203
        %2219 = vmatprep.subr.mxu0 0.0
        %2220 = vmatpush1.msra.mxu0 %v2204
        %2221 = vmatprep.subr.mxu0 0.0
        %2222 = vmatpush1.msra.mxu0 %v2205
        %2223 = vmatprep.subr.mxu0 0.0
        %2224 = vmatpush1.msra.mxu0 %v2206
        %2225 = vmatprep.subr.mxu0 0.0
        %2226 = vmatpush1.msra.mxu0 %v2207
        %2227 = vmatprep.subr.mxu0 0.0
        %2228 = vmatpush1.msra.mxu0 %v2208
        %2229 = vmatprep.subr.mxu0 0.0
        %2230 = vmatpush1.msra.mxu0 %v2209
        %2231 = vmatprep.subr.mxu0 0.0
        %2232 = vmatpush1.msra.mxu0 %v2210
        %2233 = vmatprep.subr.mxu0 0.0
        %2234 = vmatpush1.msra.mxu0 %v2211
        %2235 = vmatprep.subr.mxu0 0.0
        %2236 = vmatpush1.msra.mxu0 0.0
        %2237 = vmatprep.subr.mxu0 0.0
        %2238 = vmatpush1.msra.mxu0 0.0
        %2239 = vmatprep.subr.mxu0 0.0
        %2240 = vmatpush1.msra.mxu0 0.0
        %2241 = vmatprep.subr.mxu0 0.0
        %2242 = vmatpush1.msra.mxu0 0.0
        %2243 = vmatprep.subr.mxu0 0.0
        %2244 = vmatpush1.msra.mxu0 0.0
        %2245 = vmatprep.subr.mxu0 0.0
        %2246 = vmatpush1.msra.mxu0 0.0
        %2247 = vmatprep.subr.mxu0 0.0
        %2248 = vmatpush1.msra.mxu0 0.0
        %2249 = vmatprep.subr.mxu0 0.0
        %2250 = vmatpush1.msra.mxu0 0.0
        %2251 = vmatprep.subr.mxu0 0.0
        %2252 = vmatpush1.msra.mxu0 0.0
        %2253 = vmatprep.subr.mxu0 0.0
        %2254 = vmatpush1.msra.mxu0 0.0
        %2255 = vmatprep.subr.mxu0 0.0
        %2256 = vmatpush1.msra.mxu0 0.0
        %2257 = vmatprep.subr.mxu0 0.0
        %2258 = vmatpush1.msra.mxu0 0.0
        %2259 = vmatprep.subr.mxu0 0.0
        %2260 = vmatpush1.msra.mxu0 0.0
        %2261 = vmatprep.subr.mxu0 0.0
        %2262 = vmatpush1.msra.mxu0 0.0
        %2263 = vmatprep.subr.mxu0 0.0
        %2264 = vmatpush1.msra.mxu0 0.0
        %2265 = vmatprep.subr.mxu0 0.0
        %2266 = vmatpush1.msra.mxu0 0.0
        %2267 = vmatprep.subr.mxu0 0.0
        %2268 = vmatpush1.msra.mxu0 0.0
        %2269 = vmatprep.subr.mxu0 0.0
        %2270 = vmatpush1.msra.mxu0 0.0
        %2271 = vmatprep.subr.mxu0 0.0
        %2272 = vmatpush1.msra.mxu0 0.0
        %2273 = vmatprep.subr.mxu0 0.0
        %2274 = vmatpush1.msra.mxu0 0.0
        %2275 = vmatprep.subr.mxu0 0.0
        %2276 = vmatpush1.msra.mxu0 0.0
        %2277 = vmatprep.subr.mxu0 0.0
        %2278 = vmatpush1.msra.mxu0 0.0
        %2279 = vmatprep.mubr.f32.mxu0 0.0
        %2280 = vmatmul.mubr.f32.gmra.mrb[0].mxu0 %v2213
        %v2281 = vpop.f32.mrb[0].mxu0
        %v2282 = vadd.f32 0.0, %v2281
        %v2283 = vpop.f32.mrb[0].mxu0
        %2284 = vdwg.mxu0
        %v2285 = vadd.f32 %v2199, %v2282
        %v2286 = vld [vmem:[#allocation4 + $0x2] sm:$0x1]
        %s2287 = scalar_lea.vmem %s9, 160
        %v2288 = vld [vmem:[%s2287] sm:$0xff]
        %v2289 = vld [vmem:[%s2287 + $0x8] sm:$0xff]
        %v2290 = vld [vmem:[%s2287 + $0x10] sm:$0xff]
        %v2291 = vld [vmem:[%s2287 + $0x18] sm:$0xff]
        %v2292 = vld [vmem:[%s2287 + $0x20] sm:$0xff]
        %v2293 = vld [vmem:[%s2287 + $0x28] sm:$0xff]
        %v2294 = vld [vmem:[%s2287 + $0x30] sm:$0xff]
        %v2295 = vld [vmem:[%s2287 + $0x38] sm:$0xff]
        %v2296 = vld [vmem:[%s2287 + $0x40] sm:$0xff]
        %v2297 = vld [vmem:[%s2287 + $0x48] sm:$0xff]
        %v2299 = vsel %vm2125, %v2286, 0
        %2301 = vmatprep.subr.mxu0 0.0
        %2302 = vmatpush1.msra.mxu0 %v2288
        %2303 = vmatprep.subr.mxu0 0.0
        %2304 = vmatpush1.msra.mxu0 %v2289
        %2305 = vmatprep.subr.mxu0 0.0
        %2306 = vmatpush1.msra.mxu0 %v2290
        %2307 = vmatprep.subr.mxu0 0.0
        %2308 = vmatpush1.msra.mxu0 %v2291
        %2309 = vmatprep.subr.mxu0 0.0
        %2310 = vmatpush1.msra.mxu0 %v2292
        %2311 = vmatprep.subr.mxu0 0.0
        %2312 = vmatpush1.msra.mxu0 %v2293
        %2313 = vmatprep.subr.mxu0 0.0
        %2314 = vmatpush1.msra.mxu0 %v2294
        %2315 = vmatprep.subr.mxu0 0.0
        %2316 = vmatpush1.msra.mxu0 %v2295
        %2317 = vmatprep.subr.mxu0 0.0
        %2318 = vmatpush1.msra.mxu0 %v2296
        %2319 = vmatprep.subr.mxu0 0.0
        %2320 = vmatpush1.msra.mxu0 %v2297
        %2321 = vmatprep.subr.mxu0 0.0
        %2322 = vmatpush1.msra.mxu0 0.0
        %2323 = vmatprep.subr.mxu0 0.0
        %2324 = vmatpush1.msra.mxu0 0.0
        %2325 = vmatprep.subr.mxu0 0.0
        %2326 = vmatpush1.msra.mxu0 0.0
        %2327 = vmatprep.subr.mxu0 0.0
        %2328 = vmatpush1.msra.mxu0 0.0
        %2329 = vmatprep.subr.mxu0 0.0
        %2330 = vmatpush1.msra.mxu0 0.0
        %2331 = vmatprep.subr.mxu0 0.0
        %2332 = vmatpush1.msra.mxu0 0.0
        %2333 = vmatprep.subr.mxu0 0.0
        %2334 = vmatpush1.msra.mxu0 0.0
        %2335 = vmatprep.subr.mxu0 0.0
        %2336 = vmatpush1.msra.mxu0 0.0
        %2337 = vmatprep.subr.mxu0 0.0
        %2338 = vmatpush1.msra.mxu0 0.0
        %2339 = vmatprep.subr.mxu0 0.0
        %2340 = vmatpush1.msra.mxu0 0.0
        %2341 = vmatprep.subr.mxu0 0.0
        %2342 = vmatpush1.msra.mxu0 0.0
        %2343 = vmatprep.subr.mxu0 0.0
        %2344 = vmatpush1.msra.mxu0 0.0
        %2345 = vmatprep.subr.mxu0 0.0
        %2346 = vmatpush1.msra.mxu0 0.0
        %2347 = vmatprep.subr.mxu0 0.0
        %2348 = vmatpush1.msra.mxu0 0.0
        %2349 = vmatprep.subr.mxu0 0.0
        %2350 = vmatpush1.msra.mxu0 0.0
        %2351 = vmatprep.subr.mxu0 0.0
        %2352 = vmatpush1.msra.mxu0 0.0
        %2353 = vmatprep.subr.mxu0 0.0
        %2354 = vmatpush1.msra.mxu0 0.0
        %2355 = vmatprep.subr.mxu0 0.0
        %2356 = vmatpush1.msra.mxu0 0.0
        %2357 = vmatprep.subr.mxu0 0.0
        %2358 = vmatpush1.msra.mxu0 0.0
        %2359 = vmatprep.subr.mxu0 0.0
        %2360 = vmatpush1.msra.mxu0 0.0
        %2361 = vmatprep.subr.mxu0 0.0
        %2362 = vmatpush1.msra.mxu0 0.0
        %2363 = vmatprep.subr.mxu0 0.0
        %2364 = vmatpush1.msra.mxu0 0.0
        %2365 = vmatprep.mubr.f32.mxu0 0.0
        %2366 = vmatmul.mubr.f32.gmra.mrb[0].mxu0 %v2299
        %v2367 = vpop.f32.mrb[0].mxu0
        %v2368 = vadd.f32 0.0, %v2367
        %v2369 = vpop.f32.mrb[0].mxu0
        %2370 = vdwg.mxu0
        %v2371 = vadd.f32 %v2285, %v2368
        %v2372 = vld [vmem:[#allocation4 + $0x3] sm:$0x1]
        %s2373 = scalar_lea.vmem %s9, 240
        %v2374 = vld [vmem:[%s2373] sm:$0xff]
        %v2375 = vld [vmem:[%s2373 + $0x8] sm:$0xff]
        %v2376 = vld [vmem:[%s2373 + $0x10] sm:$0xff]
        %v2377 = vld [vmem:[%s2373 + $0x18] sm:$0xff]
        %v2378 = vld [vmem:[%s2373 + $0x20] sm:$0xff]
        %v2379 = vld [vmem:[%s2373 + $0x28] sm:$0xff]
        %v2380 = vld [vmem:[%s2373 + $0x30] sm:$0xff]
        %v2381 = vld [vmem:[%s2373 + $0x38] sm:$0xff]
        %v2382 = vld [vmem:[%s2373 + $0x40] sm:$0xff]
        %v2383 = vld [vmem:[%s2373 + $0x48] sm:$0xff]
        %v2385 = vsel %vm2125, %v2372, 0
        %2387 = vmatprep.subr.mxu0 0.0
        %2388 = vmatpush1.msra.mxu0 %v2374
        %2389 = vmatprep.subr.mxu0 0.0
        %2390 = vmatpush1.msra.mxu0 %v2375
        %2391 = vmatprep.subr.mxu0 0.0
        %2392 = vmatpush1.msra.mxu0 %v2376
        %2393 = vmatprep.subr.mxu0 0.0
        %2394 = vmatpush1.msra.mxu0 %v2377
        %2395 = vmatprep.subr.mxu0 0.0
        %2396 = vmatpush1.msra.mxu0 %v2378
        %2397 = vmatprep.subr.mxu0 0.0
        %2398 = vmatpush1.msra.mxu0 %v2379
        %2399 = vmatprep.subr.mxu0 0.0
        %2400 = vmatpush1.msra.mxu0 %v2380
        %2401 = vmatprep.subr.mxu0 0.0
        %2402 = vmatpush1.msra.mxu0 %v2381
        %2403 = vmatprep.subr.mxu0 0.0
        %2404 = vmatpush1.msra.mxu0 %v2382
        %2405 = vmatprep.subr.mxu0 0.0
        %2406 = vmatpush1.msra.mxu0 %v2383
        %2407 = vmatprep.subr.mxu0 0.0
        %2408 = vmatpush1.msra.mxu0 0.0
        %2409 = vmatprep.subr.mxu0 0.0
        %2410 = vmatpush1.msra.mxu0 0.0
        %2411 = vmatprep.subr.mxu0 0.0
        %2412 = vmatpush1.msra.mxu0 0.0
        %2413 = vmatprep.subr.mxu0 0.0
        %2414 = vmatpush1.msra.mxu0 0.0
        %2415 = vmatprep.subr.mxu0 0.0
        %2416 = vmatpush1.msra.mxu0 0.0
        %2417 = vmatprep.subr.mxu0 0.0
        %2418 = vmatpush1.msra.mxu0 0.0
        %2419 = vmatprep.subr.mxu0 0.0
        %2420 = vmatpush1.msra.mxu0 0.0
        %2421 = vmatprep.subr.mxu0 0.0
        %2422 = vmatpush1.msra.mxu0 0.0
        %2423 = vmatprep.subr.mxu0 0.0
        %2424 = vmatpush1.msra.mxu0 0.0
        %2425 = vmatprep.subr.mxu0 0.0
        %2426 = vmatpush1.msra.mxu0 0.0
        %2427 = vmatprep.subr.mxu0 0.0
        %2428 = vmatpush1.msra.mxu0 0.0
        %2429 = vmatprep.subr.mxu0 0.0
        %2430 = vmatpush1.msra.mxu0 0.0
        %2431 = vmatprep.subr.mxu0 0.0
        %2432 = vmatpush1.msra.mxu0 0.0
        %2433 = vmatprep.subr.mxu0 0.0
        %2434 = vmatpush1.msra.mxu0 0.0
        %2435 = vmatprep.subr.mxu0 0.0
        %2436 = vmatpush1.msra.mxu0 0.0
        %2437 = vmatprep.subr.mxu0 0.0
        %2438 = vmatpush1.msra.mxu0 0.0
        %2439 = vmatprep.subr.mxu0 0.0
        %2440 = vmatpush1.msra.mxu0 0.0
        %2441 = vmatprep.subr.mxu0 0.0
        %2442 = vmatpush1.msra.mxu0 0.0
        %2443 = vmatprep.subr.mxu0 0.0
        %2444 = vmatpush1.msra.mxu0 0.0
        %2445 = vmatprep.subr.mxu0 0.0
        %2446 = vmatpush1.msra.mxu0 0.0
        %2447 = vmatprep.subr.mxu0 0.0
        %2448 = vmatpush1.msra.mxu0 0.0
        %2449 = vmatprep.subr.mxu0 0.0
        %2450 = vmatpush1.msra.mxu0 0.0
        %2451 = vmatprep.mubr.f32.mxu0 0.0
        %2452 = vmatmul.mubr.f32.gmra.mrb[0].mxu0 %v2385
        %v2453 = vpop.f32.mrb[0].mxu0
        %v2454 = vadd.f32 0.0, %v2453
        %v2455 = vpop.f32.mrb[0].mxu0
        %2456 = vdwg.mxu0
        %v2457 = vadd.f32 %v2371, %v2454
        %v2458 = vld [vmem:[#allocation4 + $0x4] sm:$0x1]
        %s2459 = scalar_lea.vmem %s9, 320
        %v2460 = vld [vmem:[%s2459] sm:$0xff]
        %v2461 = vld [vmem:[%s2459 + $0x8] sm:$0xff]
        %v2462 = vld [vmem:[%s2459 + $0x10] sm:$0xff]
        %v2463 = vld [vmem:[%s2459 + $0x18] sm:$0xff]
        %v2464 = vld [vmem:[%s2459 + $0x20] sm:$0xff]
        %v2465 = vld [vmem:[%s2459 + $0x28] sm:$0xff]
        %v2466 = vld [vmem:[%s2459 + $0x30] sm:$0xff]
        %v2467 = vld [vmem:[%s2459 + $0x38] sm:$0xff]
        %v2468 = vld [vmem:[%s2459 + $0x40] sm:$0xff]
        %v2469 = vld [vmem:[%s2459 + $0x48] sm:$0xff]
        %v2471 = vsel %vm2125, %v2458, 0
        %2473 = vmatprep.subr.mxu0 0.0
        %2474 = vmatpush1.msra.mxu0 %v2460
        %2475 = vmatprep.subr.mxu0 0.0
        %2476 = vmatpush1.msra.mxu0 %v2461
        %2477 = vmatprep.subr.mxu0 0.0
        %2478 = vmatpush1.msra.mxu0 %v2462
        %2479 = vmatprep.subr.mxu0 0.0
        %2480 = vmatpush1.msra.mxu0 %v2463
        %2481 = vmatprep.subr.mxu0 0.0
        %2482 = vmatpush1.msra.mxu0 %v2464
        %2483 = vmatprep.subr.mxu0 0.0
        %2484 = vmatpush1.msra.mxu0 %v2465
        %2485 = vmatprep.subr.mxu0 0.0
        %2486 = vmatpush1.msra.mxu0 %v2466
        %2487 = vmatprep.subr.mxu0 0.0
        %2488 = vmatpush1.msra.mxu0 %v2467
        %2489 = vmatprep.subr.mxu0 0.0
        %2490 = vmatpush1.msra.mxu0 %v2468
        %2491 = vmatprep.subr.mxu0 0.0
        %2492 = vmatpush1.msra.mxu0 %v2469
        %2493 = vmatprep.subr.mxu0 0.0
        %2494 = vmatpush1.msra.mxu0 0.0
        %2495 = vmatprep.subr.mxu0 0.0
        %2496 = vmatpush1.msra.mxu0 0.0
        %2497 = vmatprep.subr.mxu0 0.0
        %2498 = vmatpush1.msra.mxu0 0.0
        %2499 = vmatprep.subr.mxu0 0.0
        %2500 = vmatpush1.msra.mxu0 0.0
        %2501 = vmatprep.subr.mxu0 0.0
        %2502 = vmatpush1.msra.mxu0 0.0
        %2503 = vmatprep.subr.mxu0 0.0
        %2504 = vmatpush1.msra.mxu0 0.0
        %2505 = vmatprep.subr.mxu0 0.0
        %2506 = vmatpush1.msra.mxu0 0.0
        %2507 = vmatprep.subr.mxu0 0.0
        %2508 = vmatpush1.msra.mxu0 0.0
        %2509 = vmatprep.subr.mxu0 0.0
        %2510 = vmatpush1.msra.mxu0 0.0
        %2511 = vmatprep.subr.mxu0 0.0
        %2512 = vmatpush1.msra.mxu0 0.0
        %2513 = vmatprep.subr.mxu0 0.0
        %2514 = vmatpush1.msra.mxu0 0.0
        %2515 = vmatprep.subr.mxu0 0.0
        %2516 = vmatpush1.msra.mxu0 0.0
        %2517 = vmatprep.subr.mxu0 0.0
        %2518 = vmatpush1.msra.mxu0 0.0
        %2519 = vmatprep.subr.mxu0 0.0
        %2520 = vmatpush1.msra.mxu0 0.0
        %2521 = vmatprep.subr.mxu0 0.0
        %2522 = vmatpush1.msra.mxu0 0.0
        %2523 = vmatprep.subr.mxu0 0.0
        %2524 = vmatpush1.msra.mxu0 0.0
        %2525 = vmatprep.subr.mxu0 0.0
        %2526 = vmatpush1.msra.mxu0 0.0
        %2527 = vmatprep.subr.mxu0 0.0
        %2528 = vmatpush1.msra.mxu0 0.0
        %2529 = vmatprep.subr.mxu0 0.0
        %2530 = vmatpush1.msra.mxu0 0.0
        %2531 = vmatprep.subr.mxu0 0.0
        %2532 = vmatpush1.msra.mxu0 0.0
        %2533 = vmatprep.subr.mxu0 0.0
        %2534 = vmatpush1.msra.mxu0 0.0
        %2535 = vmatprep.subr.mxu0 0.0
        %2536 = vmatpush1.msra.mxu0 0.0
        %2537 = vmatprep.mubr.f32.mxu0 0.0
        %2538 = vmatmul.mubr.f32.gmra.mrb[0].mxu0 %v2471
        %v2539 = vpop.f32.mrb[0].mxu0
        %v2540 = vadd.f32 0.0, %v2539
        %v2541 = vpop.f32.mrb[0].mxu0
        %2542 = vdwg.mxu0
        %v2543 = vadd.f32 %v2457, %v2540
        %v2544 = vmax.f32 %v2543, 0.0
        %v2545 = vld [vmem:[%s11] sm:$0xff]
        %v2546 = vld [vmem:[%s11 + $0x8] sm:$0xff]
        %v2547 = vld [vmem:[%s11 + $0x10] sm:$0xff]
        %v2548 = vld [vmem:[%s11 + $0x18] sm:$0xff]
        %v2549 = vld [vmem:[%s11 + $0x20] sm:$0xff]
        %v2550 = vld [vmem:[%s11 + $0x28] sm:$0xff]
        %v2551 = vld [vmem:[%s11 + $0x30] sm:$0xff]
        %v2552 = vld [vmem:[%s11 + $0x38] sm:$0xff]
        %v2553 = vld [vmem:[%s11 + $0x40] sm:$0xff]
        %v2554 = vld [vmem:[%s11 + $0x48] sm:$0xff]
        %v2555 = vld [vmem:[%s11 + $0x50] sm:$0xff]
        %v2556 = vld [vmem:[%s11 + $0x58] sm:$0xff]
        %v2557 = vld [vmem:[%s11 + $0x60] sm:$0xff]
        %v2558 = vld [vmem:[%s11 + $0x68] sm:$0xff]
        %v2559 = vld [vmem:[%s11 + $0x70] sm:$0xff]
        %v2560 = vld [vmem:[%s12] sm:$0x1]
        %vm2561 = vcmask 982016
        %v2563 = vsel %vm2561, %v2544, 0
        %2565 = vmatprep.subr.mxu0 0.0
        %2566 = vmatpush1.msra.mxu0 %v2545
        %2567 = vmatprep.subr.mxu0 0.0
        %2568 = vmatpush1.msra.mxu0 %v2546
        %2569 = vmatprep.subr.mxu0 0.0
        %2570 = vmatpush1.msra.mxu0 %v2547
        %2571 = vmatprep.subr.mxu0 0.0
        %2572 = vmatpush1.msra.mxu0 %v2548
        %2573 = vmatprep.subr.mxu0 0.0
        %2574 = vmatpush1.msra.mxu0 %v2549
        %2575 = vmatprep.subr.mxu0 0.0
        %2576 = vmatpush1.msra.mxu0 %v2550
        %2577 = vmatprep.subr.mxu0 0.0
        %2578 = vmatpush1.msra.mxu0 %v2551
        %2579 = vmatprep.subr.mxu0 0.0
        %2580 = vmatpush1.msra.mxu0 %v2552
        %2581 = vmatprep.subr.mxu0 0.0
        %2582 = vmatpush1.msra.mxu0 %v2553
        %2583 = vmatprep.subr.mxu0 0.0
        %2584 = vmatpush1.msra.mxu0 %v2554
        %2585 = vmatprep.subr.mxu0 0.0
        %2586 = vmatpush1.msra.mxu0 %v2555
        %2587 = vmatprep.subr.mxu0 0.0
        %2588 = vmatpush1.msra.mxu0 %v2556
        %2589 = vmatprep.subr.mxu0 0.0
        %2590 = vmatpush1.msra.mxu0 %v2557
        %2591 = vmatprep.subr.mxu0 0.0
        %2592 = vmatpush1.msra.mxu0 %v2558
        %2593 = vmatprep.subr.mxu0 0.0
        %2594 = vmatpush1.msra.mxu0 %v2559
        %2595 = vmatprep.subr.mxu0 0.0
        %2596 = vmatpush1.msra.mxu0 0.0
        %2597 = vmatprep.subr.mxu0 0.0
        %2598 = vmatpush1.msra.mxu0 0.0
        %2599 = vmatprep.subr.mxu0 0.0
        %2600 = vmatpush1.msra.mxu0 0.0
        %2601 = vmatprep.subr.mxu0 0.0
        %2602 = vmatpush1.msra.mxu0 0.0
        %2603 = vmatprep.subr.mxu0 0.0
        %2604 = vmatpush1.msra.mxu0 0.0
        %2605 = vmatprep.subr.mxu0 0.0
        %2606 = vmatpush1.msra.mxu0 0.0
        %2607 = vmatprep.subr.mxu0 0.0
        %2608 = vmatpush1.msra.mxu0 0.0
        %2609 = vmatprep.subr.mxu0 0.0
        %2610 = vmatpush1.msra.mxu0 0.0
        %2611 = vmatprep.subr.mxu0 0.0
        %2612 = vmatpush1.msra.mxu0 0.0
        %2613 = vmatprep.subr.mxu0 0.0
        %2614 = vmatpush1.msra.mxu0 0.0
        %2615 = vmatprep.subr.mxu0 0.0
        %2616 = vmatpush1.msra.mxu0 0.0
        %2617 = vmatprep.subr.mxu0 0.0
        %2618 = vmatpush1.msra.mxu0 0.0
        %2619 = vmatprep.subr.mxu0 0.0
        %2620 = vmatpush1.msra.mxu0 0.0
        %2621 = vmatprep.subr.mxu0 0.0
        %2622 = vmatpush1.msra.mxu0 0.0
        %2623 = vmatprep.subr.mxu0 0.0
        %2624 = vmatpush1.msra.mxu0 0.0
        %2625 = vmatprep.subr.mxu0 0.0
        %2626 = vmatpush1.msra.mxu0 0.0
        %2627 = vmatprep.subr.mxu0 0.0
        %2628 = vmatpush1.msra.mxu0 0.0
        %2629 = vmatprep.mubr.f32.mxu0 0.0
        %2630 = vmatmul.mubr.f32.gmra.mrb[0].mxu0 %v2563
        %v2631 = vpop.f32.mrb[0].mxu0
        %v2632 = vadd.f32 %v2560, %v2631
        %v2633 = vpop.f32.mrb[0].mxu0
        %2634 = vdwg.mxu0
        %v2635 = vmax.f32 %v2632, 0.0
        %v2636 = vld [vmem:[%s13] sm:$0xff]
        %v2637 = vld [vmem:[%s13 + $0x8] sm:$0xff]
        %v2638 = vld [vmem:[%s13 + $0x10] sm:$0xff]
        %v2639 = vld [vmem:[%s13 + $0x18] sm:$0xff]
        %v2640 = vld [vmem:[%s13 + $0x20] sm:$0xff]
        %v2641 = vld [vmem:[%s13 + $0x28] sm:$0xff]
        %v2642 = vld [vmem:[%s13 + $0x30] sm:$0xff]
        %v2643 = vld [vmem:[%s13 + $0x38] sm:$0xff]
        %v2644 = vld [vmem:[%s13 + $0x40] sm:$0xff]
        %v2645 = vld [vmem:[%s13 + $0x48] sm:$0xff]
        %v2646 = vld [vmem:[%s13 + $0x50] sm:$0xf]
        %v2647 = vld [vmem:[%s14] sm:$0x1]
        %v2649 = vsel %vm1326, %v2635, 0
        %v2652 = vsel %vm1139, %v2646, 0
        %2654 = vmatprep.subr.mxu0 0.0
        %2655 = vmatpush1.msra.mxu0 %v2636
        %2656 = vmatprep.subr.mxu0 0.0
        %2657 = vmatpush1.msra.mxu0 %v2637
        %2658 = vmatprep.subr.mxu0 0.0
        %2659 = vmatpush1.msra.mxu0 %v2638
        %2660 = vmatprep.subr.mxu0 0.0
        %2661 = vmatpush1.msra.mxu0 %v2639
        %2662 = vmatprep.subr.mxu0 0.0
        %2663 = vmatpush1.msra.mxu0 %v2640
        %2664 = vmatprep.subr.mxu0 0.0
        %2665 = vmatpush1.msra.mxu0 %v2641
        %2666 = vmatprep.subr.mxu0 0.0
        %2667 = vmatpush1.msra.mxu0 %v2642
        %2668 = vmatprep.subr.mxu0 0.0
        %2669 = vmatpush1.msra.mxu0 %v2643
        %2670 = vmatprep.subr.mxu0 0.0
        %2671 = vmatpush1.msra.mxu0 %v2644
        %2672 = vmatprep.subr.mxu0 0.0
        %2673 = vmatpush1.msra.mxu0 %v2645
        %2674 = vmatprep.subr.mxu0 0.0
        %2675 = vmatpush1.msra.mxu0 %v2652
        %2676 = vmatprep.subr.mxu0 0.0
        %2677 = vmatpush1.msra.mxu0 0.0
        %2678 = vmatprep.subr.mxu0 0.0
        %2679 = vmatpush1.msra.mxu0 0.0
        %2680 = vmatprep.subr.mxu0 0.0
        %2681 = vmatpush1.msra.mxu0 0.0
        %2682 = vmatprep.subr.mxu0 0.0
        %2683 = vmatpush1.msra.mxu0 0.0
        %2684 = vmatprep.subr.mxu0 0.0
        %2685 = vmatpush1.msra.mxu0 0.0
        %2686 = vmatprep.subr.mxu0 0.0
        %2687 = vmatpush1.msra.mxu0 0.0
        %2688 = vmatprep.subr.mxu0 0.0
        %2689 = vmatpush1.msra.mxu0 0.0
        %2690 = vmatprep.subr.mxu0 0.0
        %2691 = vmatpush1.msra.mxu0 0.0
        %2692 = vmatprep.subr.mxu0 0.0
        %2693 = vmatpush1.msra.mxu0 0.0
        %2694 = vmatprep.subr.mxu0 0.0
        %2695 = vmatpush1.msra.mxu0 0.0
        %2696 = vmatprep.subr.mxu0 0.0
        %2697 = vmatpush1.msra.mxu0 0.0
        %2698 = vmatprep.subr.mxu0 0.0
        %2699 = vmatpush1.msra.mxu0 0.0
        %2700 = vmatprep.subr.mxu0 0.0
        %2701 = vmatpush1.msra.mxu0 0.0
        %2702 = vmatprep.subr.mxu0 0.0
        %2703 = vmatpush1.msra.mxu0 0.0
        %2704 = vmatprep.subr.mxu0 0.0
        %2705 = vmatpush1.msra.mxu0 0.0
        %2706 = vmatprep.subr.mxu0 0.0
        %2707 = vmatpush1.msra.mxu0 0.0
        %2708 = vmatprep.subr.mxu0 0.0
        %2709 = vmatpush1.msra.mxu0 0.0
        %2710 = vmatprep.subr.mxu0 0.0
        %2711 = vmatpush1.msra.mxu0 0.0
        %2712 = vmatprep.subr.mxu0 0.0
        %2713 = vmatpush1.msra.mxu0 0.0
        %2714 = vmatprep.subr.mxu0 0.0
        %2715 = vmatpush1.msra.mxu0 0.0
        %2716 = vmatprep.subr.mxu0 0.0
        %2717 = vmatpush1.msra.mxu0 0.0
        %2718 = vmatprep.mubr.f32.mxu0 0.0
        %2719 = vmatmul.mubr.f32.gmra.mrb[0].mxu0 %v2649
        %v2720 = vpop.f32.mrb[0].mxu0
        %v2721 = vadd.f32 %v2647, %v2720
        %v2722 = vpop.f32.mrb[0].mxu0
        %2723 = vdwg.mxu0
        %2724 = vst [vmem:[%s486] sm:$0x1] %v2721
        %s2725 = sand.u32 %s357, 1
        %s2726 = scalar_lea.sflag [#allocation6], %s2725
        %s2727 = sand.u32 %s357, 1
        %s2728 = scalar_lea.vmem [#allocation5], %s2727
        // Predicated region
        $region81: #{lenet_forward.1} parent=79 // pred_check
          %p2729 = pneg %p367
        $region82: #{lenet_forward.1} parent=79 // pred_check_branch
          %2731 = sbr.rel (%p2729) target = $region84
        $region83: #{lenet_forward.1} parent=79 // pred_region
          %s2733 = ssub.s32 16, 16
          %2734 = vsyncadd %s2726, %s2733
          %s2735 = smul.addr %s29, 16
          %s2736 = scalar_lea.hbm %s15, %s2735
          %s2738 = sshll.u32 %s2728, 4
          %s2739 = int_to_ptr.vmem [resolvable:$true] %s2738
          %2741 = dma.vmem_to_hbm [thread:$0]  %s2739, 16, %s2736, %s2726
        $region84: #{lenet_forward.1} parent=79 // pred_fallthru
          _
      $region80: #{lenet_forward.1} parent=5 // pred_fallthru
        _
      %p2742 = scmp.le.s32.totalorder 2, %s24
      // Predicated region
      $region85: #{lenet_forward.1} parent=5 // pred_check
        %p2743 = pneg %p2742
      $region86: #{lenet_forward.1} parent=5 // pred_check_branch
        %2745 = sbr.rel (%p2743) target = $region88
      $region87: #{lenet_forward.1} parent=5 // pred_region
        %s2746 = ssub.s32 %s24, 2
        // Predicated region
        $region89: #{lenet_forward.1} parent=87 // pred_check
          %p2747 = pneg %p373
        $region90: #{lenet_forward.1} parent=87 // pred_check_branch
          %2749 = sbr.rel (%p2747) target = $region92
        $region91: #{lenet_forward.1} parent=87 // pred_region
          %s2750 = sand.u32 %s358, 1
          %s2751 = scalar_lea.sflag [#allocation6], %s2750
          %s2752 = sand.u32 %s358, 1
          %s2753 = scalar_lea.vmem [#allocation5], %s2752
          %2754 = dma.done %s2751, 16
        $region92: #{lenet_forward.1} parent=87 // pred_fallthru
          _
      $region88: #{lenet_forward.1} parent=5 // pred_fallthru
        _
    $region6: #{lenet_forward.1} parent=1 // loop_footer
      %s28 = sadd.s32 1, %s24
    $region7: #{lenet_forward.1} parent=1 // loop_footer_branch
      %23 = sbr.rel target = $region3
    $region8: #{lenet_forward.1} parent=1 // loop_exit
      _
    %2755 = vsyncpa [#allocation6], 1
    %s2756 = scalar_lea.sflag [#allocation6], 1
    %2757 = vsyncpa %s2756, 1

</llo_original>
